<compile_context>
chip_gen: v6e
topology: v6e:2x2x1
jax: 0.10.0
libtpu: 0.0.40
codegen_flags: <defaults>
</compile_context>

<pallas_src>
import math

import jax
import jax.numpy as jnp
from jax import lax
from jax.experimental import pallas as pl
from jax.experimental.pallas import tpu as pltpu

HIDDEN = 128 * 2             # Attention_1 default hidden_size = 256
NUM_HEADS = 8
HEAD = HIDDEN // NUM_HEADS   # 32
LANE = 128


def _make_attention1_kernel(s_valid, s_pad, tb):
    """Kernel body specialized for static (valid length, padded length, batch tile)."""
    inv_sqrt_d = 1.0 / math.sqrt(HEAD)
    padded = s_valid < s_pad
    H, NH = HIDDEN, NUM_HEADS

    def kernel(x_ref, w_ref, bg_ref, out_ref, attn_ref):
        w = w_ref[...]            # (H, 3H) bf16 fused [Wq^T | Wk^T | Wg^T]
        bg = bg_ref[...]          # (1, H)  f32 gate bias

        # Hoisted index / validity masks (shared by every batch element).
        lane_ids = lax.broadcasted_iota(jnp.int32, (s_pad, H), 1)
        if padded:
            key_valid = lax.broadcasted_iota(
                jnp.int32, (s_pad, s_pad), 1) < s_valid
            row_valid = (lax.broadcasted_iota(
                jnp.int32, (s_pad, 1), 0) < s_valid).astype(jnp.float32)
        neg_big = jnp.float32(-1e30)

        def batch_body(b, carry):
            xb = x_ref[b]                                      # (S_p, H) f32
            # Fused q/k/gate projection: one lane-dense MXU push, bf16
            # operands, f32 accumulation.
            qkg = jnp.dot(xb.astype(jnp.bfloat16), w,
                          preferred_element_type=jnp.float32)  # (S_p, 3H)
            q = qkg[:, :H] * inv_sqrt_d        # fold 1/sqrt(d) into Q once
            k = qkg[:, H:2 * H]
            gate = jax.nn.sigmoid(qkg[:, 2 * H:] + bg)    # bias only on gate
            if padded:
                gate = gate * row_valid        # padded rows contribute nothing

            ctx = jnp.zeros((s_pad, H), jnp.float32)
            for h in range(NH):                # short static loop (8 bodies)
                # Select head h's columns with a lane mask (VPU) instead of a
                # 32-lane slice; the contraction stays full 256-lane width.
                hmask = (lane_ids >= h * HEAD) & (lane_ids < (h + 1) * HEAD)
                kh = jnp.where(hmask, k, 0.0)                  # (S_p, H)
                # scores[i, j] = K_i . Q_j (reference ordering); contraction on
                # the last dims of both operands -> no materialized transpose.
                scores = lax.dot_general(
                    kh, q, (((1,), (1,)), ((), ())),
                    preferred_element_type=jnp.float32)        # (S_p, S_p)
                if padded:
                    scores = jnp.where(key_valid, scores, neg_big)
                m = jnp.max(scores, axis=-1, keepdims=True)
                p = jnp.exp(scores - m)
                attn = p * pl.reciprocal(
                    jnp.sum(p, axis=-1, keepdims=True), approx=True)
                # Full-tile, lane-dense, unmasked (S_p, S_p) store directly
                # into the final (B, NH, S_p, S_p) layout.
                attn_ref[b, h] = attn.astype(attn_ref.dtype)
                # value == key (reference quirk).  attn @ K over the full
                # width (same MXU cadence as attn @ K_h), keep only head h's
                # columns; ctx accumulates in registers -> no masked per-head
                # VMEM stores.
                ctx = jnp.where(
                    hmask,
                    jnp.dot(attn, k, preferred_element_type=jnp.float32),
                    ctx)
            # Gate and reduce over the sequence; single 256-lane-dense store.
            out_ref[b] = jnp.sum(gate * ctx, axis=0,
                                 keepdims=True).astype(out_ref.dtype)
            return carry

        lax.fori_loop(0, tb, batch_body, 0)

    return kernel


def _tpu_params():
    """Best-effort (VMEM capacity bytes, TensorCores per chip); safe fallbacks."""
    vmem = 64 * 1024 * 1024       # conservative (v7x-sized) fallback
    cores = 1
    try:
        info = pltpu.get_tpu_info()
        vmem = int(getattr(info, "vmem_capacity_bytes", vmem))
        for attr in ("num_cores", "core_count", "num_tensorcores",
                     "tensorcore_count"):
            v = getattr(info, attr, None)
            if isinstance(v, int) and v > 0:
                cores = v
                break
    except Exception:
        pass
    return vmem, cores


def _vmem_need_bytes(tb, s_pad):
    """Rough per-grid-step VMEM footprint: double-buffered blocks + live temps."""
    h, nh = HIDDEN, NUM_HEADS
    x_blk = 2 * tb * s_pad * h * 4                 # f32 input block
    attn_blk = 2 * tb * nh * s_pad * s_pad * 4     # f32 attention output block
    out_blk = 2 * tb * h * 4
    fixed = 2 * (h * 3 * h * 2 + h * 4)            # bf16 fused weight + bias
    work = s_pad * 3 * h * 4                       # qkg
    work += 3 * s_pad * h * 4                      # masked-k / ctx / gate
    work += 4 * s_pad * s_pad * 4                  # scores / p / attn temps
    return x_blk + attn_blk + out_blk + fixed + work + (4 << 20)  # + headroom


def _pick_batch_tile(batch, s_pad, vmem_budget, n_cores):
    """Largest divisor of `batch` whose blocks fit the VMEM budget.  Only
    prefer >= n_cores grid steps when the chip actually has >1 TensorCore."""
    divisors = [d for d in range(1, batch + 1) if batch % d == 0]
    fits = [d for d in divisors if _vmem_need_bytes(d, s_pad) <= vmem_budget]
    if not fits:
        # TODO(synk): at very long sequences even TB=1 overflows the budget;
        # add a heads (or kv-block) grid axis for the attention output.
        fits = [1]
    if n_cores > 1:
        pref = [d for d in fits if batch // d >= n_cores] or fits
    else:
        pref = fits
    return max(pref)


def attention_1(x, wq, wk, wg, bg):
    """x: (B, S, H) f32.  Returns (batch_outputs (B, H), attn (B, NH, S, S))."""
    B, S, H = x.shape
    assert H == HIDDEN
    S_p = ((S + LANE - 1) // LANE) * LANE      # 128-align the sequence axis
    if S_p != S:
        x = jnp.pad(x, ((0, 0), (0, S_p - S), (0, 0)))

    vmem_cap, n_cores = _tpu_params()
    vmem_budget = (vmem_cap * 3) // 4          # ~48 MiB v7x, ~96 MiB v5e/v6e
    TB = _pick_batch_tile(B, S_p, vmem_budget, n_cores)
    grid_b = B // TB

    # Fuse + pre-transpose the three projections once, in bf16 for the MXU:
    #   x @ [Wq^T | Wk^T | Wg^T]  ->  [q | k | gate_pre]
    w_all = jnp.concatenate([wq.T, wk.T, wg.T], axis=1).astype(jnp.bfloat16)
    bg2 = bg.reshape(1, H).astype(jnp.float32)

    kernel = _make_attention1_kernel(S, S_p, TB)
    out, attn = pl.pallas_call(
        kernel,
        out_shape=(
            jax.ShapeDtypeStruct((B, 1, H), jnp.float32),
            jax.ShapeDtypeStruct((B, NUM_HEADS, S_p, S_p), jnp.float32),
        ),
        grid=(grid_b,),
        in_specs=[
            pl.BlockSpec((TB, S_p, H), lambda i: (i, 0, 0)),        # x
            pl.BlockSpec((H, 3 * H), lambda i: (0, 0)),             # fused W
            pl.BlockSpec((1, H), lambda i: (0, 0)),                 # gate bias
        ],
        out_specs=(
            pl.BlockSpec((TB, 1, H), lambda i: (i, 0, 0)),
            pl.BlockSpec((TB, NUM_HEADS, S_p, S_p), lambda i: (i, 0, 0, 0)),
        ),
        compiler_params=pltpu.CompilerParams(
            dimension_semantics=("parallel",),
            vmem_limit_bytes=int(vmem_budget)),
    )(x, w_all, bg2)

    out = out[:, 0, :]
    if S_p != S:
        # Only needed when the caller's S is not already a 128 multiple; for
        # pre-padded / realistic lengths the kernel output is returned as-is
        # (no extra HBM pass, no transpose).
        attn = attn[:, :, :S, :S]
    return out, attn


def _reference(x, wq, wk, wg, bg):
    """Pure-JAX f32 replica of the PyTorch Attention_1.forward for validation."""
    B, S, H = x.shape
    q = x @ wq.T
    k = x @ wk.T
    v = k                                  # reference quirk: value = key(x)
    gate = jax.nn.sigmoid(x @ wg.T + bg)
    qh = q.reshape(B, S, NUM_HEADS, HEAD).transpose(0, 2, 1, 3)
    kh = k.reshape(B, S, NUM_HEADS, HEAD).transpose(0, 2, 1, 3)
    vh = v.reshape(B, S, NUM_HEADS, HEAD).transpose(0, 2, 1, 3)
    scores = jnp.einsum('bhid,bhjd->bhij', kh, qh) / math.sqrt(HEAD)
    attn = jax.nn.softmax(scores, axis=-1)
    ctx = jnp.einsum('bhij,bhjd->bhid', attn, vh)
    ctx = ctx.transpose(0, 2, 1, 3).reshape(B, S, H)
    out = jnp.sum(gate * ctx, axis=1)
    return out, attn


if __name__ == "__main__":
    B, S, H = 4, 8, HIDDEN

    key = jax.random.PRNGKey(0)
    kx, kq, kk, kg, kb = jax.random.split(key, 5)
    x = jax.random.normal(kx, (B, S, H), dtype=jnp.float32)
    # torch Linear stores W as (out, in); synthetic deterministic weights.
    wq = jax.random.normal(kq, (H, H), dtype=jnp.float32) * 0.05
    wk = jax.random.normal(kk, (H, H), dtype=jnp.float32) * 0.05
    wg = jax.random.normal(kg, (H, H), dtype=jnp.float32) * 0.05
    bg = jax.random.normal(kb, (H,), dtype=jnp.float32) * 0.05

    out, attn = attention_1(x, wq, wk, wg, bg)
    jax.block_until_ready((out, attn))

    ref_out, ref_attn = _reference(x, wq, wk, wg, bg)
    assert out.shape == (B, H) and attn.shape == (B, NUM_HEADS, S, S)
    # bf16-operand projection (f32 accumulation) per the perf review: the
    # attention weights stay tight; the gated output sits behind three matmul
    # stages and a 256-deep contraction, so its bound is wider.
    assert jnp.allclose(attn, ref_attn, atol=5e-3, rtol=5e-3)
    assert jnp.allclose(out, ref_out, atol=2e-2, rtol=2e-2)

    print("KERNEL_OK")
</pallas_src>

<mosaic_0001>
module attributes {stable_mosaic.version = 11 : i64} {
  func.func @kernel(%arg0: i32, %arg1: memref<4x128x256xf32, #tpu.memory_space<vmem>>, %arg2: memref<256x768xbf16, #tpu.memory_space<vmem>>, %arg3: memref<1x256xf32, #tpu.memory_space<vmem>>, %arg4: memref<4x1x256xf32, #tpu.memory_space<vmem>>, %arg5: memref<4x8x128x128xf32, #tpu.memory_space<vmem>>) attributes {dimension_semantics = [#tpu.dimension_semantics<parallel>], iteration_bounds = array<i64: 1>, scalar_prefetch = 0 : i64, scratch_operands = 0 : i64, tpu.core_type = #tpu.core_type<tc>, window_params = [{transform_indices = @transform_0, window_bounds = array<i64: 4, 128, 256>}, {pipeline_mode = #tpu.pipeline_mode<synchronous>, transform_indices = @transform_1, window_bounds = array<i64: 256, 768>}, {pipeline_mode = #tpu.pipeline_mode<synchronous>, transform_indices = @transform_2, window_bounds = array<i64: 1, 256>}, {transform_indices = @transform_3, window_bounds = array<i64: 4, 1, 256>}, {transform_indices = @transform_4, window_bounds = array<i64: 4, 8, 128, 128>}]} {
    %c0 = arith.constant 0 : index
    %c0_0 = arith.constant 0 : index
    %0 = vector.load %arg2[%c0, %c0_0] : memref<256x768xbf16, #tpu.memory_space<vmem>>, vector<256x768xbf16>
    %c0_1 = arith.constant 0 : index
    %c0_2 = arith.constant 0 : index
    %1 = vector.load %arg3[%c0_1, %c0_2] : memref<1x256xf32, #tpu.memory_space<vmem>>, vector<1x256xf32>
    %2 = tpu.iota {dimensions = array<i32: 1>} : vector<128x256xi32>
    %3 = tpu.iota {dimensions = array<i32: 1>} : vector<128x128xi32>
    %c8_i32 = arith.constant 8 : i32
    %4 = vector.broadcast %c8_i32 : i32 to vector<128x128xi32>
    %5 = arith.cmpi slt, %3, %4 : vector<128x128xi32>
    %6 = tpu.iota {dimensions = array<i32: 0>} : vector<128x1xi32>
    %c8_i32_3 = arith.constant 8 : i32
    %7 = vector.broadcast %c8_i32_3 : i32 to vector<128x1xi32>
    %8 = arith.cmpi slt, %6, %7 : vector<128x1xi32>
    %9 = arith.extui %8 : vector<128x1xi1> to vector<128x1xi32>
    %10 = arith.sitofp %9 : vector<128x1xi32> to vector<128x1xf32>
    %cst = arith.constant -1.000000e+30 : f32
    %c0_i32 = arith.constant 0 : i32
    %c4_i32 = arith.constant 4 : i32
    %11 = arith.addi %c0_i32, %c4_i32 : i32
    %c1_i32 = arith.constant 1 : i32
    scf.for %arg6 = %c0_i32 to %11 step %c1_i32  : i32 {
      %12 = arith.index_cast %arg6 : i32 to index
      %c0_5 = arith.constant 0 : index
      %c0_6 = arith.constant 0 : index
      %13 = vector.load %arg1[%12, %c0_5, %c0_6] : memref<4x128x256xf32, #tpu.memory_space<vmem>>, vector<1x128x256xf32>
      %14 = vector.shape_cast %13 : vector<1x128x256xf32> to vector<128x256xf32>
      %15 = arith.truncf %14 : vector<128x256xf32> to vector<128x256xbf16>
      %cst_7 = arith.constant dense<0.000000e+00> : vector<128x768xf32>
      %16 = tpu.matmul %15, %0, %cst_7 {dimension_numbers = #tpu.dot_dimension_numbers<[1], [0], [0], [1], [0, 0, 1, 1], [], []>} : vector<128x256xbf16>, vector<256x768xbf16>, vector<128x768xf32> -> vector<128x768xf32>
      %17 = vector.extract_strided_slice %16 {offsets = [0, 0], sizes = [128, 256], strides = [1, 1]} : vector<128x768xf32> to vector<128x256xf32>
      %cst_8 = arith.constant 0.176776692 : f32
      %18 = vector.broadcast %cst_8 : f32 to vector<128x256xf32>
      %19 = arith.mulf %17, %18 : vector<128x256xf32>
      %20 = vector.extract_strided_slice %16 {offsets = [0, 256], sizes = [128, 256], strides = [1, 1]} : vector<128x768xf32> to vector<128x256xf32>
      %21 = vector.extract_strided_slice %16 {offsets = [0, 512], sizes = [128, 256], strides = [1, 1]} : vector<128x768xf32> to vector<128x256xf32>
      %22 = vector.broadcast %1 : vector<1x256xf32> to vector<128x256xf32>
      %23 = arith.addf %21, %22 : vector<128x256xf32>
      %24 = arith.negf %23 : vector<128x256xf32>
      %25 = math.exp %24 : vector<128x256xf32>
      %cst_9 = arith.constant 1.000000e+00 : f32
      %26 = vector.broadcast %cst_9 : f32 to vector<128x256xf32>
      %27 = arith.addf %26, %25 : vector<128x256xf32>
      %28 = arith.divf %26, %27 : vector<128x256xf32>
      %29 = vector.broadcast %10 : vector<128x1xf32> to vector<128x256xf32>
      %30 = arith.mulf %28, %29 : vector<128x256xf32>
      %cst_10 = arith.constant 0.000000e+00 : f32
      %31 = vector.broadcast %cst_10 : f32 to vector<128x256xf32>
      %c0_i32_11 = arith.constant 0 : i32
      %32 = vector.broadcast %c0_i32_11 : i32 to vector<128x256xi32>
      %33 = arith.cmpi sge, %2, %32 : vector<128x256xi32>
      %c32_i32 = arith.constant 32 : i32
      %34 = vector.broadcast %c32_i32 : i32 to vector<128x256xi32>
      %35 = arith.cmpi slt, %2, %34 : vector<128x256xi32>
      %36 = arith.andi %33, %35 : vector<128x256xi1>
      %cst_12 = arith.constant 0.000000e+00 : f32
      %37 = vector.broadcast %cst_12 : f32 to vector<128x256xf32>
      %38 = arith.select %36, %20, %37 : vector<128x256xi1>, vector<128x256xf32>
      %cst_13 = arith.constant dense<0.000000e+00> : vector<128x128xf32>
      %39 = tpu.matmul %38, %19, %cst_13 {dimension_numbers = #tpu.dot_dimension_numbers<[1], [1], [0], [0], [0, 0, 1, 0], [], []>} : vector<128x256xf32>, vector<128x256xf32>, vector<128x128xf32> -> vector<128x128xf32>
      %40 = vector.broadcast %cst : f32 to vector<128x128xf32>
      %41 = arith.select %5, %39, %40 : vector<128x128xi1>, vector<128x128xf32>
      %cst_14 = arith.constant dense<0xFF800000> : vector<128xf32>
      %42 = vector.multi_reduction <maximumf>, %41, %cst_14 [1] : vector<128x128xf32> to vector<128xf32>
      %43 = vector.shape_cast %42 : vector<128xf32> to vector<128x1xf32>
      %44 = vector.broadcast %43 : vector<128x1xf32> to vector<128x128xf32>
      %45 = arith.subf %41, %44 : vector<128x128xf32>
      %46 = math.exp %45 : vector<128x128xf32>
      %cst_15 = arith.constant dense<0.000000e+00> : vector<128xf32>
      %47 = vector.multi_reduction <add>, %46, %cst_15 [1] : vector<128x128xf32> to vector<128xf32>
      %48 = vector.shape_cast %47 : vector<128xf32> to vector<128x1xf32>
      %49 = tpu.reciprocal %48 {approx = true} : vector<128x1xf32> -> vector<128x1xf32>
      %50 = vector.broadcast %49 : vector<128x1xf32> to vector<128x128xf32>
      %51 = arith.mulf %46, %50 : vector<128x128xf32>
      %52 = arith.index_cast %arg6 : i32 to index
      %c0_16 = arith.constant 0 : index
      %c0_17 = arith.constant 0 : index
      %c0_18 = arith.constant 0 : index
      %53 = vector.load %arg5[%52, %c0_16, %c0_17, %c0_18] : memref<4x8x128x128xf32, #tpu.memory_space<vmem>>, vector<1x1x128x128xf32>
      %54 = vector.shape_cast %53 : vector<1x1x128x128xf32> to vector<128x128xf32>
      %55 = vector.shape_cast %51 : vector<128x128xf32> to vector<1x1x128x128xf32>
      tpu.vector_store %arg5[%52, %c0_16, %c0_17, %c0_18], %55 {strides = array<i32>} : memref<4x8x128x128xf32, #tpu.memory_space<vmem>>, vector<1x1x128x128xf32>,
      %cst_19 = arith.constant dense<0.000000e+00> : vector<128x256xf32>
      %56 = tpu.matmul %51, %20, %cst_19 {dimension_numbers = #tpu.dot_dimension_numbers<[1], [0], [0], [1], [0, 0, 1, 1], [], []>} : vector<128x128xf32>, vector<128x256xf32>, vector<128x256xf32> -> vector<128x256xf32>
      %57 = arith.select %36, %56, %31 : vector<128x256xi1>, vector<128x256xf32>
      %c32_i32_20 = arith.constant 32 : i32
      %58 = vector.broadcast %c32_i32_20 : i32 to vector<128x256xi32>
      %59 = arith.cmpi sge, %2, %58 : vector<128x256xi32>
      %c64_i32 = arith.constant 64 : i32
      %60 = vector.broadcast %c64_i32 : i32 to vector<128x256xi32>
      %61 = arith.cmpi slt, %2, %60 : vector<128x256xi32>
      %62 = arith.andi %59, %61 : vector<128x256xi1>
      %cst_21 = arith.constant 0.000000e+00 : f32
      %63 = vector.broadcast %cst_21 : f32 to vector<128x256xf32>
      %64 = arith.select %62, %20, %63 : vector<128x256xi1>, vector<128x256xf32>
      %cst_22 = arith.constant dense<0.000000e+00> : vector<128x128xf32>
      %65 = tpu.matmul %64, %19, %cst_22 {dimension_numbers = #tpu.dot_dimension_numbers<[1], [1], [0], [0], [0, 0, 1, 0], [], []>} : vector<128x256xf32>, vector<128x256xf32>, vector<128x128xf32> -> vector<128x128xf32>
      %66 = vector.broadcast %cst : f32 to vector<128x128xf32>
      %67 = arith.select %5, %65, %66 : vector<128x128xi1>, vector<128x128xf32>
      %cst_23 = arith.constant dense<0xFF800000> : vector<128xf32>
      %68 = vector.multi_reduction <maximumf>, %67, %cst_23 [1] : vector<128x128xf32> to vector<128xf32>
      %69 = vector.shape_cast %68 : vector<128xf32> to vector<128x1xf32>
      %70 = vector.broadcast %69 : vector<128x1xf32> to vector<128x128xf32>
      %71 = arith.subf %67, %70 : vector<128x128xf32>
      %72 = math.exp %71 : vector<128x128xf32>
      %cst_24 = arith.constant dense<0.000000e+00> : vector<128xf32>
      %73 = vector.multi_reduction <add>, %72, %cst_24 [1] : vector<128x128xf32> to vector<128xf32>
      %74 = vector.shape_cast %73 : vector<128xf32> to vector<128x1xf32>
      %75 = tpu.reciprocal %74 {approx = true} : vector<128x1xf32> -> vector<128x1xf32>
      %76 = vector.broadcast %75 : vector<128x1xf32> to vector<128x128xf32>
      %77 = arith.mulf %72, %76 : vector<128x128xf32>
      %78 = arith.index_cast %arg6 : i32 to index
      %c1 = arith.constant 1 : index
      %c0_25 = arith.constant 0 : index
      %c0_26 = arith.constant 0 : index
      %79 = vector.load %arg5[%78, %c1, %c0_25, %c0_26] : memref<4x8x128x128xf32, #tpu.memory_space<vmem>>, vector<1x1x128x128xf32>
      %80 = vector.shape_cast %79 : vector<1x1x128x128xf32> to vector<128x128xf32>
      %81 = vector.shape_cast %77 : vector<128x128xf32> to vector<1x1x128x128xf32>
      tpu.vector_store %arg5[%78, %c1, %c0_25, %c0_26], %81 {strides = array<i32>} : memref<4x8x128x128xf32, #tpu.memory_space<vmem>>, vector<1x1x128x128xf32>,
      %cst_27 = arith.constant dense<0.000000e+00> : vector<128x256xf32>
      %82 = tpu.matmul %77, %20, %cst_27 {dimension_numbers = #tpu.dot_dimension_numbers<[1], [0], [0], [1], [0, 0, 1, 1], [], []>} : vector<128x128xf32>, vector<128x256xf32>, vector<128x256xf32> -> vector<128x256xf32>
      %83 = arith.select %62, %82, %57 : vector<128x256xi1>, vector<128x256xf32>
      %c64_i32_28 = arith.constant 64 : i32
      %84 = vector.broadcast %c64_i32_28 : i32 to vector<128x256xi32>
      %85 = arith.cmpi sge, %2, %84 : vector<128x256xi32>
      %c96_i32 = arith.constant 96 : i32
      %86 = vector.broadcast %c96_i32 : i32 to vector<128x256xi32>
      %87 = arith.cmpi slt, %2, %86 : vector<128x256xi32>
      %88 = arith.andi %85, %87 : vector<128x256xi1>
      %cst_29 = arith.constant 0.000000e+00 : f32
      %89 = vector.broadcast %cst_29 : f32 to vector<128x256xf32>
      %90 = arith.select %88, %20, %89 : vector<128x256xi1>, vector<128x256xf32>
      %cst_30 = arith.constant dense<0.000000e+00> : vector<128x128xf32>
      %91 = tpu.matmul %90, %19, %cst_30 {dimension_numbers = #tpu.dot_dimension_numbers<[1], [1], [0], [0], [0, 0, 1, 0], [], []>} : vector<128x256xf32>, vector<128x256xf32>, vector<128x128xf32> -> vector<128x128xf32>
      %92 = vector.broadcast %cst : f32 to vector<128x128xf32>
      %93 = arith.select %5, %91, %92 : vector<128x128xi1>, vector<128x128xf32>
      %cst_31 = arith.constant dense<0xFF800000> : vector<128xf32>
      %94 = vector.multi_reduction <maximumf>, %93, %cst_31 [1] : vector<128x128xf32> to vector<128xf32>
      %95 = vector.shape_cast %94 : vector<128xf32> to vector<128x1xf32>
      %96 = vector.broadcast %95 : vector<128x1xf32> to vector<128x128xf32>
      %97 = arith.subf %93, %96 : vector<128x128xf32>
      %98 = math.exp %97 : vector<128x128xf32>
      %cst_32 = arith.constant dense<0.000000e+00> : vector<128xf32>
      %99 = vector.multi_reduction <add>, %98, %cst_32 [1] : vector<128x128xf32> to vector<128xf32>
      %100 = vector.shape_cast %99 : vector<128xf32> to vector<128x1xf32>
      %101 = tpu.reciprocal %100 {approx = true} : vector<128x1xf32> -> vector<128x1xf32>
      %102 = vector.broadcast %101 : vector<128x1xf32> to vector<128x128xf32>
      %103 = arith.mulf %98, %102 : vector<128x128xf32>
      %104 = arith.index_cast %arg6 : i32 to index
      %c2 = arith.constant 2 : index
      %c0_33 = arith.constant 0 : index
      %c0_34 = arith.constant 0 : index
      %105 = vector.load %arg5[%104, %c2, %c0_33, %c0_34] : memref<4x8x128x128xf32, #tpu.memory_space<vmem>>, vector<1x1x128x128xf32>
      %106 = vector.shape_cast %105 : vector<1x1x128x128xf32> to vector<128x128xf32>
      %107 = vector.shape_cast %103 : vector<128x128xf32> to vector<1x1x128x128xf32>
      tpu.vector_store %arg5[%104, %c2, %c0_33, %c0_34], %107 {strides = array<i32>} : memref<4x8x128x128xf32, #tpu.memory_space<vmem>>, vector<1x1x128x128xf32>,
      %cst_35 = arith.constant dense<0.000000e+00> : vector<128x256xf32>
      %108 = tpu.matmul %103, %20, %cst_35 {dimension_numbers = #tpu.dot_dimension_numbers<[1], [0], [0], [1], [0, 0, 1, 1], [], []>} : vector<128x128xf32>, vector<128x256xf32>, vector<128x256xf32> -> vector<128x256xf32>
      %109 = arith.select %88, %108, %83 : vector<128x256xi1>, vector<128x256xf32>
      %c96_i32_36 = arith.constant 96 : i32
      %110 = vector.broadcast %c96_i32_36 : i32 to vector<128x256xi32>
      %111 = arith.cmpi sge, %2, %110 : vector<128x256xi32>
      %c128_i32 = arith.constant 128 : i32
      %112 = vector.broadcast %c128_i32 : i32 to vector<128x256xi32>
      %113 = arith.cmpi slt, %2, %112 : vector<128x256xi32>
      %114 = arith.andi %111, %113 : vector<128x256xi1>
      %cst_37 = arith.constant 0.000000e+00 : f32
      %115 = vector.broadcast %cst_37 : f32 to vector<128x256xf32>
      %116 = arith.select %114, %20, %115 : vector<128x256xi1>, vector<128x256xf32>
      %cst_38 = arith.constant dense<0.000000e+00> : vector<128x128xf32>
      %117 = tpu.matmul %116, %19, %cst_38 {dimension_numbers = #tpu.dot_dimension_numbers<[1], [1], [0], [0], [0, 0, 1, 0], [], []>} : vector<128x256xf32>, vector<128x256xf32>, vector<128x128xf32> -> vector<128x128xf32>
      %118 = vector.broadcast %cst : f32 to vector<128x128xf32>
      %119 = arith.select %5, %117, %118 : vector<128x128xi1>, vector<128x128xf32>
      %cst_39 = arith.constant dense<0xFF800000> : vector<128xf32>
      %120 = vector.multi_reduction <maximumf>, %119, %cst_39 [1] : vector<128x128xf32> to vector<128xf32>
      %121 = vector.shape_cast %120 : vector<128xf32> to vector<128x1xf32>
      %122 = vector.broadcast %121 : vector<128x1xf32> to vector<128x128xf32>
      %123 = arith.subf %119, %122 : vector<128x128xf32>
      %124 = math.exp %123 : vector<128x128xf32>
      %cst_40 = arith.constant dense<0.000000e+00> : vector<128xf32>
      %125 = vector.multi_reduction <add>, %124, %cst_40 [1] : vector<128x128xf32> to vector<128xf32>
      %126 = vector.shape_cast %125 : vector<128xf32> to vector<128x1xf32>
      %127 = tpu.reciprocal %126 {approx = true} : vector<128x1xf32> -> vector<128x1xf32>
      %128 = vector.broadcast %127 : vector<128x1xf32> to vector<128x128xf32>
      %129 = arith.mulf %124, %128 : vector<128x128xf32>
      %130 = arith.index_cast %arg6 : i32 to index
      %c3 = arith.constant 3 : index
      %c0_41 = arith.constant 0 : index
      %c0_42 = arith.constant 0 : index
      %131 = vector.load %arg5[%130, %c3, %c0_41, %c0_42] : memref<4x8x128x128xf32, #tpu.memory_space<vmem>>, vector<1x1x128x128xf32>
      %132 = vector.shape_cast %131 : vector<1x1x128x128xf32> to vector<128x128xf32>
      %133 = vector.shape_cast %129 : vector<128x128xf32> to vector<1x1x128x128xf32>
      tpu.vector_store %arg5[%130, %c3, %c0_41, %c0_42], %133 {strides = array<i32>} : memref<4x8x128x128xf32, #tpu.memory_space<vmem>>, vector<1x1x128x128xf32>,
      %cst_43 = arith.constant dense<0.000000e+00> : vector<128x256xf32>
      %134 = tpu.matmul %129, %20, %cst_43 {dimension_numbers = #tpu.dot_dimension_numbers<[1], [0], [0], [1], [0, 0, 1, 1], [], []>} : vector<128x128xf32>, vector<128x256xf32>, vector<128x256xf32> -> vector<128x256xf32>
      %135 = arith.select %114, %134, %109 : vector<128x256xi1>, vector<128x256xf32>
      %c128_i32_44 = arith.constant 128 : i32
      %136 = vector.broadcast %c128_i32_44 : i32 to vector<128x256xi32>
      %137 = arith.cmpi sge, %2, %136 : vector<128x256xi32>
      %c160_i32 = arith.constant 160 : i32
      %138 = vector.broadcast %c160_i32 : i32 to vector<128x256xi32>
      %139 = arith.cmpi slt, %2, %138 : vector<128x256xi32>
      %140 = arith.andi %137, %139 : vector<128x256xi1>
      %cst_45 = arith.constant 0.000000e+00 : f32
      %141 = vector.broadcast %cst_45 : f32 to vector<128x256xf32>
      %142 = arith.select %140, %20, %141 : vector<128x256xi1>, vector<128x256xf32>
      %cst_46 = arith.constant dense<0.000000e+00> : vector<128x128xf32>
      %143 = tpu.matmul %142, %19, %cst_46 {dimension_numbers = #tpu.dot_dimension_numbers<[1], [1], [0], [0], [0, 0, 1, 0], [], []>} : vector<128x256xf32>, vector<128x256xf32>, vector<128x128xf32> -> vector<128x128xf32>
      %144 = vector.broadcast %cst : f32 to vector<128x128xf32>
      %145 = arith.select %5, %143, %144 : vector<128x128xi1>, vector<128x128xf32>
      %cst_47 = arith.constant dense<0xFF800000> : vector<128xf32>
      %146 = vector.multi_reduction <maximumf>, %145, %cst_47 [1] : vector<128x128xf32> to vector<128xf32>
      %147 = vector.shape_cast %146 : vector<128xf32> to vector<128x1xf32>
      %148 = vector.broadcast %147 : vector<128x1xf32> to vector<128x128xf32>
      %149 = arith.subf %145, %148 : vector<128x128xf32>
      %150 = math.exp %149 : vector<128x128xf32>
      %cst_48 = arith.constant dense<0.000000e+00> : vector<128xf32>
      %151 = vector.multi_reduction <add>, %150, %cst_48 [1] : vector<128x128xf32> to vector<128xf32>
      %152 = vector.shape_cast %151 : vector<128xf32> to vector<128x1xf32>
      %153 = tpu.reciprocal %152 {approx = true} : vector<128x1xf32> -> vector<128x1xf32>
      %154 = vector.broadcast %153 : vector<128x1xf32> to vector<128x128xf32>
      %155 = arith.mulf %150, %154 : vector<128x128xf32>
      %156 = arith.index_cast %arg6 : i32 to index
      %c4 = arith.constant 4 : index
      %c0_49 = arith.constant 0 : index
      %c0_50 = arith.constant 0 : index
      %157 = vector.load %arg5[%156, %c4, %c0_49, %c0_50] : memref<4x8x128x128xf32, #tpu.memory_space<vmem>>, vector<1x1x128x128xf32>
      %158 = vector.shape_cast %157 : vector<1x1x128x128xf32> to vector<128x128xf32>
      %159 = vector.shape_cast %155 : vector<128x128xf32> to vector<1x1x128x128xf32>
      tpu.vector_store %arg5[%156, %c4, %c0_49, %c0_50], %159 {strides = array<i32>} : memref<4x8x128x128xf32, #tpu.memory_space<vmem>>, vector<1x1x128x128xf32>,
      %cst_51 = arith.constant dense<0.000000e+00> : vector<128x256xf32>
      %160 = tpu.matmul %155, %20, %cst_51 {dimension_numbers = #tpu.dot_dimension_numbers<[1], [0], [0], [1], [0, 0, 1, 1], [], []>} : vector<128x128xf32>, vector<128x256xf32>, vector<128x256xf32> -> vector<128x256xf32>
      %161 = arith.select %140, %160, %135 : vector<128x256xi1>, vector<128x256xf32>
      %c160_i32_52 = arith.constant 160 : i32
      %162 = vector.broadcast %c160_i32_52 : i32 to vector<128x256xi32>
      %163 = arith.cmpi sge, %2, %162 : vector<128x256xi32>
      %c192_i32 = arith.constant 192 : i32
      %164 = vector.broadcast %c192_i32 : i32 to vector<128x256xi32>
      %165 = arith.cmpi slt, %2, %164 : vector<128x256xi32>
      %166 = arith.andi %163, %165 : vector<128x256xi1>
      %cst_53 = arith.constant 0.000000e+00 : f32
      %167 = vector.broadcast %cst_53 : f32 to vector<128x256xf32>
      %168 = arith.select %166, %20, %167 : vector<128x256xi1>, vector<128x256xf32>
      %cst_54 = arith.constant dense<0.000000e+00> : vector<128x128xf32>
      %169 = tpu.matmul %168, %19, %cst_54 {dimension_numbers = #tpu.dot_dimension_numbers<[1], [1], [0], [0], [0, 0, 1, 0], [], []>} : vector<128x256xf32>, vector<128x256xf32>, vector<128x128xf32> -> vector<128x128xf32>
      %170 = vector.broadcast %cst : f32 to vector<128x128xf32>
      %171 = arith.select %5, %169, %170 : vector<128x128xi1>, vector<128x128xf32>
      %cst_55 = arith.constant dense<0xFF800000> : vector<128xf32>
      %172 = vector.multi_reduction <maximumf>, %171, %cst_55 [1] : vector<128x128xf32> to vector<128xf32>
      %173 = vector.shape_cast %172 : vector<128xf32> to vector<128x1xf32>
      %174 = vector.broadcast %173 : vector<128x1xf32> to vector<128x128xf32>
      %175 = arith.subf %171, %174 : vector<128x128xf32>
      %176 = math.exp %175 : vector<128x128xf32>
      %cst_56 = arith.constant dense<0.000000e+00> : vector<128xf32>
      %177 = vector.multi_reduction <add>, %176, %cst_56 [1] : vector<128x128xf32> to vector<128xf32>
      %178 = vector.shape_cast %177 : vector<128xf32> to vector<128x1xf32>
      %179 = tpu.reciprocal %178 {approx = true} : vector<128x1xf32> -> vector<128x1xf32>
      %180 = vector.broadcast %179 : vector<128x1xf32> to vector<128x128xf32>
      %181 = arith.mulf %176, %180 : vector<128x128xf32>
      %182 = arith.index_cast %arg6 : i32 to index
      %c5 = arith.constant 5 : index
      %c0_57 = arith.constant 0 : index
      %c0_58 = arith.constant 0 : index
      %183 = vector.load %arg5[%182, %c5, %c0_57, %c0_58] : memref<4x8x128x128xf32, #tpu.memory_space<vmem>>, vector<1x1x128x128xf32>
      %184 = vector.shape_cast %183 : vector<1x1x128x128xf32> to vector<128x128xf32>
      %185 = vector.shape_cast %181 : vector<128x128xf32> to vector<1x1x128x128xf32>
      tpu.vector_store %arg5[%182, %c5, %c0_57, %c0_58], %185 {strides = array<i32>} : memref<4x8x128x128xf32, #tpu.memory_space<vmem>>, vector<1x1x128x128xf32>,
      %cst_59 = arith.constant dense<0.000000e+00> : vector<128x256xf32>
      %186 = tpu.matmul %181, %20, %cst_59 {dimension_numbers = #tpu.dot_dimension_numbers<[1], [0], [0], [1], [0, 0, 1, 1], [], []>} : vector<128x128xf32>, vector<128x256xf32>, vector<128x256xf32> -> vector<128x256xf32>
      %187 = arith.select %166, %186, %161 : vector<128x256xi1>, vector<128x256xf32>
      %c192_i32_60 = arith.constant 192 : i32
      %188 = vector.broadcast %c192_i32_60 : i32 to vector<128x256xi32>
      %189 = arith.cmpi sge, %2, %188 : vector<128x256xi32>
      %c224_i32 = arith.constant 224 : i32
      %190 = vector.broadcast %c224_i32 : i32 to vector<128x256xi32>
      %191 = arith.cmpi slt, %2, %190 : vector<128x256xi32>
      %192 = arith.andi %189, %191 : vector<128x256xi1>
      %cst_61 = arith.constant 0.000000e+00 : f32
      %193 = vector.broadcast %cst_61 : f32 to vector<128x256xf32>
      %194 = arith.select %192, %20, %193 : vector<128x256xi1>, vector<128x256xf32>
      %cst_62 = arith.constant dense<0.000000e+00> : vector<128x128xf32>
      %195 = tpu.matmul %194, %19, %cst_62 {dimension_numbers = #tpu.dot_dimension_numbers<[1], [1], [0], [0], [0, 0, 1, 0], [], []>} : vector<128x256xf32>, vector<128x256xf32>, vector<128x128xf32> -> vector<128x128xf32>
      %196 = vector.broadcast %cst : f32 to vector<128x128xf32>
      %197 = arith.select %5, %195, %196 : vector<128x128xi1>, vector<128x128xf32>
      %cst_63 = arith.constant dense<0xFF800000> : vector<128xf32>
      %198 = vector.multi_reduction <maximumf>, %197, %cst_63 [1] : vector<128x128xf32> to vector<128xf32>
      %199 = vector.shape_cast %198 : vector<128xf32> to vector<128x1xf32>
      %200 = vector.broadcast %199 : vector<128x1xf32> to vector<128x128xf32>
      %201 = arith.subf %197, %200 : vector<128x128xf32>
      %202 = math.exp %201 : vector<128x128xf32>
      %cst_64 = arith.constant dense<0.000000e+00> : vector<128xf32>
      %203 = vector.multi_reduction <add>, %202, %cst_64 [1] : vector<128x128xf32> to vector<128xf32>
      %204 = vector.shape_cast %203 : vector<128xf32> to vector<128x1xf32>
      %205 = tpu.reciprocal %204 {approx = true} : vector<128x1xf32> -> vector<128x1xf32>
      %206 = vector.broadcast %205 : vector<128x1xf32> to vector<128x128xf32>
      %207 = arith.mulf %202, %206 : vector<128x128xf32>
      %208 = arith.index_cast %arg6 : i32 to index
      %c6 = arith.constant 6 : index
      %c0_65 = arith.constant 0 : index
      %c0_66 = arith.constant 0 : index
      %209 = vector.load %arg5[%208, %c6, %c0_65, %c0_66] : memref<4x8x128x128xf32, #tpu.memory_space<vmem>>, vector<1x1x128x128xf32>
      %210 = vector.shape_cast %209 : vector<1x1x128x128xf32> to vector<128x128xf32>
      %211 = vector.shape_cast %207 : vector<128x128xf32> to vector<1x1x128x128xf32>
      tpu.vector_store %arg5[%208, %c6, %c0_65, %c0_66], %211 {strides = array<i32>} : memref<4x8x128x128xf32, #tpu.memory_space<vmem>>, vector<1x1x128x128xf32>,
      %cst_67 = arith.constant dense<0.000000e+00> : vector<128x256xf32>
      %212 = tpu.matmul %207, %20, %cst_67 {dimension_numbers = #tpu.dot_dimension_numbers<[1], [0], [0], [1], [0, 0, 1, 1], [], []>} : vector<128x128xf32>, vector<128x256xf32>, vector<128x256xf32> -> vector<128x256xf32>
      %213 = arith.select %192, %212, %187 : vector<128x256xi1>, vector<128x256xf32>
      %c224_i32_68 = arith.constant 224 : i32
      %214 = vector.broadcast %c224_i32_68 : i32 to vector<128x256xi32>
      %215 = arith.cmpi sge, %2, %214 : vector<128x256xi32>
      %c256_i32 = arith.constant 256 : i32
      %216 = vector.broadcast %c256_i32 : i32 to vector<128x256xi32>
      %217 = arith.cmpi slt, %2, %216 : vector<128x256xi32>
      %218 = arith.andi %215, %217 : vector<128x256xi1>
      %cst_69 = arith.constant 0.000000e+00 : f32
      %219 = vector.broadcast %cst_69 : f32 to vector<128x256xf32>
      %220 = arith.select %218, %20, %219 : vector<128x256xi1>, vector<128x256xf32>
      %cst_70 = arith.constant dense<0.000000e+00> : vector<128x128xf32>
      %221 = tpu.matmul %220, %19, %cst_70 {dimension_numbers = #tpu.dot_dimension_numbers<[1], [1], [0], [0], [0, 0, 1, 0], [], []>} : vector<128x256xf32>, vector<128x256xf32>, vector<128x128xf32> -> vector<128x128xf32>
      %222 = vector.broadcast %cst : f32 to vector<128x128xf32>
      %223 = arith.select %5, %221, %222 : vector<128x128xi1>, vector<128x128xf32>
      %cst_71 = arith.constant dense<0xFF800000> : vector<128xf32>
      %224 = vector.multi_reduction <maximumf>, %223, %cst_71 [1] : vector<128x128xf32> to vector<128xf32>
      %225 = vector.shape_cast %224 : vector<128xf32> to vector<128x1xf32>
      %226 = vector.broadcast %225 : vector<128x1xf32> to vector<128x128xf32>
      %227 = arith.subf %223, %226 : vector<128x128xf32>
      %228 = math.exp %227 : vector<128x128xf32>
      %cst_72 = arith.constant dense<0.000000e+00> : vector<128xf32>
      %229 = vector.multi_reduction <add>, %228, %cst_72 [1] : vector<128x128xf32> to vector<128xf32>
      %230 = vector.shape_cast %229 : vector<128xf32> to vector<128x1xf32>
      %231 = tpu.reciprocal %230 {approx = true} : vector<128x1xf32> -> vector<128x1xf32>
      %232 = vector.broadcast %231 : vector<128x1xf32> to vector<128x128xf32>
      %233 = arith.mulf %228, %232 : vector<128x128xf32>
      %234 = arith.index_cast %arg6 : i32 to index
      %c7 = arith.constant 7 : index
      %c0_73 = arith.constant 0 : index
      %c0_74 = arith.constant 0 : index
      %235 = vector.load %arg5[%234, %c7, %c0_73, %c0_74] : memref<4x8x128x128xf32, #tpu.memory_space<vmem>>, vector<1x1x128x128xf32>
      %236 = vector.shape_cast %235 : vector<1x1x128x128xf32> to vector<128x128xf32>
      %237 = vector.shape_cast %233 : vector<128x128xf32> to vector<1x1x128x128xf32>
      tpu.vector_store %arg5[%234, %c7, %c0_73, %c0_74], %237 {strides = array<i32>} : memref<4x8x128x128xf32, #tpu.memory_space<vmem>>, vector<1x1x128x128xf32>,
      %cst_75 = arith.constant dense<0.000000e+00> : vector<128x256xf32>
      %238 = tpu.matmul %233, %20, %cst_75 {dimension_numbers = #tpu.dot_dimension_numbers<[1], [0], [0], [1], [0, 0, 1, 1], [], []>} : vector<128x128xf32>, vector<128x256xf32>, vector<128x256xf32> -> vector<128x256xf32>
      %239 = arith.select %218, %238, %213 : vector<128x256xi1>, vector<128x256xf32>
      %240 = arith.mulf %30, %239 : vector<128x256xf32>
      %cst_76 = arith.constant dense<0.000000e+00> : vector<256xf32>
      %241 = vector.multi_reduction <add>, %240, %cst_76 [0] : vector<128x256xf32> to vector<256xf32>
      %242 = vector.shape_cast %241 : vector<256xf32> to vector<1x256xf32>
      %243 = arith.index_cast %arg6 : i32 to index
      %c0_77 = arith.constant 0 : index
      %c0_78 = arith.constant 0 : index
      %244 = vector.load %arg4[%243, %c0_77, %c0_78] : memref<4x1x256xf32, #tpu.memory_space<vmem>>, vector<1x1x256xf32>
      %245 = vector.shape_cast %244 : vector<1x1x256xf32> to vector<1x256xf32>
      %246 = vector.shape_cast %242 : vector<1x256xf32> to vector<1x1x256xf32>
      tpu.vector_store %arg4[%243, %c0_77, %c0_78], %246 {strides = array<i32>} : memref<4x1x256xf32, #tpu.memory_space<vmem>>, vector<1x1x256xf32>,
    }
    %c4_i32_4 = arith.constant 4 : i32
    return
  }
  func.func @transform_0(%arg0: i32) -> (i32, i32, i32) {
    %c0_i32 = arith.constant 0 : i32
    %c0_i32_0 = arith.constant 0 : i32
    %c0_i32_1 = arith.constant 0 : i32
    return %arg0, %c0_i32, %c0_i32_0 : i32, i32, i32
  }
  func.func @transform_1(%arg0: i32) -> (i32, i32) {
    %c0_i32 = arith.constant 0 : i32
    %c0_i32_0 = arith.constant 0 : i32
    %c0_i32_1 = arith.constant 0 : i32
    return %c0_i32, %c0_i32_0 : i32, i32
  }
  func.func @transform_2(%arg0: i32) -> (i32, i32) {
    %c0_i32 = arith.constant 0 : i32
    %c0_i32_0 = arith.constant 0 : i32
    %c0_i32_1 = arith.constant 0 : i32
    return %c0_i32, %c0_i32_0 : i32, i32
  }
  func.func @transform_3(%arg0: i32) -> (i32, i32, i32) {
    %c0_i32 = arith.constant 0 : i32
    %c0_i32_0 = arith.constant 0 : i32
    %c0_i32_1 = arith.constant 0 : i32
    return %arg0, %c0_i32, %c0_i32_0 : i32, i32, i32
  }
  func.func @transform_4(%arg0: i32) -> (i32, i32, i32, i32) {
    %c0_i32 = arith.constant 0 : i32
    %c0_i32_0 = arith.constant 0 : i32
    %c0_i32_1 = arith.constant 0 : i32
    %c0_i32_2 = arith.constant 0 : i32
    return %arg0, %c0_i32, %c0_i32_0, %c0_i32_1 : i32, i32, i32, i32
  }
}

</mosaic_0001>

<llo_original>
// kernel: tpu_custom_call.1
$region0: #{tpu_custom_call.1}
  #allocation0 [shape = 'u32[]', space=smem, size = 0x4, offset = 0x4, fixed_abs, tag = 'smem constant byte address 0x4 - core index']
  #allocation1 [shape = 'u32[144,128]{1,0:T(1,128)}', space=vmem, size = 0x12000, scoped, tag = 'internal scratch']
  %s0 = inlined_call_operand.hbm [shape: f32[4,128,256], index: 0, kind: input, shape index: {}]
  %s1 = inlined_call_operand.hbm [shape: bf16[256,768], index: 1, kind: input, shape index: {}]
  %s2 = inlined_call_operand.hbm [shape: f32[1,256], index: 2, kind: input, shape index: {}]
  %s3 = inlined_call_operand.hbm [shape: f32[4,1,256], index: 3, kind: output, shape index: {0}]
  %s4 = inlined_call_operand.hbm [shape: f32[4,8,128,128], index: 4, kind: output, shape index: {1}]
  %5 = xla_tuple %s3, %s4
  %s6 = sld [smem:[#allocation0]]
  $region49: #{tpu_custom_call.1} parent=0
    _
  %s8 = ssub.s32 1, %s6
  %s9 = scalar_select 0, %s8, %s6
  $region1: #{tpu_custom_call.1} parent=0
    #allocation2 [shape = 'u8[524288]{0}', space=vmem, size = 0x80000, scoped, tag = 'input window, operand 0, single buffered']
    #allocation3 [shape = 's32[1]{0}', space=sflag, size = 0x4, scoped, tag = 'scoped memory for tpu_custom_call.1']
    #allocation4 [shape = 's32[1]{0}', space=sflag, size = 0x4, scoped, tag = 'scoped memory for tpu_custom_call.1']
    #allocation5 [shape = 'u8[393216]{0}', space=vmem, size = 0x60000, scoped, tag = 'input window, operand 1, single buffered']
    #allocation6 [shape = 's32[1]{0}', space=sflag, size = 0x4, scoped, tag = 'scoped memory for tpu_custom_call.1']
    #allocation7 [shape = 'u8[1024]{0}', space=vmem, size = 0x400, scoped, tag = 'input window, operand 2, single buffered']
    #allocation8 [shape = 'u8[4096]{0}', space=vmem, size = 0x1000, scoped, tag = 'output window, operand 0, single buffered']
    #allocation9 [shape = 'u8[2097152]{0}', space=vmem, size = 0x200000, scoped, tag = 'output window, operand 1, single buffered']
    #allocation10 [shape = 's32[1]{0}', space=sflag, size = 0x4, scoped, tag = 'scoped memory for tpu_custom_call.1']
    %10 = vsyncpa [#allocation3], 0
    %11 = vsyncpa [#allocation6], 0
    %12 = vsyncpa [#allocation4], 0
    %13 = vsyncpa [#allocation10], 0
    // Predicated region
    $region2: #{tpu_custom_call.1} parent=1 // pred_check
      _
    $region3: #{tpu_custom_call.1} parent=1 // pred_check_branch
      %15 = sbr.rel (0) target = $region5
    $region4: #{tpu_custom_call.1} parent=1 // pred_region
      %s17 = ssub.s32 16384, 16384
      %18 = vsyncadd [#allocation3], %s17
      %s19 = sshll.u32 [#allocation2], 4
      %s20 = int_to_ptr.vmem [resolvable:$true] %s19
      %25 = dma.hbm_to_vmem [thread:$0]  %s0, 16384, %s20, [#allocation3], 256, 256, 16
    $region5: #{tpu_custom_call.1} parent=1 // pred_fallthru
      _
    // Predicated region
    $region6: #{tpu_custom_call.1} parent=1 // pred_check
      _
    $region7: #{tpu_custom_call.1} parent=1 // pred_check_branch
      %27 = sbr.rel (0) target = $region9
    $region8: #{tpu_custom_call.1} parent=1 // pred_region
      %s29 = ssub.s32 12288, 12288
      %30 = vsyncadd [#allocation6], %s29
      %s31 = sshll.u32 [#allocation5], 4
      %s32 = int_to_ptr.vmem [resolvable:$true] %s31
      %37 = dma.hbm_to_vmem [thread:$0]  %s1, 12288, %s32, [#allocation6], 384, 384, 24
    $region9: #{tpu_custom_call.1} parent=1 // pred_fallthru
      _
    // Predicated region
    $region10: #{tpu_custom_call.1} parent=1 // pred_check
      _
    $region11: #{tpu_custom_call.1} parent=1 // pred_check_branch
      %39 = sbr.rel (0) target = $region13
    $region12: #{tpu_custom_call.1} parent=1 // pred_region
      %s41 = ssub.s32 32, 32
      %42 = vsyncadd [#allocation6], %s41
      %s44 = sshll.u32 [#allocation7], 4
      %s45 = int_to_ptr.vmem [resolvable:$true] %s44
      %47 = dma.hbm_to_vmem [thread:$0]  %s2, 32, %s45, [#allocation6]
    $region13: #{tpu_custom_call.1} parent=1 // pred_fallthru
      _
    // Predicated region
    $region14: #{tpu_custom_call.1} parent=1 // pred_check
      _
    $region15: #{tpu_custom_call.1} parent=1 // pred_check_branch
      %49 = sbr.rel (0) target = $region17
    $region16: #{tpu_custom_call.1} parent=1 // pred_region
      %50 = dma.done [#allocation3], 16384
    $region17: #{tpu_custom_call.1} parent=1 // pred_fallthru
      _
    // Predicated region
    $region18: #{tpu_custom_call.1} parent=1 // pred_check
      _
    $region19: #{tpu_custom_call.1} parent=1 // pred_check_branch
      %52 = sbr.rel (0) target = $region21
    $region20: #{tpu_custom_call.1} parent=1 // pred_region
      %53 = dma.done [#allocation6], 12288
    $region21: #{tpu_custom_call.1} parent=1 // pred_fallthru
      _
    // Predicated region
    $region22: #{tpu_custom_call.1} parent=1 // pred_check
      _
    $region23: #{tpu_custom_call.1} parent=1 // pred_check_branch
      %55 = sbr.rel (0) target = $region25
    $region24: #{tpu_custom_call.1} parent=1 // pred_region
      %56 = dma.done [#allocation6], 32
    $region25: #{tpu_custom_call.1} parent=1 // pred_fallthru
      _
    %v57 = vld [vmem:[#allocation5] sm:$0xff]
    %v58 = vld [vmem:[#allocation5 + $0x8] sm:$0xff]
    %v59 = vld [vmem:[#allocation5 + $0x10] sm:$0xff]
    %v60 = vld [vmem:[#allocation5 + $0x18] sm:$0xff]
    %v61 = vld [vmem:[#allocation5 + $0x20] sm:$0xff]
    %v62 = vld [vmem:[#allocation5 + $0x28] sm:$0xff]
    %v63 = vld [vmem:[#allocation5 + $0x30] sm:$0xff]
    %v64 = vld [vmem:[#allocation5 + $0x38] sm:$0xff]
    %v65 = vld [vmem:[#allocation5 + $0x40] sm:$0xff]
    %v66 = vld [vmem:[#allocation5 + $0x48] sm:$0xff]
    %v67 = vld [vmem:[#allocation5 + $0x50] sm:$0xff]
    %v68 = vld [vmem:[#allocation5 + $0x58] sm:$0xff]
    %v69 = vld [vmem:[#allocation5 + $0x60] sm:$0xff]
    %v70 = vld [vmem:[#allocation5 + $0x68] sm:$0xff]
    %v71 = vld [vmem:[#allocation5 + $0x70] sm:$0xff]
    %v72 = vld [vmem:[#allocation5 + $0x78] sm:$0xff]
    %v73 = vld [vmem:[#allocation5 + $0x80] sm:$0xff]
    %v74 = vld [vmem:[#allocation5 + $0x88] sm:$0xff]
    %v75 = vld [vmem:[#allocation5 + $0x90] sm:$0xff]
    %v76 = vld [vmem:[#allocation5 + $0x98] sm:$0xff]
    %v77 = vld [vmem:[#allocation5 + $0xa0] sm:$0xff]
    %v78 = vld [vmem:[#allocation5 + $0xa8] sm:$0xff]
    %v79 = vld [vmem:[#allocation5 + $0xb0] sm:$0xff]
    %v80 = vld [vmem:[#allocation5 + $0xb8] sm:$0xff]
    %v81 = vld [vmem:[#allocation5 + $0xc0] sm:$0xff]
    %v82 = vld [vmem:[#allocation5 + $0xc8] sm:$0xff]
    %v83 = vld [vmem:[#allocation5 + $0xd0] sm:$0xff]
    %v84 = vld [vmem:[#allocation5 + $0xd8] sm:$0xff]
    %v85 = vld [vmem:[#allocation5 + $0xe0] sm:$0xff]
    %v86 = vld [vmem:[#allocation5 + $0xe8] sm:$0xff]
    %v87 = vld [vmem:[#allocation5 + $0xf0] sm:$0xff]
    %v88 = vld [vmem:[#allocation5 + $0xf8] sm:$0xff]
    %v89 = vld [vmem:[#allocation5 + $0x100] sm:$0xff]
    %v90 = vld [vmem:[#allocation5 + $0x108] sm:$0xff]
    %v91 = vld [vmem:[#allocation5 + $0x110] sm:$0xff]
    %v92 = vld [vmem:[#allocation5 + $0x118] sm:$0xff]
    %v93 = vld [vmem:[#allocation5 + $0x120] sm:$0xff]
    %v94 = vld [vmem:[#allocation5 + $0x128] sm:$0xff]
    %v95 = vld [vmem:[#allocation5 + $0x130] sm:$0xff]
    %v96 = vld [vmem:[#allocation5 + $0x138] sm:$0xff]
    %v97 = vld [vmem:[#allocation5 + $0x140] sm:$0xff]
    %v98 = vld [vmem:[#allocation5 + $0x148] sm:$0xff]
    %v99 = vld [vmem:[#allocation5 + $0x150] sm:$0xff]
    %v100 = vld [vmem:[#allocation5 + $0x158] sm:$0xff]
    %v101 = vld [vmem:[#allocation5 + $0x160] sm:$0xff]
    %v102 = vld [vmem:[#allocation5 + $0x168] sm:$0xff]
    %v103 = vld [vmem:[#allocation5 + $0x170] sm:$0xff]
    %v104 = vld [vmem:[#allocation5 + $0x178] sm:$0xff]
    %v105 = vld [vmem:[#allocation5 + $0x180] sm:$0xff]
    %v106 = vld [vmem:[#allocation5 + $0x188] sm:$0xff]
    %v107 = vld [vmem:[#allocation5 + $0x190] sm:$0xff]
    %v108 = vld [vmem:[#allocation5 + $0x198] sm:$0xff]
    %v109 = vld [vmem:[#allocation5 + $0x1a0] sm:$0xff]
    %v110 = vld [vmem:[#allocation5 + $0x1a8] sm:$0xff]
    %v111 = vld [vmem:[#allocation5 + $0x1b0] sm:$0xff]
    %v112 = vld [vmem:[#allocation5 + $0x1b8] sm:$0xff]
    %v113 = vld [vmem:[#allocation5 + $0x1c0] sm:$0xff]
    %v114 = vld [vmem:[#allocation5 + $0x1c8] sm:$0xff]
    %v115 = vld [vmem:[#allocation5 + $0x1d0] sm:$0xff]
    %v116 = vld [vmem:[#allocation5 + $0x1d8] sm:$0xff]
    %v117 = vld [vmem:[#allocation5 + $0x1e0] sm:$0xff]
    %v118 = vld [vmem:[#allocation5 + $0x1e8] sm:$0xff]
    %v119 = vld [vmem:[#allocation5 + $0x1f0] sm:$0xff]
    %v120 = vld [vmem:[#allocation5 + $0x1f8] sm:$0xff]
    %v121 = vld [vmem:[#allocation5 + $0x200] sm:$0xff]
    %v122 = vld [vmem:[#allocation5 + $0x208] sm:$0xff]
    %v123 = vld [vmem:[#allocation5 + $0x210] sm:$0xff]
    %v124 = vld [vmem:[#allocation5 + $0x218] sm:$0xff]
    %v125 = vld [vmem:[#allocation5 + $0x220] sm:$0xff]
    %v126 = vld [vmem:[#allocation5 + $0x228] sm:$0xff]
    %v127 = vld [vmem:[#allocation5 + $0x230] sm:$0xff]
    %v128 = vld [vmem:[#allocation5 + $0x238] sm:$0xff]
    %v129 = vld [vmem:[#allocation5 + $0x240] sm:$0xff]
    %v130 = vld [vmem:[#allocation5 + $0x248] sm:$0xff]
    %v131 = vld [vmem:[#allocation5 + $0x250] sm:$0xff]
    %v132 = vld [vmem:[#allocation5 + $0x258] sm:$0xff]
    %v133 = vld [vmem:[#allocation5 + $0x260] sm:$0xff]
    %v134 = vld [vmem:[#allocation5 + $0x268] sm:$0xff]
    %v135 = vld [vmem:[#allocation5 + $0x270] sm:$0xff]
    %v136 = vld [vmem:[#allocation5 + $0x278] sm:$0xff]
    %v137 = vld [vmem:[#allocation5 + $0x280] sm:$0xff]
    %v138 = vld [vmem:[#allocation5 + $0x288] sm:$0xff]
    %v139 = vld [vmem:[#allocation5 + $0x290] sm:$0xff]
    %v140 = vld [vmem:[#allocation5 + $0x298] sm:$0xff]
    %v141 = vld [vmem:[#allocation5 + $0x2a0] sm:$0xff]
    %v142 = vld [vmem:[#allocation5 + $0x2a8] sm:$0xff]
    %v143 = vld [vmem:[#allocation5 + $0x2b0] sm:$0xff]
    %v144 = vld [vmem:[#allocation5 + $0x2b8] sm:$0xff]
    %v145 = vld [vmem:[#allocation5 + $0x2c0] sm:$0xff]
    %v146 = vld [vmem:[#allocation5 + $0x2c8] sm:$0xff]
    %v147 = vld [vmem:[#allocation5 + $0x2d0] sm:$0xff]
    %v148 = vld [vmem:[#allocation5 + $0x2d8] sm:$0xff]
    %v149 = vld [vmem:[#allocation5 + $0x2e0] sm:$0xff]
    %v150 = vld [vmem:[#allocation5 + $0x2e8] sm:$0xff]
    %v151 = vld [vmem:[#allocation5 + $0x2f0] sm:$0xff]
    %v152 = vld [vmem:[#allocation5 + $0x2f8] sm:$0xff]
    %v153 = vld [vmem:[#allocation7] sm:$0x3]
    %v154 = vlaneseq
    %v155 = vand.u32 %v154, 127
    %v156 = vadd.s32 %v155, 128
    %vm157 = vcmp.lt.s32.totalorder %v155, 8
    %v158 = vlaneseq
    %v159 = vshrl.u32 %v158, 7
    %v160 = vadd.s32 %v159, 8
    %v161 = vadd.s32 %v159, 16
    %v162 = vadd.s32 %v159, 24
    %v163 = vadd.s32 %v159, 32
    %v164 = vadd.s32 %v159, 40
    %v165 = vadd.s32 %v159, 48
    %v166 = vadd.s32 %v159, 56
    %v167 = vadd.s32 %v159, 64
    %v168 = vadd.s32 %v159, 72
    %v169 = vadd.s32 %v159, 80
    %v170 = vadd.s32 %v159, 88
    %v171 = vadd.s32 %v159, 96
    %v172 = vadd.s32 %v159, 104
    %v173 = vadd.s32 %v159, 112
    %v174 = vadd.s32 %v159, 120
    %vm175 = vcmp.lt.s32.totalorder %v159, 8
    %vm176 = vcmp.lt.s32.totalorder %v160, 8
    %vm177 = vcmp.lt.s32.totalorder %v161, 8
    %vm178 = vcmp.lt.s32.totalorder %v162, 8
    %vm179 = vcmp.lt.s32.totalorder %v163, 8
    %vm180 = vcmp.lt.s32.totalorder %v164, 8
    %vm181 = vcmp.lt.s32.totalorder %v165, 8
    %vm182 = vcmp.lt.s32.totalorder %v166, 8
    %vm183 = vcmp.lt.s32.totalorder %v167, 8
    %vm184 = vcmp.lt.s32.totalorder %v168, 8
    %vm185 = vcmp.lt.s32.totalorder %v169, 8
    %vm186 = vcmp.lt.s32.totalorder %v170, 8
    %vm187 = vcmp.lt.s32.totalorder %v171, 8
    %vm188 = vcmp.lt.s32.totalorder %v172, 8
    %vm189 = vcmp.lt.s32.totalorder %v173, 8
    %vm190 = vcmp.lt.s32.totalorder %v174, 8
    %v191 = vsel %vm175, 1, 0
    %v192 = vsel %vm176, 1, 0
    %v193 = vsel %vm177, 1, 0
    %v194 = vsel %vm178, 1, 0
    %v195 = vsel %vm179, 1, 0
    %v196 = vsel %vm180, 1, 0
    %v197 = vsel %vm181, 1, 0
    %v198 = vsel %vm182, 1, 0
    %v199 = vsel %vm183, 1, 0
    %v200 = vsel %vm184, 1, 0
    %v201 = vsel %vm185, 1, 0
    %v202 = vsel %vm186, 1, 0
    %v203 = vsel %vm187, 1, 0
    %v204 = vsel %vm188, 1, 0
    %v205 = vsel %vm189, 1, 0
    %v206 = vsel %vm190, 1, 0
    %v207 = vcvt.s32.f32 %v191
    %v208 = vcvt.s32.f32 %v192
    %v209 = vcvt.s32.f32 %v193
    %v210 = vcvt.s32.f32 %v194
    %v211 = vcvt.s32.f32 %v195
    %v212 = vcvt.s32.f32 %v196
    %v213 = vcvt.s32.f32 %v197
    %v214 = vcvt.s32.f32 %v198
    %v215 = vcvt.s32.f32 %v199
    %v216 = vcvt.s32.f32 %v200
    %v217 = vcvt.s32.f32 %v201
    %v218 = vcvt.s32.f32 %v202
    %v219 = vcvt.s32.f32 %v203
    %v220 = vcvt.s32.f32 %v204
    %v221 = vcvt.s32.f32 %v205
    %v222 = vcvt.s32.f32 %v206
    loop: start=0, step=1, limit=4
    $region26: #{tpu_custom_call.1} parent=1 // loop_pre_header
      _
    $region27: #{tpu_custom_call.1} parent=1 // loop_header
      %s224 = sphi 0, %s228
      %p225 = scmp.ge.s32.totalorder %s224, 4
    $region28: #{tpu_custom_call.1} parent=1 // loop_header_branch
      %227 = sbr.rel (%p225) target = $region32
    $region29: #{tpu_custom_call.1} parent=1 // loop_body
      %s229 = smul.u32 %s224, 32
      %s230 = smul.addr %s229, 8
      %s231 = scalar_lea.vmem [#allocation2], %s230
      %v232 = vld [vmem:[%s231] sm:$0xff]
      %v233 = vld [vmem:[%s231 + $0x8] sm:$0xff]
      %v234 = vld [vmem:[%s231 + $0x10] sm:$0xff]
      %v235 = vld [vmem:[%s231 + $0x18] sm:$0xff]
      %v236 = vld [vmem:[%s231 + $0x20] sm:$0xff]
      %v237 = vld [vmem:[%s231 + $0x28] sm:$0xff]
      %v238 = vld [vmem:[%s231 + $0x30] sm:$0xff]
      %v239 = vld [vmem:[%s231 + $0x38] sm:$0xff]
      %v240 = vld [vmem:[%s231 + $0x40] sm:$0xff]
      %v241 = vld [vmem:[%s231 + $0x48] sm:$0xff]
      %v242 = vld [vmem:[%s231 + $0x50] sm:$0xff]
      %v243 = vld [vmem:[%s231 + $0x58] sm:$0xff]
      %v244 = vld [vmem:[%s231 + $0x60] sm:$0xff]
      %v245 = vld [vmem:[%s231 + $0x68] sm:$0xff]
      %v246 = vld [vmem:[%s231 + $0x70] sm:$0xff]
      %v247 = vld [vmem:[%s231 + $0x78] sm:$0xff]
      %v248 = vld [vmem:[%s231 + $0x80] sm:$0xff]
      %v249 = vld [vmem:[%s231 + $0x88] sm:$0xff]
      %v250 = vld [vmem:[%s231 + $0x90] sm:$0xff]
      %v251 = vld [vmem:[%s231 + $0x98] sm:$0xff]
      %v252 = vld [vmem:[%s231 + $0xa0] sm:$0xff]
      %v253 = vld [vmem:[%s231 + $0xa8] sm:$0xff]
      %v254 = vld [vmem:[%s231 + $0xb0] sm:$0xff]
      %v255 = vld [vmem:[%s231 + $0xb8] sm:$0xff]
      %v256 = vld [vmem:[%s231 + $0xc0] sm:$0xff]
      %v257 = vld [vmem:[%s231 + $0xc8] sm:$0xff]
      %v258 = vld [vmem:[%s231 + $0xd0] sm:$0xff]
      %v259 = vld [vmem:[%s231 + $0xd8] sm:$0xff]
      %v260 = vld [vmem:[%s231 + $0xe0] sm:$0xff]
      %v261 = vld [vmem:[%s231 + $0xe8] sm:$0xff]
      %v262 = vld [vmem:[%s231 + $0xf0] sm:$0xff]
      %v263 = vld [vmem:[%s231 + $0xf8] sm:$0xff]
      %v264 = vpack.c.bf16 %v234, %v232
      %v265 = vpack.c.bf16 %v235, %v233
      %v266 = vpack.c.bf16 %v238, %v236
      %v267 = vpack.c.bf16 %v239, %v237
      %v268 = vpack.c.bf16 %v242, %v240
      %v269 = vpack.c.bf16 %v243, %v241
      %v270 = vpack.c.bf16 %v246, %v244
      %v271 = vpack.c.bf16 %v247, %v245
      %v272 = vpack.c.bf16 %v250, %v248
      %v273 = vpack.c.bf16 %v251, %v249
      %v274 = vpack.c.bf16 %v254, %v252
      %v275 = vpack.c.bf16 %v255, %v253
      %v276 = vpack.c.bf16 %v258, %v256
      %v277 = vpack.c.bf16 %v259, %v257
      %v278 = vpack.c.bf16 %v262, %v260
      %v279 = vpack.c.bf16 %v263, %v261
      %v376 = vunpack.c.l.b16 %v57
      %v377 = vunpack.c.h.b16 %v57
      %v378 = vunpack.c.l.b16 %v58
      %v379 = vunpack.c.h.b16 %v58
      %v380 = vunpack.c.l.b16 %v59
      %v381 = vunpack.c.h.b16 %v59
      %v382 = vunpack.c.l.b16 %v60
      %v383 = vunpack.c.h.b16 %v60
      %v384 = vunpack.c.l.b16 %v61
      %v385 = vunpack.c.h.b16 %v61
      %v386 = vunpack.c.l.b16 %v62
      %v387 = vunpack.c.h.b16 %v62
      %v388 = vunpack.c.l.b16 %v63
      %v389 = vunpack.c.h.b16 %v63
      %v390 = vunpack.c.l.b16 %v64
      %v391 = vunpack.c.h.b16 %v64
      %v392 = vunpack.c.l.b16 %v65
      %v393 = vunpack.c.h.b16 %v65
      %v394 = vunpack.c.l.b16 %v66
      %v395 = vunpack.c.h.b16 %v66
      %v396 = vunpack.c.l.b16 %v67
      %v397 = vunpack.c.h.b16 %v67
      %v398 = vunpack.c.l.b16 %v68
      %v399 = vunpack.c.h.b16 %v68
      %v400 = vunpack.c.l.b16 %v69
      %v401 = vunpack.c.h.b16 %v69
      %v402 = vunpack.c.l.b16 %v70
      %v403 = vunpack.c.h.b16 %v70
      %v404 = vunpack.c.l.b16 %v71
      %v405 = vunpack.c.h.b16 %v71
      %v406 = vunpack.c.l.b16 %v72
      %v407 = vunpack.c.h.b16 %v72
      %v408 = vunpack.c.l.b16 %v73
      %v409 = vunpack.c.h.b16 %v73
      %v410 = vunpack.c.l.b16 %v74
      %v411 = vunpack.c.h.b16 %v74
      %v412 = vunpack.c.l.b16 %v75
      %v413 = vunpack.c.h.b16 %v75
      %v414 = vunpack.c.l.b16 %v76
      %v415 = vunpack.c.h.b16 %v76
      %v416 = vunpack.c.l.b16 %v77
      %v417 = vunpack.c.h.b16 %v77
      %v418 = vunpack.c.l.b16 %v78
      %v419 = vunpack.c.h.b16 %v78
      %v420 = vunpack.c.l.b16 %v79
      %v421 = vunpack.c.h.b16 %v79
      %v422 = vunpack.c.l.b16 %v80
      %v423 = vunpack.c.h.b16 %v80
      %v424 = vunpack.c.l.b16 %v81
      %v425 = vunpack.c.h.b16 %v81
      %v426 = vunpack.c.l.b16 %v82
      %v427 = vunpack.c.h.b16 %v82
      %v428 = vunpack.c.l.b16 %v83
      %v429 = vunpack.c.h.b16 %v83
      %v430 = vunpack.c.l.b16 %v84
      %v431 = vunpack.c.h.b16 %v84
      %v432 = vunpack.c.l.b16 %v85
      %v433 = vunpack.c.h.b16 %v85
      %v434 = vunpack.c.l.b16 %v86
      %v435 = vunpack.c.h.b16 %v86
      %v436 = vunpack.c.l.b16 %v87
      %v437 = vunpack.c.h.b16 %v87
      %v438 = vunpack.c.l.b16 %v88
      %v439 = vunpack.c.h.b16 %v88
      %v440 = vunpack.c.l.b16 %v89
      %v441 = vunpack.c.h.b16 %v89
      %v442 = vunpack.c.l.b16 %v90
      %v443 = vunpack.c.h.b16 %v90
      %v444 = vunpack.c.l.b16 %v91
      %v445 = vunpack.c.h.b16 %v91
      %v446 = vunpack.c.l.b16 %v92
      %v447 = vunpack.c.h.b16 %v92
      %v448 = vunpack.c.l.b16 %v93
      %v449 = vunpack.c.h.b16 %v93
      %v450 = vunpack.c.l.b16 %v94
      %v451 = vunpack.c.h.b16 %v94
      %v452 = vunpack.c.l.b16 %v95
      %v453 = vunpack.c.h.b16 %v95
      %v454 = vunpack.c.l.b16 %v96
      %v455 = vunpack.c.h.b16 %v96
      %v456 = vunpack.c.l.b16 %v97
      %v457 = vunpack.c.h.b16 %v97
      %v458 = vunpack.c.l.b16 %v98
      %v459 = vunpack.c.h.b16 %v98
      %v460 = vunpack.c.l.b16 %v99
      %v461 = vunpack.c.h.b16 %v99
      %v462 = vunpack.c.l.b16 %v100
      %v463 = vunpack.c.h.b16 %v100
      %v464 = vunpack.c.l.b16 %v101
      %v465 = vunpack.c.h.b16 %v101
      %v466 = vunpack.c.l.b16 %v102
      %v467 = vunpack.c.h.b16 %v102
      %v468 = vunpack.c.l.b16 %v103
      %v469 = vunpack.c.h.b16 %v103
      %v470 = vunpack.c.l.b16 %v104
      %v471 = vunpack.c.h.b16 %v104
      %v472 = vunpack.c.l.b16 %v105
      %v473 = vunpack.c.h.b16 %v105
      %v474 = vunpack.c.l.b16 %v106
      %v475 = vunpack.c.h.b16 %v106
      %v476 = vunpack.c.l.b16 %v107
      %v477 = vunpack.c.h.b16 %v107
      %v478 = vunpack.c.l.b16 %v108
      %v479 = vunpack.c.h.b16 %v108
      %v480 = vunpack.c.l.b16 %v109
      %v481 = vunpack.c.h.b16 %v109
      %v482 = vunpack.c.l.b16 %v110
      %v483 = vunpack.c.h.b16 %v110
      %v484 = vunpack.c.l.b16 %v111
      %v485 = vunpack.c.h.b16 %v111
      %v486 = vunpack.c.l.b16 %v112
      %v487 = vunpack.c.h.b16 %v112
      %v488 = vunpack.c.l.b16 %v113
      %v489 = vunpack.c.h.b16 %v113
      %v490 = vunpack.c.l.b16 %v114
      %v491 = vunpack.c.h.b16 %v114
      %v492 = vunpack.c.l.b16 %v115
      %v493 = vunpack.c.h.b16 %v115
      %v494 = vunpack.c.l.b16 %v116
      %v495 = vunpack.c.h.b16 %v116
      %v496 = vunpack.c.l.b16 %v117
      %v497 = vunpack.c.h.b16 %v117
      %v498 = vunpack.c.l.b16 %v118
      %v499 = vunpack.c.h.b16 %v118
      %v500 = vunpack.c.l.b16 %v119
      %v501 = vunpack.c.h.b16 %v119
      %v502 = vunpack.c.l.b16 %v120
      %v503 = vunpack.c.h.b16 %v120
      %v504 = vunpack.c.l.b16 %v121
      %v505 = vunpack.c.h.b16 %v121
      %v506 = vunpack.c.l.b16 %v122
      %v507 = vunpack.c.h.b16 %v122
      %v508 = vunpack.c.l.b16 %v123
      %v509 = vunpack.c.h.b16 %v123
      %v510 = vunpack.c.l.b16 %v124
      %v511 = vunpack.c.h.b16 %v124
      %v512 = vunpack.c.l.b16 %v125
      %v513 = vunpack.c.h.b16 %v125
      %v514 = vunpack.c.l.b16 %v126
      %v515 = vunpack.c.h.b16 %v126
      %v516 = vunpack.c.l.b16 %v127
      %v517 = vunpack.c.h.b16 %v127
      %v518 = vunpack.c.l.b16 %v128
      %v519 = vunpack.c.h.b16 %v128
      %v520 = vunpack.c.l.b16 %v129
      %v521 = vunpack.c.h.b16 %v129
      %v522 = vunpack.c.l.b16 %v130
      %v523 = vunpack.c.h.b16 %v130
      %v524 = vunpack.c.l.b16 %v131
      %v525 = vunpack.c.h.b16 %v131
      %v526 = vunpack.c.l.b16 %v132
      %v527 = vunpack.c.h.b16 %v132
      %v528 = vunpack.c.l.b16 %v133
      %v529 = vunpack.c.h.b16 %v133
      %v530 = vunpack.c.l.b16 %v134
      %v531 = vunpack.c.h.b16 %v134
      %v532 = vunpack.c.l.b16 %v135
      %v533 = vunpack.c.h.b16 %v135
      %v534 = vunpack.c.l.b16 %v136
      %v535 = vunpack.c.h.b16 %v136
      %v536 = vunpack.c.l.b16 %v137
      %v537 = vunpack.c.h.b16 %v137
      %v538 = vunpack.c.l.b16 %v138
      %v539 = vunpack.c.h.b16 %v138
      %v540 = vunpack.c.l.b16 %v139
      %v541 = vunpack.c.h.b16 %v139
      %v542 = vunpack.c.l.b16 %v140
      %v543 = vunpack.c.h.b16 %v140
      %v544 = vunpack.c.l.b16 %v141
      %v545 = vunpack.c.h.b16 %v141
      %v546 = vunpack.c.l.b16 %v142
      %v547 = vunpack.c.h.b16 %v142
      %v548 = vunpack.c.l.b16 %v143
      %v549 = vunpack.c.h.b16 %v143
      %v550 = vunpack.c.l.b16 %v144
      %v551 = vunpack.c.h.b16 %v144
      %v552 = vunpack.c.l.b16 %v145
      %v553 = vunpack.c.h.b16 %v145
      %v554 = vunpack.c.l.b16 %v146
      %v555 = vunpack.c.h.b16 %v146
      %v556 = vunpack.c.l.b16 %v147
      %v557 = vunpack.c.h.b16 %v147
      %v558 = vunpack.c.l.b16 %v148
      %v559 = vunpack.c.h.b16 %v148
      %v560 = vunpack.c.l.b16 %v149
      %v561 = vunpack.c.h.b16 %v149
      %v562 = vunpack.c.l.b16 %v150
      %v563 = vunpack.c.h.b16 %v150
      %v564 = vunpack.c.l.b16 %v151
      %v565 = vunpack.c.h.b16 %v151
      %v566 = vunpack.c.l.b16 %v152
      %v567 = vunpack.c.h.b16 %v152
      %v568 = vpack.c.b16 %v382, %v376
      %v569 = vpack.c.b16 %v383, %v377
      %v570 = vpack.c.b16 %v384, %v378
      %v571 = vpack.c.b16 %v385, %v379
      %v572 = vpack.c.b16 %v386, %v380
      %v573 = vpack.c.b16 %v387, %v381
      %v574 = vpack.c.b16 %v394, %v388
      %v575 = vpack.c.b16 %v395, %v389
      %v576 = vpack.c.b16 %v396, %v390
      %v577 = vpack.c.b16 %v397, %v391
      %v578 = vpack.c.b16 %v398, %v392
      %v579 = vpack.c.b16 %v399, %v393
      %v580 = vpack.c.b16 %v406, %v400
      %v581 = vpack.c.b16 %v407, %v401
      %v582 = vpack.c.b16 %v408, %v402
      %v583 = vpack.c.b16 %v409, %v403
      %v584 = vpack.c.b16 %v410, %v404
      %v585 = vpack.c.b16 %v411, %v405
      %v586 = vpack.c.b16 %v418, %v412
      %v587 = vpack.c.b16 %v419, %v413
      %v588 = vpack.c.b16 %v420, %v414
      %v589 = vpack.c.b16 %v421, %v415
      %v590 = vpack.c.b16 %v422, %v416
      %v591 = vpack.c.b16 %v423, %v417
      %v592 = vpack.c.b16 %v430, %v424
      %v593 = vpack.c.b16 %v431, %v425
      %v594 = vpack.c.b16 %v432, %v426
      %v595 = vpack.c.b16 %v433, %v427
      %v596 = vpack.c.b16 %v434, %v428
      %v597 = vpack.c.b16 %v435, %v429
      %v598 = vpack.c.b16 %v442, %v436
      %v599 = vpack.c.b16 %v443, %v437
      %v600 = vpack.c.b16 %v444, %v438
      %v601 = vpack.c.b16 %v445, %v439
      %v602 = vpack.c.b16 %v446, %v440
      %v603 = vpack.c.b16 %v447, %v441
      %v604 = vpack.c.b16 %v454, %v448
      %v605 = vpack.c.b16 %v455, %v449
      %v606 = vpack.c.b16 %v456, %v450
      %v607 = vpack.c.b16 %v457, %v451
      %v608 = vpack.c.b16 %v458, %v452
      %v609 = vpack.c.b16 %v459, %v453
      %v610 = vpack.c.b16 %v466, %v460
      %v611 = vpack.c.b16 %v467, %v461
      %v612 = vpack.c.b16 %v468, %v462
      %v613 = vpack.c.b16 %v469, %v463
      %v614 = vpack.c.b16 %v470, %v464
      %v615 = vpack.c.b16 %v471, %v465
      %v616 = vpack.c.b16 %v478, %v472
      %v617 = vpack.c.b16 %v479, %v473
      %v618 = vpack.c.b16 %v480, %v474
      %v619 = vpack.c.b16 %v481, %v475
      %v620 = vpack.c.b16 %v482, %v476
      %v621 = vpack.c.b16 %v483, %v477
      %v622 = vpack.c.b16 %v490, %v484
      %v623 = vpack.c.b16 %v491, %v485
      %v624 = vpack.c.b16 %v492, %v486
      %v625 = vpack.c.b16 %v493, %v487
      %v626 = vpack.c.b16 %v494, %v488
      %v627 = vpack.c.b16 %v495, %v489
      %v628 = vpack.c.b16 %v502, %v496
      %v629 = vpack.c.b16 %v503, %v497
      %v630 = vpack.c.b16 %v504, %v498
      %v631 = vpack.c.b16 %v505, %v499
      %v632 = vpack.c.b16 %v506, %v500
      %v633 = vpack.c.b16 %v507, %v501
      %v634 = vpack.c.b16 %v514, %v508
      %v635 = vpack.c.b16 %v515, %v509
      %v636 = vpack.c.b16 %v516, %v510
      %v637 = vpack.c.b16 %v517, %v511
      %v638 = vpack.c.b16 %v518, %v512
      %v639 = vpack.c.b16 %v519, %v513
      %v640 = vpack.c.b16 %v526, %v520
      %v641 = vpack.c.b16 %v527, %v521
      %v642 = vpack.c.b16 %v528, %v522
      %v643 = vpack.c.b16 %v529, %v523
      %v644 = vpack.c.b16 %v530, %v524
      %v645 = vpack.c.b16 %v531, %v525
      %v646 = vpack.c.b16 %v538, %v532
      %v647 = vpack.c.b16 %v539, %v533
      %v648 = vpack.c.b16 %v540, %v534
      %v649 = vpack.c.b16 %v541, %v535
      %v650 = vpack.c.b16 %v542, %v536
      %v651 = vpack.c.b16 %v543, %v537
      %v652 = vpack.c.b16 %v550, %v544
      %v653 = vpack.c.b16 %v551, %v545
      %v654 = vpack.c.b16 %v552, %v546
      %v655 = vpack.c.b16 %v553, %v547
      %v656 = vpack.c.b16 %v554, %v548
      %v657 = vpack.c.b16 %v555, %v549
      %v658 = vpack.c.b16 %v562, %v556
      %v659 = vpack.c.b16 %v563, %v557
      %v660 = vpack.c.b16 %v564, %v558
      %v661 = vpack.c.b16 %v565, %v559
      %v662 = vpack.c.b16 %v566, %v560
      %v663 = vpack.c.b16 %v567, %v561
      %760 = vmatprep.subr.bf16.mxu0 %v611
      %761 = vmatpush1.bf16.msra.mxu0 %v610
      %762 = vmatprep.subr.bf16.mxu0 %v605
      %763 = vmatpush1.bf16.msra.mxu0 %v604
      %764 = vmatprep.subr.bf16.mxu0 %v599
      %765 = vmatpush1.bf16.msra.mxu0 %v598
      %766 = vmatprep.subr.bf16.mxu0 %v593
      %767 = vmatpush1.bf16.msra.mxu0 %v592
      %768 = vmatprep.subr.bf16.mxu0 %v587
      %769 = vmatpush1.bf16.msra.mxu0 %v586
      %770 = vmatprep.subr.bf16.mxu0 %v581
      %771 = vmatpush1.bf16.msra.mxu0 %v580
      %772 = vmatprep.subr.bf16.mxu0 %v575
      %773 = vmatpush1.bf16.msra.mxu0 %v574
      %774 = vmatprep.subr.bf16.mxu0 %v569
      %775 = vmatpush1.bf16.msra.mxu0 %v568
      %776 = vmatprep.subr.bf16.mxu0 %v659
      %777 = vmatpush2.bf16.msra.mxu0 %v658
      %778 = vmatprep.subr.bf16.mxu0 %v653
      %779 = vmatpush2.bf16.msra.mxu0 %v652
      %780 = vmatprep.subr.bf16.mxu0 %v647
      %781 = vmatpush2.bf16.msra.mxu0 %v646
      %782 = vmatprep.subr.bf16.mxu0 %v641
      %783 = vmatpush2.bf16.msra.mxu0 %v640
      %784 = vmatprep.subr.bf16.mxu0 %v635
      %785 = vmatpush2.bf16.msra.mxu0 %v634
      %786 = vmatprep.subr.bf16.mxu0 %v629
      %787 = vmatpush2.bf16.msra.mxu0 %v628
      %788 = vmatprep.subr.bf16.mxu0 %v623
      %789 = vmatpush2.bf16.msra.mxu0 %v622
      %790 = vmatprep.subr.bf16.mxu0 %v617
      %791 = vmatpush2.bf16.msra.mxu0 %v616
      %792 = vmatprep.mubr.bf16.mxu0 %v265
      %793 = vmatmul.mubr.bf16.gmra.mxu0 %v264
      %v794 = vpop.f32.mrf.mxu0
      %v795 = vadd.f32 0.0, %v794
      %v796 = vpop.f32.mrf.mxu0
      %v797 = vadd.f32 0.0, %v796
      %v798 = vpop.f32.mrf.mxu0
      %v799 = vadd.f32 0.0, %v798
      %v800 = vpop.f32.mrf.mxu0
      %v801 = vadd.f32 0.0, %v800
      %802 = vmatprep.mubr.bf16.mxu0 %v267
      %803 = vmatmul.mubr.bf16.gmra.mxu0 %v266
      %v804 = vpop.f32.mrf.mxu0
      %v805 = vadd.f32 0.0, %v804
      %v806 = vpop.f32.mrf.mxu0
      %v807 = vadd.f32 0.0, %v806
      %v808 = vpop.f32.mrf.mxu0
      %v809 = vadd.f32 0.0, %v808
      %v810 = vpop.f32.mrf.mxu0
      %v811 = vadd.f32 0.0, %v810
      %812 = vmatprep.mubr.bf16.mxu0 %v269
      %813 = vmatmul.mubr.bf16.gmra.mxu0 %v268
      %v814 = vpop.f32.mrf.mxu0
      %v815 = vadd.f32 0.0, %v814
      %v816 = vpop.f32.mrf.mxu0
      %v817 = vadd.f32 0.0, %v816
      %v818 = vpop.f32.mrf.mxu0
      %v819 = vadd.f32 0.0, %v818
      %v820 = vpop.f32.mrf.mxu0
      %v821 = vadd.f32 0.0, %v820
      %822 = vmatprep.mubr.bf16.mxu0 %v271
      %823 = vmatmul.mubr.bf16.gmra.mxu0 %v270
      %v824 = vpop.f32.mrf.mxu0
      %v825 = vadd.f32 0.0, %v824
      %v826 = vpop.f32.mrf.mxu0
      %v827 = vadd.f32 0.0, %v826
      %v828 = vpop.f32.mrf.mxu0
      %v829 = vadd.f32 0.0, %v828
      %v830 = vpop.f32.mrf.mxu0
      %v831 = vadd.f32 0.0, %v830
      %832 = vmatprep.mubr.bf16.mxu0 %v273
      %833 = vmatmul.mubr.bf16.gmra.mxu0 %v272
      %v834 = vpop.f32.mrf.mxu0
      %v835 = vadd.f32 0.0, %v834
      %v836 = vpop.f32.mrf.mxu0
      %v837 = vadd.f32 0.0, %v836
      %v838 = vpop.f32.mrf.mxu0
      %v839 = vadd.f32 0.0, %v838
      %v840 = vpop.f32.mrf.mxu0
      %v841 = vadd.f32 0.0, %v840
      %842 = vmatprep.mubr.bf16.mxu0 %v275
      %843 = vmatmul.mubr.bf16.gmra.mxu0 %v274
      %v844 = vpop.f32.mrf.mxu0
      %v845 = vadd.f32 0.0, %v844
      %v846 = vpop.f32.mrf.mxu0
      %v847 = vadd.f32 0.0, %v846
      %v848 = vpop.f32.mrf.mxu0
      %v849 = vadd.f32 0.0, %v848
      %v850 = vpop.f32.mrf.mxu0
      %v851 = vadd.f32 0.0, %v850
      %852 = vmatprep.mubr.bf16.mxu0 %v277
      %853 = vmatmul.mubr.bf16.gmra.mxu0 %v276
      %v854 = vpop.f32.mrf.mxu0
      %v855 = vadd.f32 0.0, %v854
      %v856 = vpop.f32.mrf.mxu0
      %v857 = vadd.f32 0.0, %v856
      %v858 = vpop.f32.mrf.mxu0
      %v859 = vadd.f32 0.0, %v858
      %v860 = vpop.f32.mrf.mxu0
      %v861 = vadd.f32 0.0, %v860
      %862 = vmatprep.mubr.bf16.mxu0 %v279
      %863 = vmatmul.mubr.bf16.gmra.mxu0 %v278
      %v864 = vpop.f32.mrf.mxu0
      %v865 = vadd.f32 0.0, %v864
      %v866 = vpop.f32.mrf.mxu0
      %v867 = vadd.f32 0.0, %v866
      %v868 = vpop.f32.mrf.mxu0
      %v869 = vadd.f32 0.0, %v868
      %v870 = vpop.f32.mrf.mxu0
      %v871 = vadd.f32 0.0, %v870
      %872 = vdwg.mxu0
      %873 = vmatprep.subr.bf16.mxu0 %v613
      %874 = vmatpush1.bf16.msra.mxu0 %v612
      %875 = vmatprep.subr.bf16.mxu0 %v607
      %876 = vmatpush1.bf16.msra.mxu0 %v606
      %877 = vmatprep.subr.bf16.mxu0 %v601
      %878 = vmatpush1.bf16.msra.mxu0 %v600
      %879 = vmatprep.subr.bf16.mxu0 %v595
      %880 = vmatpush1.bf16.msra.mxu0 %v594
      %881 = vmatprep.subr.bf16.mxu0 %v589
      %882 = vmatpush1.bf16.msra.mxu0 %v588
      %883 = vmatprep.subr.bf16.mxu0 %v583
      %884 = vmatpush1.bf16.msra.mxu0 %v582
      %885 = vmatprep.subr.bf16.mxu0 %v577
      %886 = vmatpush1.bf16.msra.mxu0 %v576
      %887 = vmatprep.subr.bf16.mxu0 %v571
      %888 = vmatpush1.bf16.msra.mxu0 %v570
      %889 = vmatprep.subr.bf16.mxu0 %v661
      %890 = vmatpush2.bf16.msra.mxu0 %v660
      %891 = vmatprep.subr.bf16.mxu0 %v655
      %892 = vmatpush2.bf16.msra.mxu0 %v654
      %893 = vmatprep.subr.bf16.mxu0 %v649
      %894 = vmatpush2.bf16.msra.mxu0 %v648
      %895 = vmatprep.subr.bf16.mxu0 %v643
      %896 = vmatpush2.bf16.msra.mxu0 %v642
      %897 = vmatprep.subr.bf16.mxu0 %v637
      %898 = vmatpush2.bf16.msra.mxu0 %v636
      %899 = vmatprep.subr.bf16.mxu0 %v631
      %900 = vmatpush2.bf16.msra.mxu0 %v630
      %901 = vmatprep.subr.bf16.mxu0 %v625
      %902 = vmatpush2.bf16.msra.mxu0 %v624
      %903 = vmatprep.subr.bf16.mxu0 %v619
      %904 = vmatpush2.bf16.msra.mxu0 %v618
      %905 = vmatprep.mubr.bf16.mxu0 %v265
      %906 = vmatmul.mubr.bf16.gmra.mxu0 %v264
      %v907 = vpop.f32.mrf.mxu0
      %v908 = vadd.f32 0.0, %v907
      %v909 = vpop.f32.mrf.mxu0
      %v910 = vadd.f32 0.0, %v909
      %v911 = vpop.f32.mrf.mxu0
      %v912 = vadd.f32 0.0, %v911
      %v913 = vpop.f32.mrf.mxu0
      %v914 = vadd.f32 0.0, %v913
      %915 = vmatprep.mubr.bf16.mxu0 %v267
      %916 = vmatmul.mubr.bf16.gmra.mxu0 %v266
      %v917 = vpop.f32.mrf.mxu0
      %v918 = vadd.f32 0.0, %v917
      %v919 = vpop.f32.mrf.mxu0
      %v920 = vadd.f32 0.0, %v919
      %v921 = vpop.f32.mrf.mxu0
      %v922 = vadd.f32 0.0, %v921
      %v923 = vpop.f32.mrf.mxu0
      %v924 = vadd.f32 0.0, %v923
      %925 = vmatprep.mubr.bf16.mxu0 %v269
      %926 = vmatmul.mubr.bf16.gmra.mxu0 %v268
      %v927 = vpop.f32.mrf.mxu0
      %v928 = vadd.f32 0.0, %v927
      %v929 = vpop.f32.mrf.mxu0
      %v930 = vadd.f32 0.0, %v929
      %v931 = vpop.f32.mrf.mxu0
      %v932 = vadd.f32 0.0, %v931
      %v933 = vpop.f32.mrf.mxu0
      %v934 = vadd.f32 0.0, %v933
      %935 = vmatprep.mubr.bf16.mxu0 %v271
      %936 = vmatmul.mubr.bf16.gmra.mxu0 %v270
      %v937 = vpop.f32.mrf.mxu0
      %v938 = vadd.f32 0.0, %v937
      %v939 = vpop.f32.mrf.mxu0
      %v940 = vadd.f32 0.0, %v939
      %v941 = vpop.f32.mrf.mxu0
      %v942 = vadd.f32 0.0, %v941
      %v943 = vpop.f32.mrf.mxu0
      %v944 = vadd.f32 0.0, %v943
      %945 = vmatprep.mubr.bf16.mxu0 %v273
      %946 = vmatmul.mubr.bf16.gmra.mxu0 %v272
      %v947 = vpop.f32.mrf.mxu0
      %v948 = vadd.f32 0.0, %v947
      %v949 = vpop.f32.mrf.mxu0
      %v950 = vadd.f32 0.0, %v949
      %v951 = vpop.f32.mrf.mxu0
      %v952 = vadd.f32 0.0, %v951
      %v953 = vpop.f32.mrf.mxu0
      %v954 = vadd.f32 0.0, %v953
      %955 = vmatprep.mubr.bf16.mxu0 %v275
      %956 = vmatmul.mubr.bf16.gmra.mxu0 %v274
      %v957 = vpop.f32.mrf.mxu0
      %v958 = vadd.f32 0.0, %v957
      %v959 = vpop.f32.mrf.mxu0
      %v960 = vadd.f32 0.0, %v959
      %v961 = vpop.f32.mrf.mxu0
      %v962 = vadd.f32 0.0, %v961
      %v963 = vpop.f32.mrf.mxu0
      %v964 = vadd.f32 0.0, %v963
      %965 = vmatprep.mubr.bf16.mxu0 %v277
      %966 = vmatmul.mubr.bf16.gmra.mxu0 %v276
      %v967 = vpop.f32.mrf.mxu0
      %v968 = vadd.f32 0.0, %v967
      %v969 = vpop.f32.mrf.mxu0
      %v970 = vadd.f32 0.0, %v969
      %v971 = vpop.f32.mrf.mxu0
      %v972 = vadd.f32 0.0, %v971
      %v973 = vpop.f32.mrf.mxu0
      %v974 = vadd.f32 0.0, %v973
      %975 = vmatprep.mubr.bf16.mxu0 %v279
      %976 = vmatmul.mubr.bf16.gmra.mxu0 %v278
      %v977 = vpop.f32.mrf.mxu0
      %v978 = vadd.f32 0.0, %v977
      %v979 = vpop.f32.mrf.mxu0
      %v980 = vadd.f32 0.0, %v979
      %v981 = vpop.f32.mrf.mxu0
      %v982 = vadd.f32 0.0, %v981
      %v983 = vpop.f32.mrf.mxu0
      %v984 = vadd.f32 0.0, %v983
      %985 = vdwg.mxu0
      %986 = vmatprep.subr.bf16.mxu0 %v615
      %987 = vmatpush1.bf16.msra.mxu0 %v614
      %988 = vmatprep.subr.bf16.mxu0 %v609
      %989 = vmatpush1.bf16.msra.mxu0 %v608
      %990 = vmatprep.subr.bf16.mxu0 %v603
      %991 = vmatpush1.bf16.msra.mxu0 %v602
      %992 = vmatprep.subr.bf16.mxu0 %v597
      %993 = vmatpush1.bf16.msra.mxu0 %v596
      %994 = vmatprep.subr.bf16.mxu0 %v591
      %995 = vmatpush1.bf16.msra.mxu0 %v590
      %996 = vmatprep.subr.bf16.mxu0 %v585
      %997 = vmatpush1.bf16.msra.mxu0 %v584
      %998 = vmatprep.subr.bf16.mxu0 %v579
      %999 = vmatpush1.bf16.msra.mxu0 %v578
      %1000 = vmatprep.subr.bf16.mxu0 %v573
      %1001 = vmatpush1.bf16.msra.mxu0 %v572
      %1002 = vmatprep.subr.bf16.mxu0 %v663
      %1003 = vmatpush2.bf16.msra.mxu0 %v662
      %1004 = vmatprep.subr.bf16.mxu0 %v657
      %1005 = vmatpush2.bf16.msra.mxu0 %v656
      %1006 = vmatprep.subr.bf16.mxu0 %v651
      %1007 = vmatpush2.bf16.msra.mxu0 %v650
      %1008 = vmatprep.subr.bf16.mxu0 %v645
      %1009 = vmatpush2.bf16.msra.mxu0 %v644
      %1010 = vmatprep.subr.bf16.mxu0 %v639
      %1011 = vmatpush2.bf16.msra.mxu0 %v638
      %1012 = vmatprep.subr.bf16.mxu0 %v633
      %1013 = vmatpush2.bf16.msra.mxu0 %v632
      %1014 = vmatprep.subr.bf16.mxu0 %v627
      %1015 = vmatpush2.bf16.msra.mxu0 %v626
      %1016 = vmatprep.subr.bf16.mxu0 %v621
      %1017 = vmatpush2.bf16.msra.mxu0 %v620
      %1018 = vmatprep.mubr.bf16.mxu0 %v265
      %1019 = vmatmul.mubr.bf16.gmra.mxu0 %v264
      %v1020 = vpop.f32.mrf.mxu0
      %v1021 = vadd.f32 0.0, %v1020
      %v1022 = vpop.f32.mrf.mxu0
      %v1023 = vadd.f32 0.0, %v1022
      %v1024 = vpop.f32.mrf.mxu0
      %v1025 = vadd.f32 0.0, %v1024
      %v1026 = vpop.f32.mrf.mxu0
      %v1027 = vadd.f32 0.0, %v1026
      %1028 = vmatprep.mubr.bf16.mxu0 %v267
      %1029 = vmatmul.mubr.bf16.gmra.mxu0 %v266
      %v1030 = vpop.f32.mrf.mxu0
      %v1031 = vadd.f32 0.0, %v1030
      %v1032 = vpop.f32.mrf.mxu0
      %v1033 = vadd.f32 0.0, %v1032
      %v1034 = vpop.f32.mrf.mxu0
      %v1035 = vadd.f32 0.0, %v1034
      %v1036 = vpop.f32.mrf.mxu0
      %v1037 = vadd.f32 0.0, %v1036
      %1038 = vmatprep.mubr.bf16.mxu0 %v269
      %1039 = vmatmul.mubr.bf16.gmra.mxu0 %v268
      %v1040 = vpop.f32.mrf.mxu0
      %v1041 = vadd.f32 0.0, %v1040
      %v1042 = vpop.f32.mrf.mxu0
      %v1043 = vadd.f32 0.0, %v1042
      %v1044 = vpop.f32.mrf.mxu0
      %v1045 = vadd.f32 0.0, %v1044
      %v1046 = vpop.f32.mrf.mxu0
      %v1047 = vadd.f32 0.0, %v1046
      %1048 = vmatprep.mubr.bf16.mxu0 %v271
      %1049 = vmatmul.mubr.bf16.gmra.mxu0 %v270
      %v1050 = vpop.f32.mrf.mxu0
      %v1051 = vadd.f32 0.0, %v1050
      %v1052 = vpop.f32.mrf.mxu0
      %v1053 = vadd.f32 0.0, %v1052
      %v1054 = vpop.f32.mrf.mxu0
      %v1055 = vadd.f32 0.0, %v1054
      %v1056 = vpop.f32.mrf.mxu0
      %v1057 = vadd.f32 0.0, %v1056
      %1058 = vmatprep.mubr.bf16.mxu0 %v273
      %1059 = vmatmul.mubr.bf16.gmra.mxu0 %v272
      %v1060 = vpop.f32.mrf.mxu0
      %v1061 = vadd.f32 0.0, %v1060
      %v1062 = vpop.f32.mrf.mxu0
      %v1063 = vadd.f32 0.0, %v1062
      %v1064 = vpop.f32.mrf.mxu0
      %v1065 = vadd.f32 0.0, %v1064
      %v1066 = vpop.f32.mrf.mxu0
      %v1067 = vadd.f32 0.0, %v1066
      %1068 = vmatprep.mubr.bf16.mxu0 %v275
      %1069 = vmatmul.mubr.bf16.gmra.mxu0 %v274
      %v1070 = vpop.f32.mrf.mxu0
      %v1071 = vadd.f32 0.0, %v1070
      %v1072 = vpop.f32.mrf.mxu0
      %v1073 = vadd.f32 0.0, %v1072
      %v1074 = vpop.f32.mrf.mxu0
      %v1075 = vadd.f32 0.0, %v1074
      %v1076 = vpop.f32.mrf.mxu0
      %v1077 = vadd.f32 0.0, %v1076
      %1078 = vmatprep.mubr.bf16.mxu0 %v277
      %1079 = vmatmul.mubr.bf16.gmra.mxu0 %v276
      %v1080 = vpop.f32.mrf.mxu0
      %v1081 = vadd.f32 0.0, %v1080
      %v1082 = vpop.f32.mrf.mxu0
      %v1083 = vadd.f32 0.0, %v1082
      %v1084 = vpop.f32.mrf.mxu0
      %v1085 = vadd.f32 0.0, %v1084
      %v1086 = vpop.f32.mrf.mxu0
      %v1087 = vadd.f32 0.0, %v1086
      %1088 = vmatprep.mubr.bf16.mxu0 %v279
      %1089 = vmatmul.mubr.bf16.gmra.mxu0 %v278
      %v1090 = vpop.f32.mrf.mxu0
      %v1091 = vadd.f32 0.0, %v1090
      %v1092 = vpop.f32.mrf.mxu0
      %v1093 = vadd.f32 0.0, %v1092
      %v1094 = vpop.f32.mrf.mxu0
      %v1095 = vadd.f32 0.0, %v1094
      %v1096 = vpop.f32.mrf.mxu0
      %v1097 = vadd.f32 0.0, %v1096
      %1098 = vdwg.mxu0
      %v1099 = vmul.f32 %v795, 0.17677669
      %v1100 = vmul.f32 %v797, 0.17677669
      %v1101 = vmul.f32 %v799, 0.17677669
      %v1102 = vmul.f32 %v801, 0.17677669
      %v1103 = vmul.f32 %v805, 0.17677669
      %v1104 = vmul.f32 %v807, 0.17677669
      %v1105 = vmul.f32 %v809, 0.17677669
      %v1106 = vmul.f32 %v811, 0.17677669
      %v1107 = vmul.f32 %v815, 0.17677669
      %v1108 = vmul.f32 %v817, 0.17677669
      %v1109 = vmul.f32 %v819, 0.17677669
      %v1110 = vmul.f32 %v821, 0.17677669
      %v1111 = vmul.f32 %v825, 0.17677669
      %v1112 = vmul.f32 %v827, 0.17677669
      %v1113 = vmul.f32 %v829, 0.17677669
      %v1114 = vmul.f32 %v831, 0.17677669
      %v1115 = vmul.f32 %v835, 0.17677669
      %v1116 = vmul.f32 %v837, 0.17677669
      %v1117 = vmul.f32 %v839, 0.17677669
      %v1118 = vmul.f32 %v841, 0.17677669
      %v1119 = vmul.f32 %v845, 0.17677669
      %v1120 = vmul.f32 %v847, 0.17677669
      %v1121 = vmul.f32 %v849, 0.17677669
      %v1122 = vmul.f32 %v851, 0.17677669
      %v1123 = vmul.f32 %v855, 0.17677669
      %v1124 = vmul.f32 %v857, 0.17677669
      %v1125 = vmul.f32 %v859, 0.17677669
      %v1126 = vmul.f32 %v861, 0.17677669
      %v1127 = vmul.f32 %v865, 0.17677669
      %v1128 = vmul.f32 %v867, 0.17677669
      %v1129 = vmul.f32 %v869, 0.17677669
      %v1130 = vmul.f32 %v871, 0.17677669
      %v1132 = vlaneseq
      %v1133 = vshrl.u32 %v1132, 7
      %v1134 = vsub.s32 0, %v1133
      %v1135 = vrot.slane %v153, %v1134
      %v1136 = vlaneseq
      %v1137 = vshrl.u32 %v1136, 7
      %v1138 = vsub.s32 1, %v1137
      %v1139 = vrot.slane %v153, %v1138
      %v1142 = vadd.f32 %v1021, %v1135
      %v1143 = vadd.f32 %v1023, %v1139
      %v1144 = vadd.f32 %v1025, %v1135
      %v1145 = vadd.f32 %v1027, %v1139
      %v1146 = vadd.f32 %v1031, %v1135
      %v1147 = vadd.f32 %v1033, %v1139
      %v1148 = vadd.f32 %v1035, %v1135
      %v1149 = vadd.f32 %v1037, %v1139
      %v1150 = vadd.f32 %v1041, %v1135
      %v1151 = vadd.f32 %v1043, %v1139
      %v1152 = vadd.f32 %v1045, %v1135
      %v1153 = vadd.f32 %v1047, %v1139
      %v1154 = vadd.f32 %v1051, %v1135
      %v1155 = vadd.f32 %v1053, %v1139
      %v1156 = vadd.f32 %v1055, %v1135
      %v1157 = vadd.f32 %v1057, %v1139
      %v1158 = vadd.f32 %v1061, %v1135
      %v1159 = vadd.f32 %v1063, %v1139
      %v1160 = vadd.f32 %v1065, %v1135
      %v1161 = vadd.f32 %v1067, %v1139
      %v1162 = vadd.f32 %v1071, %v1135
      %v1163 = vadd.f32 %v1073, %v1139
      %v1164 = vadd.f32 %v1075, %v1135
      %v1165 = vadd.f32 %v1077, %v1139
      %v1166 = vadd.f32 %v1081, %v1135
      %v1167 = vadd.f32 %v1083, %v1139
      %v1168 = vadd.f32 %v1085, %v1135
      %v1169 = vadd.f32 %v1087, %v1139
      %v1170 = vadd.f32 %v1091, %v1135
      %v1171 = vadd.f32 %v1093, %v1139
      %v1172 = vadd.f32 %v1095, %v1135
      %v1173 = vadd.f32 %v1097, %v1139
      %v1174 = vxor.u32 %v1142, 2147483648
      %v1175 = vxor.u32 %v1143, 2147483648
      %v1176 = vxor.u32 %v1144, 2147483648
      %v1177 = vxor.u32 %v1145, 2147483648
      %v1178 = vxor.u32 %v1146, 2147483648
      %v1179 = vxor.u32 %v1147, 2147483648
      %v1180 = vxor.u32 %v1148, 2147483648
      %v1181 = vxor.u32 %v1149, 2147483648
      %v1182 = vxor.u32 %v1150, 2147483648
      %v1183 = vxor.u32 %v1151, 2147483648
      %v1184 = vxor.u32 %v1152, 2147483648
      %v1185 = vxor.u32 %v1153, 2147483648
      %v1186 = vxor.u32 %v1154, 2147483648
      %v1187 = vxor.u32 %v1155, 2147483648
      %v1188 = vxor.u32 %v1156, 2147483648
      %v1189 = vxor.u32 %v1157, 2147483648
      %v1190 = vxor.u32 %v1158, 2147483648
      %v1191 = vxor.u32 %v1159, 2147483648
      %v1192 = vxor.u32 %v1160, 2147483648
      %v1193 = vxor.u32 %v1161, 2147483648
      %v1194 = vxor.u32 %v1162, 2147483648
      %v1195 = vxor.u32 %v1163, 2147483648
      %v1196 = vxor.u32 %v1164, 2147483648
      %v1197 = vxor.u32 %v1165, 2147483648
      %v1198 = vxor.u32 %v1166, 2147483648
      %v1199 = vxor.u32 %v1167, 2147483648
      %v1200 = vxor.u32 %v1168, 2147483648
      %v1201 = vxor.u32 %v1169, 2147483648
      %v1202 = vxor.u32 %v1170, 2147483648
      %v1203 = vxor.u32 %v1171, 2147483648
      %v1204 = vxor.u32 %v1172, 2147483648
      %v1205 = vxor.u32 %v1173, 2147483648
      %v1206 = vmul.f32 %v1174, 1.442695
      %v1207 = vpow.pop %v1206
      %v1208 = vmul.f32 %v1175, 1.442695
      %v1209 = vpow.pop %v1208
      %v1210 = vmul.f32 %v1176, 1.442695
      %v1211 = vpow.pop %v1210
      %v1212 = vmul.f32 %v1177, 1.442695
      %v1213 = vpow.pop %v1212
      %v1214 = vmul.f32 %v1178, 1.442695
      %v1215 = vpow.pop %v1214
      %v1216 = vmul.f32 %v1179, 1.442695
      %v1217 = vpow.pop %v1216
      %v1218 = vmul.f32 %v1180, 1.442695
      %v1219 = vpow.pop %v1218
      %v1220 = vmul.f32 %v1181, 1.442695
      %v1221 = vpow.pop %v1220
      %v1222 = vmul.f32 %v1182, 1.442695
      %v1223 = vpow.pop %v1222
      %v1224 = vmul.f32 %v1183, 1.442695
      %v1225 = vpow.pop %v1224
      %v1226 = vmul.f32 %v1184, 1.442695
      %v1227 = vpow.pop %v1226
      %v1228 = vmul.f32 %v1185, 1.442695
      %v1229 = vpow.pop %v1228
      %v1230 = vmul.f32 %v1186, 1.442695
      %v1231 = vpow.pop %v1230
      %v1232 = vmul.f32 %v1187, 1.442695
      %v1233 = vpow.pop %v1232
      %v1234 = vmul.f32 %v1188, 1.442695
      %v1235 = vpow.pop %v1234
      %v1236 = vmul.f32 %v1189, 1.442695
      %v1237 = vpow.pop %v1236
      %v1238 = vmul.f32 %v1190, 1.442695
      %v1239 = vpow.pop %v1238
      %v1240 = vmul.f32 %v1191, 1.442695
      %v1241 = vpow.pop %v1240
      %v1242 = vmul.f32 %v1192, 1.442695
      %v1243 = vpow.pop %v1242
      %v1244 = vmul.f32 %v1193, 1.442695
      %v1245 = vpow.pop %v1244
      %v1246 = vmul.f32 %v1194, 1.442695
      %v1247 = vpow.pop %v1246
      %v1248 = vmul.f32 %v1195, 1.442695
      %v1249 = vpow.pop %v1248
      %v1250 = vmul.f32 %v1196, 1.442695
      %v1251 = vpow.pop %v1250
      %v1252 = vmul.f32 %v1197, 1.442695
      %v1253 = vpow.pop %v1252
      %v1254 = vmul.f32 %v1198, 1.442695
      %v1255 = vpow.pop %v1254
      %v1256 = vmul.f32 %v1199, 1.442695
      %v1257 = vpow.pop %v1256
      %v1258 = vmul.f32 %v1200, 1.442695
      %v1259 = vpow.pop %v1258
      %v1260 = vmul.f32 %v1201, 1.442695
      %v1261 = vpow.pop %v1260
      %v1262 = vmul.f32 %v1202, 1.442695
      %v1263 = vpow.pop %v1262
      %v1264 = vmul.f32 %v1203, 1.442695
      %v1265 = vpow.pop %v1264
      %v1266 = vmul.f32 %v1204, 1.442695
      %v1267 = vpow.pop %v1266
      %v1268 = vmul.f32 %v1205, 1.442695
      %v1269 = vpow.pop %v1268
      %v1270 = vadd.f32 %v1207, 1.0
      %v1271 = vadd.f32 %v1209, 1.0
      %v1272 = vadd.f32 %v1211, 1.0
      %v1273 = vadd.f32 %v1213, 1.0
      %v1274 = vadd.f32 %v1215, 1.0
      %v1275 = vadd.f32 %v1217, 1.0
      %v1276 = vadd.f32 %v1219, 1.0
      %v1277 = vadd.f32 %v1221, 1.0
      %v1278 = vadd.f32 %v1223, 1.0
      %v1279 = vadd.f32 %v1225, 1.0
      %v1280 = vadd.f32 %v1227, 1.0
      %v1281 = vadd.f32 %v1229, 1.0
      %v1282 = vadd.f32 %v1231, 1.0
      %v1283 = vadd.f32 %v1233, 1.0
      %v1284 = vadd.f32 %v1235, 1.0
      %v1285 = vadd.f32 %v1237, 1.0
      %v1286 = vadd.f32 %v1239, 1.0
      %v1287 = vadd.f32 %v1241, 1.0
      %v1288 = vadd.f32 %v1243, 1.0
      %v1289 = vadd.f32 %v1245, 1.0
      %v1290 = vadd.f32 %v1247, 1.0
      %v1291 = vadd.f32 %v1249, 1.0
      %v1292 = vadd.f32 %v1251, 1.0
      %v1293 = vadd.f32 %v1253, 1.0
      %v1294 = vadd.f32 %v1255, 1.0
      %v1295 = vadd.f32 %v1257, 1.0
      %v1296 = vadd.f32 %v1259, 1.0
      %v1297 = vadd.f32 %v1261, 1.0
      %v1298 = vadd.f32 %v1263, 1.0
      %v1299 = vadd.f32 %v1265, 1.0
      %v1300 = vadd.f32 %v1267, 1.0
      %v1301 = vadd.f32 %v1269, 1.0
      %v1302 = vrcp.pop %v1270
      %v1303 = vmul.f32 1.0, %v1302
      %v1304 = vrcp.pop %v1271
      %v1305 = vmul.f32 1.0, %v1304
      %v1306 = vrcp.pop %v1272
      %v1307 = vmul.f32 1.0, %v1306
      %v1308 = vrcp.pop %v1273
      %v1309 = vmul.f32 1.0, %v1308
      %v1310 = vrcp.pop %v1274
      %v1311 = vmul.f32 1.0, %v1310
      %v1312 = vrcp.pop %v1275
      %v1313 = vmul.f32 1.0, %v1312
      %v1314 = vrcp.pop %v1276
      %v1315 = vmul.f32 1.0, %v1314
      %v1316 = vrcp.pop %v1277
      %v1317 = vmul.f32 1.0, %v1316
      %v1318 = vrcp.pop %v1278
      %v1319 = vmul.f32 1.0, %v1318
      %v1320 = vrcp.pop %v1279
      %v1321 = vmul.f32 1.0, %v1320
      %v1322 = vrcp.pop %v1280
      %v1323 = vmul.f32 1.0, %v1322
      %v1324 = vrcp.pop %v1281
      %v1325 = vmul.f32 1.0, %v1324
      %v1326 = vrcp.pop %v1282
      %v1327 = vmul.f32 1.0, %v1326
      %v1328 = vrcp.pop %v1283
      %v1329 = vmul.f32 1.0, %v1328
      %v1330 = vrcp.pop %v1284
      %v1331 = vmul.f32 1.0, %v1330
      %v1332 = vrcp.pop %v1285
      %v1333 = vmul.f32 1.0, %v1332
      %v1334 = vrcp.pop %v1286
      %v1335 = vmul.f32 1.0, %v1334
      %v1336 = vrcp.pop %v1287
      %v1337 = vmul.f32 1.0, %v1336
      %v1338 = vrcp.pop %v1288
      %v1339 = vmul.f32 1.0, %v1338
      %v1340 = vrcp.pop %v1289
      %v1341 = vmul.f32 1.0, %v1340
      %v1342 = vrcp.pop %v1290
      %v1343 = vmul.f32 1.0, %v1342
      %v1344 = vrcp.pop %v1291
      %v1345 = vmul.f32 1.0, %v1344
      %v1346 = vrcp.pop %v1292
      %v1347 = vmul.f32 1.0, %v1346
      %v1348 = vrcp.pop %v1293
      %v1349 = vmul.f32 1.0, %v1348
      %v1350 = vrcp.pop %v1294
      %v1351 = vmul.f32 1.0, %v1350
      %v1352 = vrcp.pop %v1295
      %v1353 = vmul.f32 1.0, %v1352
      %v1354 = vrcp.pop %v1296
      %v1355 = vmul.f32 1.0, %v1354
      %v1356 = vrcp.pop %v1297
      %v1357 = vmul.f32 1.0, %v1356
      %v1358 = vrcp.pop %v1298
      %v1359 = vmul.f32 1.0, %v1358
      %v1360 = vrcp.pop %v1299
      %v1361 = vmul.f32 1.0, %v1360
      %v1362 = vrcp.pop %v1300
      %v1363 = vmul.f32 1.0, %v1362
      %v1364 = vrcp.pop %v1301
      %v1365 = vmul.f32 1.0, %v1364
      %v1366 = vmul.f32 %v1303, %v207
      %v1367 = vmul.f32 %v1305, %v207
      %v1368 = vmul.f32 %v1307, %v208
      %v1369 = vmul.f32 %v1309, %v208
      %v1370 = vmul.f32 %v1311, %v209
      %v1371 = vmul.f32 %v1313, %v209
      %v1372 = vmul.f32 %v1315, %v210
      %v1373 = vmul.f32 %v1317, %v210
      %v1374 = vmul.f32 %v1319, %v211
      %v1375 = vmul.f32 %v1321, %v211
      %v1376 = vmul.f32 %v1323, %v212
      %v1377 = vmul.f32 %v1325, %v212
      %v1378 = vmul.f32 %v1327, %v213
      %v1379 = vmul.f32 %v1329, %v213
      %v1380 = vmul.f32 %v1331, %v214
      %v1381 = vmul.f32 %v1333, %v214
      %v1382 = vmul.f32 %v1335, %v215
      %v1383 = vmul.f32 %v1337, %v215
      %v1384 = vmul.f32 %v1339, %v216
      %v1385 = vmul.f32 %v1341, %v216
      %v1386 = vmul.f32 %v1343, %v217
      %v1387 = vmul.f32 %v1345, %v217
      %v1388 = vmul.f32 %v1347, %v218
      %v1389 = vmul.f32 %v1349, %v218
      %v1390 = vmul.f32 %v1351, %v219
      %v1391 = vmul.f32 %v1353, %v219
      %v1392 = vmul.f32 %v1355, %v220
      %v1393 = vmul.f32 %v1357, %v220
      %v1394 = vmul.f32 %v1359, %v221
      %v1395 = vmul.f32 %v1361, %v221
      %v1396 = vmul.f32 %v1363, %v222
      %v1397 = vmul.f32 %v1365, %v222
      %vm1398 = vcmp.ge.s32.totalorder %v155, 0
      %vm1399 = vcmp.ge.s32.totalorder %v156, 0
      %vm1400 = vcmp.lt.s32.totalorder %v155, 32
      %vm1401 = vcmp.lt.s32.totalorder %v156, 32
      %vm1402 = vmand %vm1398, %vm1400
      %vm1403 = vmand %vm1399, %vm1401
      %v1404 = vsel %vm1402, %v908, 0.0
      %v1405 = vsel %vm1403, %v910, 0.0
      %v1406 = vsel %vm1402, %v912, 0.0
      %v1407 = vsel %vm1403, %v914, 0.0
      %v1408 = vsel %vm1402, %v918, 0.0
      %v1409 = vsel %vm1403, %v920, 0.0
      %v1410 = vsel %vm1402, %v922, 0.0
      %v1411 = vsel %vm1403, %v924, 0.0
      %v1412 = vsel %vm1402, %v928, 0.0
      %v1413 = vsel %vm1403, %v930, 0.0
      %v1414 = vsel %vm1402, %v932, 0.0
      %v1415 = vsel %vm1403, %v934, 0.0
      %v1416 = vsel %vm1402, %v938, 0.0
      %v1417 = vsel %vm1403, %v940, 0.0
      %v1418 = vsel %vm1402, %v942, 0.0
      %v1419 = vsel %vm1403, %v944, 0.0
      %v1420 = vsel %vm1402, %v948, 0.0
      %v1421 = vsel %vm1403, %v950, 0.0
      %v1422 = vsel %vm1402, %v952, 0.0
      %v1423 = vsel %vm1403, %v954, 0.0
      %v1424 = vsel %vm1402, %v958, 0.0
      %v1425 = vsel %vm1403, %v960, 0.0
      %v1426 = vsel %vm1402, %v962, 0.0
      %v1427 = vsel %vm1403, %v964, 0.0
      %v1428 = vsel %vm1402, %v968, 0.0
      %v1429 = vsel %vm1403, %v970, 0.0
      %v1430 = vsel %vm1402, %v972, 0.0
      %v1431 = vsel %vm1403, %v974, 0.0
      %v1432 = vsel %vm1402, %v978, 0.0
      %v1433 = vsel %vm1403, %v980, 0.0
      %v1434 = vsel %vm1402, %v982, 0.0
      %v1435 = vsel %vm1403, %v984, 0.0
      %1436 = vmatprep.subr.mxu0 %v1130
      %1437 = vmatpush1.xpose.msra.mxu0 %v1129
      %1438 = vmatprep.subr.mxu0 %v1128
      %1439 = vmatpush1.xpose.msra.mxu0 %v1127
      %1440 = vmatprep.subr.mxu0 %v1126
      %1441 = vmatpush1.xpose.msra.mxu0 %v1125
      %1442 = vmatprep.subr.mxu0 %v1124
      %1443 = vmatpush1.xpose.msra.mxu0 %v1123
      %1444 = vmatprep.subr.mxu0 %v1122
      %1445 = vmatpush1.xpose.msra.mxu0 %v1121
      %1446 = vmatprep.subr.mxu0 %v1120
      %1447 = vmatpush1.xpose.msra.mxu0 %v1119
      %1448 = vmatprep.subr.mxu0 %v1118
      %1449 = vmatpush1.xpose.msra.mxu0 %v1117
      %1450 = vmatprep.subr.mxu0 %v1116
      %1451 = vmatpush1.xpose.msra.mxu0 %v1115
      %1452 = vmatprep.subr.mxu0 %v1114
      %1453 = vmatpush1.xpose.msra.mxu0 %v1113
      %1454 = vmatprep.subr.mxu0 %v1112
      %1455 = vmatpush1.xpose.msra.mxu0 %v1111
      %1456 = vmatprep.subr.mxu0 %v1110
      %1457 = vmatpush1.xpose.msra.mxu0 %v1109
      %1458 = vmatprep.subr.mxu0 %v1108
      %1459 = vmatpush1.xpose.msra.mxu0 %v1107
      %1460 = vmatprep.subr.mxu0 %v1106
      %1461 = vmatpush1.xpose.msra.mxu0 %v1105
      %1462 = vmatprep.subr.mxu0 %v1104
      %1463 = vmatpush1.xpose.msra.mxu0 %v1103
      %1464 = vmatprep.subr.mxu0 %v1102
      %1465 = vmatpush1.xpose.msra.mxu0 %v1101
      %1466 = vmatprep.subr.mxu0 %v1100
      %1467 = vmatpush1.xpose.msra.mxu0 %v1099
      %1468 = vmatprep.subr.mxu0 0.0
      %1469 = vmatpush2.xpose.msra.mxu0 0.0
      %1470 = vmatprep.subr.mxu0 0.0
      %1471 = vmatpush2.xpose.msra.mxu0 0.0
      %1472 = vmatprep.subr.mxu0 0.0
      %1473 = vmatpush2.xpose.msra.mxu0 0.0
      %1474 = vmatprep.subr.mxu0 0.0
      %1475 = vmatpush2.xpose.msra.mxu0 0.0
      %1476 = vmatprep.subr.mxu0 0.0
      %1477 = vmatpush2.xpose.msra.mxu0 0.0
      %1478 = vmatprep.subr.mxu0 0.0
      %1479 = vmatpush2.xpose.msra.mxu0 0.0
      %1480 = vmatprep.subr.mxu0 0.0
      %1481 = vmatpush2.xpose.msra.mxu0 0.0
      %1482 = vmatprep.subr.mxu0 0.0
      %1483 = vmatpush2.xpose.msra.mxu0 0.0
      %1484 = vmatprep.subr.mxu0 0.0
      %1485 = vmatpush2.xpose.msra.mxu0 0.0
      %1486 = vmatprep.subr.mxu0 0.0
      %1487 = vmatpush2.xpose.msra.mxu0 0.0
      %1488 = vmatprep.subr.mxu0 0.0
      %1489 = vmatpush2.xpose.msra.mxu0 0.0
      %1490 = vmatprep.subr.mxu0 0.0
      %1491 = vmatpush2.xpose.msra.mxu0 0.0
      %1492 = vmatprep.subr.mxu0 0.0
      %1493 = vmatpush2.xpose.msra.mxu0 0.0
      %1494 = vmatprep.subr.mxu0 0.0
      %1495 = vmatpush2.xpose.msra.mxu0 0.0
      %1496 = vmatprep.subr.mxu0 0.0
      %1497 = vmatpush2.xpose.msra.mxu0 0.0
      %1498 = vmatprep.subr.mxu0 0.0
      %1499 = vmatpush2.xpose.msra.mxu0 0.0
      %1500 = vmatprep.mubr.f32.mxu0 %v1405
      %1501 = vmatmul.mubr.f32.gmra.mxu0 %v1404
      %v1502 = vpop.f32.mrf.mxu0
      %v1503 = vadd.f32 0.0, %v1502
      %v1504 = vpop.f32.mrf.mxu0
      %1505 = vmatprep.mubr.f32.mxu0 %v1407
      %1506 = vmatmul.mubr.f32.gmra.mxu0 %v1406
      %v1507 = vpop.f32.mrf.mxu0
      %v1508 = vadd.f32 0.0, %v1507
      %v1509 = vpop.f32.mrf.mxu0
      %1510 = vmatprep.mubr.f32.mxu0 %v1409
      %1511 = vmatmul.mubr.f32.gmra.mxu0 %v1408
      %v1512 = vpop.f32.mrf.mxu0
      %v1513 = vadd.f32 0.0, %v1512
      %v1514 = vpop.f32.mrf.mxu0
      %1515 = vmatprep.mubr.f32.mxu0 %v1411
      %1516 = vmatmul.mubr.f32.gmra.mxu0 %v1410
      %v1517 = vpop.f32.mrf.mxu0
      %v1518 = vadd.f32 0.0, %v1517
      %v1519 = vpop.f32.mrf.mxu0
      %1520 = vmatprep.mubr.f32.mxu0 %v1413
      %1521 = vmatmul.mubr.f32.gmra.mxu0 %v1412
      %v1522 = vpop.f32.mrf.mxu0
      %v1523 = vadd.f32 0.0, %v1522
      %v1524 = vpop.f32.mrf.mxu0
      %1525 = vmatprep.mubr.f32.mxu0 %v1415
      %1526 = vmatmul.mubr.f32.gmra.mxu0 %v1414
      %v1527 = vpop.f32.mrf.mxu0
      %v1528 = vadd.f32 0.0, %v1527
      %v1529 = vpop.f32.mrf.mxu0
      %1530 = vmatprep.mubr.f32.mxu0 %v1417
      %1531 = vmatmul.mubr.f32.gmra.mxu0 %v1416
      %v1532 = vpop.f32.mrf.mxu0
      %v1533 = vadd.f32 0.0, %v1532
      %v1534 = vpop.f32.mrf.mxu0
      %1535 = vmatprep.mubr.f32.mxu0 %v1419
      %1536 = vmatmul.mubr.f32.gmra.mxu0 %v1418
      %v1537 = vpop.f32.mrf.mxu0
      %v1538 = vadd.f32 0.0, %v1537
      %v1539 = vpop.f32.mrf.mxu0
      %1540 = vmatprep.mubr.f32.mxu0 %v1421
      %1541 = vmatmul.mubr.f32.gmra.mxu0 %v1420
      %v1542 = vpop.f32.mrf.mxu0
      %v1543 = vadd.f32 0.0, %v1542
      %v1544 = vpop.f32.mrf.mxu0
      %1545 = vmatprep.mubr.f32.mxu0 %v1423
      %1546 = vmatmul.mubr.f32.gmra.mxu0 %v1422
      %v1547 = vpop.f32.mrf.mxu0
      %v1548 = vadd.f32 0.0, %v1547
      %v1549 = vpop.f32.mrf.mxu0
      %1550 = vmatprep.mubr.f32.mxu0 %v1425
      %1551 = vmatmul.mubr.f32.gmra.mxu0 %v1424
      %v1552 = vpop.f32.mrf.mxu0
      %v1553 = vadd.f32 0.0, %v1552
      %v1554 = vpop.f32.mrf.mxu0
      %1555 = vmatprep.mubr.f32.mxu0 %v1427
      %1556 = vmatmul.mubr.f32.gmra.mxu0 %v1426
      %v1557 = vpop.f32.mrf.mxu0
      %v1558 = vadd.f32 0.0, %v1557
      %v1559 = vpop.f32.mrf.mxu0
      %1560 = vmatprep.mubr.f32.mxu0 %v1429
      %1561 = vmatmul.mubr.f32.gmra.mxu0 %v1428
      %v1562 = vpop.f32.mrf.mxu0
      %v1563 = vadd.f32 0.0, %v1562
      %v1564 = vpop.f32.mrf.mxu0
      %1565 = vmatprep.mubr.f32.mxu0 %v1431
      %1566 = vmatmul.mubr.f32.gmra.mxu0 %v1430
      %v1567 = vpop.f32.mrf.mxu0
      %v1568 = vadd.f32 0.0, %v1567
      %v1569 = vpop.f32.mrf.mxu0
      %1570 = vmatprep.mubr.f32.mxu0 %v1433
      %1571 = vmatmul.mubr.f32.gmra.mxu0 %v1432
      %v1572 = vpop.f32.mrf.mxu0
      %v1573 = vadd.f32 0.0, %v1572
      %v1574 = vpop.f32.mrf.mxu0
      %1575 = vmatprep.mubr.f32.mxu0 %v1435
      %1576 = vmatmul.mubr.f32.gmra.mxu0 %v1434
      %v1577 = vpop.f32.mrf.mxu0
      %v1578 = vadd.f32 0.0, %v1577
      %v1579 = vpop.f32.mrf.mxu0
      %1580 = vdwg.mxu0
      %v1581 = vsel %vm157, %v1503, -1e+30
      %v1582 = vsel %vm157, %v1508, -1e+30
      %v1583 = vsel %vm157, %v1513, -1e+30
      %v1584 = vsel %vm157, %v1518, -1e+30
      %v1585 = vsel %vm157, %v1523, -1e+30
      %v1586 = vsel %vm157, %v1528, -1e+30
      %v1587 = vsel %vm157, %v1533, -1e+30
      %v1588 = vsel %vm157, %v1538, -1e+30
      %v1589 = vsel %vm157, %v1543, -1e+30
      %v1590 = vsel %vm157, %v1548, -1e+30
      %v1591 = vsel %vm157, %v1553, -1e+30
      %v1592 = vsel %vm157, %v1558, -1e+30
      %v1593 = vsel %vm157, %v1563, -1e+30
      %v1594 = vsel %vm157, %v1568, -1e+30
      %v1595 = vsel %vm157, %v1573, -1e+30
      %v1596 = vsel %vm157, %v1578, -1e+30
      %1597 = vmax.xlane.f32.xlu0 %v1581
      %v1598 = vpop.xlane.xlu0 %1597
      %1599 = vmax.xlane.f32.xlu0 %v1582
      %v1600 = vpop.xlane.xlu0 %1599
      %1601 = vmax.xlane.f32.xlu0 %v1583
      %v1602 = vpop.xlane.xlu0 %1601
      %1603 = vmax.xlane.f32.xlu0 %v1584
      %v1604 = vpop.xlane.xlu0 %1603
      %1605 = vmax.xlane.f32.xlu0 %v1585
      %v1606 = vpop.xlane.xlu0 %1605
      %1607 = vmax.xlane.f32.xlu0 %v1586
      %v1608 = vpop.xlane.xlu0 %1607
      %1609 = vmax.xlane.f32.xlu0 %v1587
      %v1610 = vpop.xlane.xlu0 %1609
      %1611 = vmax.xlane.f32.xlu0 %v1588
      %v1612 = vpop.xlane.xlu0 %1611
      %1613 = vmax.xlane.f32.xlu0 %v1589
      %v1614 = vpop.xlane.xlu0 %1613
      %1615 = vmax.xlane.f32.xlu0 %v1590
      %v1616 = vpop.xlane.xlu0 %1615
      %1617 = vmax.xlane.f32.xlu0 %v1591
      %v1618 = vpop.xlane.xlu0 %1617
      %1619 = vmax.xlane.f32.xlu0 %v1592
      %v1620 = vpop.xlane.xlu0 %1619
      %1621 = vmax.xlane.f32.xlu0 %v1593
      %v1622 = vpop.xlane.xlu0 %1621
      %1623 = vmax.xlane.f32.xlu0 %v1594
      %v1624 = vpop.xlane.xlu0 %1623
      %1625 = vmax.xlane.f32.xlu0 %v1595
      %v1626 = vpop.xlane.xlu0 %1625
      %1627 = vmax.xlane.f32.xlu0 %v1596
      %v1628 = vpop.xlane.xlu0 %1627
      %v1629 = vsub.f32 %v1581, %v1598
      %v1630 = vsub.f32 %v1582, %v1600
      %v1631 = vsub.f32 %v1583, %v1602
      %v1632 = vsub.f32 %v1584, %v1604
      %v1633 = vsub.f32 %v1585, %v1606
      %v1634 = vsub.f32 %v1586, %v1608
      %v1635 = vsub.f32 %v1587, %v1610
      %v1636 = vsub.f32 %v1588, %v1612
      %v1637 = vsub.f32 %v1589, %v1614
      %v1638 = vsub.f32 %v1590, %v1616
      %v1639 = vsub.f32 %v1591, %v1618
      %v1640 = vsub.f32 %v1592, %v1620
      %v1641 = vsub.f32 %v1593, %v1622
      %v1642 = vsub.f32 %v1594, %v1624
      %v1643 = vsub.f32 %v1595, %v1626
      %v1644 = vsub.f32 %v1596, %v1628
      %v1645 = vmul.f32 %v1629, 1.442695
      %v1646 = vpow.pop %v1645
      %v1647 = vmul.f32 %v1630, 1.442695
      %v1648 = vpow.pop %v1647
      %v1649 = vmul.f32 %v1631, 1.442695
      %v1650 = vpow.pop %v1649
      %v1651 = vmul.f32 %v1632, 1.442695
      %v1652 = vpow.pop %v1651
      %v1653 = vmul.f32 %v1633, 1.442695
      %v1654 = vpow.pop %v1653
      %v1655 = vmul.f32 %v1634, 1.442695
      %v1656 = vpow.pop %v1655
      %v1657 = vmul.f32 %v1635, 1.442695
      %v1658 = vpow.pop %v1657
      %v1659 = vmul.f32 %v1636, 1.442695
      %v1660 = vpow.pop %v1659
      %v1661 = vmul.f32 %v1637, 1.442695
      %v1662 = vpow.pop %v1661
      %v1663 = vmul.f32 %v1638, 1.442695
      %v1664 = vpow.pop %v1663
      %v1665 = vmul.f32 %v1639, 1.442695
      %v1666 = vpow.pop %v1665
      %v1667 = vmul.f32 %v1640, 1.442695
      %v1668 = vpow.pop %v1667
      %v1669 = vmul.f32 %v1641, 1.442695
      %v1670 = vpow.pop %v1669
      %v1671 = vmul.f32 %v1642, 1.442695
      %v1672 = vpow.pop %v1671
      %v1673 = vmul.f32 %v1643, 1.442695
      %v1674 = vpow.pop %v1673
      %v1675 = vmul.f32 %v1644, 1.442695
      %v1676 = vpow.pop %v1675
      %1677 = vadd.xlane.f32.xlu0 %v1646
      %v1678 = vpop.xlane.xlu0 %1677
      %1679 = vadd.xlane.f32.xlu0 %v1648
      %v1680 = vpop.xlane.xlu0 %1679
      %1681 = vadd.xlane.f32.xlu0 %v1650
      %v1682 = vpop.xlane.xlu0 %1681
      %1683 = vadd.xlane.f32.xlu0 %v1652
      %v1684 = vpop.xlane.xlu0 %1683
      %1685 = vadd.xlane.f32.xlu0 %v1654
      %v1686 = vpop.xlane.xlu0 %1685
      %1687 = vadd.xlane.f32.xlu0 %v1656
      %v1688 = vpop.xlane.xlu0 %1687
      %1689 = vadd.xlane.f32.xlu0 %v1658
      %v1690 = vpop.xlane.xlu0 %1689
      %1691 = vadd.xlane.f32.xlu0 %v1660
      %v1692 = vpop.xlane.xlu0 %1691
      %1693 = vadd.xlane.f32.xlu0 %v1662
      %v1694 = vpop.xlane.xlu0 %1693
      %1695 = vadd.xlane.f32.xlu0 %v1664
      %v1696 = vpop.xlane.xlu0 %1695
      %1697 = vadd.xlane.f32.xlu0 %v1666
      %v1698 = vpop.xlane.xlu0 %1697
      %1699 = vadd.xlane.f32.xlu0 %v1668
      %v1700 = vpop.xlane.xlu0 %1699
      %1701 = vadd.xlane.f32.xlu0 %v1670
      %v1702 = vpop.xlane.xlu0 %1701
      %1703 = vadd.xlane.f32.xlu0 %v1672
      %v1704 = vpop.xlane.xlu0 %1703
      %1705 = vadd.xlane.f32.xlu0 %v1674
      %v1706 = vpop.xlane.xlu0 %1705
      %1707 = vadd.xlane.f32.xlu0 %v1676
      %v1708 = vpop.xlane.xlu0 %1707
      %v1709 = vrcp.pop %v1678
      %v1710 = vrcp.pop %v1680
      %v1711 = vrcp.pop %v1682
      %v1712 = vrcp.pop %v1684
      %v1713 = vrcp.pop %v1686
      %v1714 = vrcp.pop %v1688
      %v1715 = vrcp.pop %v1690
      %v1716 = vrcp.pop %v1692
      %v1717 = vrcp.pop %v1694
      %v1718 = vrcp.pop %v1696
      %v1719 = vrcp.pop %v1698
      %v1720 = vrcp.pop %v1700
      %v1721 = vrcp.pop %v1702
      %v1722 = vrcp.pop %v1704
      %v1723 = vrcp.pop %v1706
      %v1724 = vrcp.pop %v1708
      %v1725 = vmul.f32 %v1646, %v1709
      %v1726 = vmul.f32 %v1648, %v1710
      %v1727 = vmul.f32 %v1650, %v1711
      %v1728 = vmul.f32 %v1652, %v1712
      %v1729 = vmul.f32 %v1654, %v1713
      %v1730 = vmul.f32 %v1656, %v1714
      %v1731 = vmul.f32 %v1658, %v1715
      %v1732 = vmul.f32 %v1660, %v1716
      %v1733 = vmul.f32 %v1662, %v1717
      %v1734 = vmul.f32 %v1664, %v1718
      %v1735 = vmul.f32 %v1666, %v1719
      %v1736 = vmul.f32 %v1668, %v1720
      %v1737 = vmul.f32 %v1670, %v1721
      %v1738 = vmul.f32 %v1672, %v1722
      %v1739 = vmul.f32 %v1674, %v1723
      %v1740 = vmul.f32 %v1676, %v1724
      %s1741 = smul.u32 %s224, 1024
      %s1742 = scalar_lea.vmem [#allocation9], %s1741
      %1743 = vst [vmem:[%s1742] sm:$0xff] %v1725
      %1744 = vst [vmem:[%s1742 + $0x8] sm:$0xff] %v1726
      %1745 = vst [vmem:[%s1742 + $0x10] sm:$0xff] %v1727
      %1746 = vst [vmem:[%s1742 + $0x18] sm:$0xff] %v1728
      %1747 = vst [vmem:[%s1742 + $0x20] sm:$0xff] %v1729
      %1748 = vst [vmem:[%s1742 + $0x28] sm:$0xff] %v1730
      %1749 = vst [vmem:[%s1742 + $0x30] sm:$0xff] %v1731
      %1750 = vst [vmem:[%s1742 + $0x38] sm:$0xff] %v1732
      %1751 = vst [vmem:[%s1742 + $0x40] sm:$0xff] %v1733
      %1752 = vst [vmem:[%s1742 + $0x48] sm:$0xff] %v1734
      %1753 = vst [vmem:[%s1742 + $0x50] sm:$0xff] %v1735
      %1754 = vst [vmem:[%s1742 + $0x58] sm:$0xff] %v1736
      %1755 = vst [vmem:[%s1742 + $0x60] sm:$0xff] %v1737
      %1756 = vst [vmem:[%s1742 + $0x68] sm:$0xff] %v1738
      %1757 = vst [vmem:[%s1742 + $0x70] sm:$0xff] %v1739
      %1758 = vst [vmem:[%s1742 + $0x78] sm:$0xff] %v1740
      %1759 = vmatprep.subr.mxu0 %v984
      %1760 = vmatpush1.msra.mxu0 %v982
      %1761 = vmatprep.subr.mxu0 %v980
      %1762 = vmatpush1.msra.mxu0 %v978
      %1763 = vmatprep.subr.mxu0 %v974
      %1764 = vmatpush1.msra.mxu0 %v972
      %1765 = vmatprep.subr.mxu0 %v970
      %1766 = vmatpush1.msra.mxu0 %v968
      %1767 = vmatprep.subr.mxu0 %v964
      %1768 = vmatpush1.msra.mxu0 %v962
      %1769 = vmatprep.subr.mxu0 %v960
      %1770 = vmatpush1.msra.mxu0 %v958
      %1771 = vmatprep.subr.mxu0 %v954
      %1772 = vmatpush1.msra.mxu0 %v952
      %1773 = vmatprep.subr.mxu0 %v950
      %1774 = vmatpush1.msra.mxu0 %v948
      %1775 = vmatprep.subr.mxu0 %v944
      %1776 = vmatpush1.msra.mxu0 %v942
      %1777 = vmatprep.subr.mxu0 %v940
      %1778 = vmatpush1.msra.mxu0 %v938
      %1779 = vmatprep.subr.mxu0 %v934
      %1780 = vmatpush1.msra.mxu0 %v932
      %1781 = vmatprep.subr.mxu0 %v930
      %1782 = vmatpush1.msra.mxu0 %v928
      %1783 = vmatprep.subr.mxu0 %v924
      %1784 = vmatpush1.msra.mxu0 %v922
      %1785 = vmatprep.subr.mxu0 %v920
      %1786 = vmatpush1.msra.mxu0 %v918
      %1787 = vmatprep.subr.mxu0 %v914
      %1788 = vmatpush1.msra.mxu0 %v912
      %1789 = vmatprep.subr.mxu0 %v910
      %1790 = vmatpush1.msra.mxu0 %v908
      %1791 = vmatprep.subr.mxu0 0.0
      %1792 = vmatpush2.msra.mxu0 0.0
      %1793 = vmatprep.subr.mxu0 0.0
      %1794 = vmatpush2.msra.mxu0 0.0
      %1795 = vmatprep.subr.mxu0 0.0
      %1796 = vmatpush2.msra.mxu0 0.0
      %1797 = vmatprep.subr.mxu0 0.0
      %1798 = vmatpush2.msra.mxu0 0.0
      %1799 = vmatprep.subr.mxu0 0.0
      %1800 = vmatpush2.msra.mxu0 0.0
      %1801 = vmatprep.subr.mxu0 0.0
      %1802 = vmatpush2.msra.mxu0 0.0
      %1803 = vmatprep.subr.mxu0 0.0
      %1804 = vmatpush2.msra.mxu0 0.0
      %1805 = vmatprep.subr.mxu0 0.0
      %1806 = vmatpush2.msra.mxu0 0.0
      %1807 = vmatprep.subr.mxu0 0.0
      %1808 = vmatpush2.msra.mxu0 0.0
      %1809 = vmatprep.subr.mxu0 0.0
      %1810 = vmatpush2.msra.mxu0 0.0
      %1811 = vmatprep.subr.mxu0 0.0
      %1812 = vmatpush2.msra.mxu0 0.0
      %1813 = vmatprep.subr.mxu0 0.0
      %1814 = vmatpush2.msra.mxu0 0.0
      %1815 = vmatprep.subr.mxu0 0.0
      %1816 = vmatpush2.msra.mxu0 0.0
      %1817 = vmatprep.subr.mxu0 0.0
      %1818 = vmatpush2.msra.mxu0 0.0
      %1819 = vmatprep.subr.mxu0 0.0
      %1820 = vmatpush2.msra.mxu0 0.0
      %1821 = vmatprep.subr.mxu0 0.0
      %1822 = vmatpush2.msra.mxu0 0.0
      %1823 = vmatprep.mubr.f32.mxu0 0.0
      %1824 = vmatmul.mubr.f32.gmra.mxu0 %v1725
      %v1825 = vpop.f32.mrf.mxu0
      %v1826 = vadd.f32 0.0, %v1825
      %v1827 = vpop.f32.mrf.mxu0
      %v1828 = vadd.f32 0.0, %v1827
      %1829 = vmatprep.mubr.f32.mxu0 0.0
      %1830 = vmatmul.mubr.f32.gmra.mxu0 %v1726
      %v1831 = vpop.f32.mrf.mxu0
      %v1832 = vadd.f32 0.0, %v1831
      %v1833 = vpop.f32.mrf.mxu0
      %v1834 = vadd.f32 0.0, %v1833
      %1835 = vmatprep.mubr.f32.mxu0 0.0
      %1836 = vmatmul.mubr.f32.gmra.mxu0 %v1727
      %v1837 = vpop.f32.mrf.mxu0
      %v1838 = vadd.f32 0.0, %v1837
      %v1839 = vpop.f32.mrf.mxu0
      %v1840 = vadd.f32 0.0, %v1839
      %1841 = vmatprep.mubr.f32.mxu0 0.0
      %1842 = vmatmul.mubr.f32.gmra.mxu0 %v1728
      %v1843 = vpop.f32.mrf.mxu0
      %v1844 = vadd.f32 0.0, %v1843
      %v1845 = vpop.f32.mrf.mxu0
      %v1846 = vadd.f32 0.0, %v1845
      %1847 = vmatprep.mubr.f32.mxu0 0.0
      %1848 = vmatmul.mubr.f32.gmra.mxu0 %v1729
      %v1849 = vpop.f32.mrf.mxu0
      %v1850 = vadd.f32 0.0, %v1849
      %v1851 = vpop.f32.mrf.mxu0
      %v1852 = vadd.f32 0.0, %v1851
      %1853 = vmatprep.mubr.f32.mxu0 0.0
      %1854 = vmatmul.mubr.f32.gmra.mxu0 %v1730
      %v1855 = vpop.f32.mrf.mxu0
      %v1856 = vadd.f32 0.0, %v1855
      %v1857 = vpop.f32.mrf.mxu0
      %v1858 = vadd.f32 0.0, %v1857
      %1859 = vmatprep.mubr.f32.mxu0 0.0
      %1860 = vmatmul.mubr.f32.gmra.mxu0 %v1731
      %v1861 = vpop.f32.mrf.mxu0
      %v1862 = vadd.f32 0.0, %v1861
      %v1863 = vpop.f32.mrf.mxu0
      %v1864 = vadd.f32 0.0, %v1863
      %1865 = vmatprep.mubr.f32.mxu0 0.0
      %1866 = vmatmul.mubr.f32.gmra.mxu0 %v1732
      %v1867 = vpop.f32.mrf.mxu0
      %v1868 = vadd.f32 0.0, %v1867
      %v1869 = vpop.f32.mrf.mxu0
      %v1870 = vadd.f32 0.0, %v1869
      %1871 = vmatprep.mubr.f32.mxu0 0.0
      %1872 = vmatmul.mubr.f32.gmra.mxu0 %v1733
      %v1873 = vpop.f32.mrf.mxu0
      %v1874 = vadd.f32 0.0, %v1873
      %v1875 = vpop.f32.mrf.mxu0
      %v1876 = vadd.f32 0.0, %v1875
      %1877 = vmatprep.mubr.f32.mxu0 0.0
      %1878 = vmatmul.mubr.f32.gmra.mxu0 %v1734
      %v1879 = vpop.f32.mrf.mxu0
      %v1880 = vadd.f32 0.0, %v1879
      %v1881 = vpop.f32.mrf.mxu0
      %v1882 = vadd.f32 0.0, %v1881
      %1883 = vmatprep.mubr.f32.mxu0 0.0
      %1884 = vmatmul.mubr.f32.gmra.mxu0 %v1735
      %v1885 = vpop.f32.mrf.mxu0
      %v1886 = vadd.f32 0.0, %v1885
      %v1887 = vpop.f32.mrf.mxu0
      %v1888 = vadd.f32 0.0, %v1887
      %1889 = vmatprep.mubr.f32.mxu0 0.0
      %1890 = vmatmul.mubr.f32.gmra.mxu0 %v1736
      %v1891 = vpop.f32.mrf.mxu0
      %v1892 = vadd.f32 0.0, %v1891
      %v1893 = vpop.f32.mrf.mxu0
      %v1894 = vadd.f32 0.0, %v1893
      %1895 = vmatprep.mubr.f32.mxu0 0.0
      %1896 = vmatmul.mubr.f32.gmra.mxu0 %v1737
      %v1897 = vpop.f32.mrf.mxu0
      %v1898 = vadd.f32 0.0, %v1897
      %v1899 = vpop.f32.mrf.mxu0
      %v1900 = vadd.f32 0.0, %v1899
      %1901 = vmatprep.mubr.f32.mxu0 0.0
      %1902 = vmatmul.mubr.f32.gmra.mxu0 %v1738
      %v1903 = vpop.f32.mrf.mxu0
      %v1904 = vadd.f32 0.0, %v1903
      %v1905 = vpop.f32.mrf.mxu0
      %v1906 = vadd.f32 0.0, %v1905
      %1907 = vmatprep.mubr.f32.mxu0 0.0
      %1908 = vmatmul.mubr.f32.gmra.mxu0 %v1739
      %v1909 = vpop.f32.mrf.mxu0
      %v1910 = vadd.f32 0.0, %v1909
      %v1911 = vpop.f32.mrf.mxu0
      %v1912 = vadd.f32 0.0, %v1911
      %1913 = vmatprep.mubr.f32.mxu0 0.0
      %1914 = vmatmul.mubr.f32.gmra.mxu0 %v1740
      %v1915 = vpop.f32.mrf.mxu0
      %v1916 = vadd.f32 0.0, %v1915
      %v1917 = vpop.f32.mrf.mxu0
      %v1918 = vadd.f32 0.0, %v1917
      %1919 = vdwg.mxu0
      %v1920 = vsel %vm1402, %v1826, 0.0
      %v1921 = vsel %vm1403, %v1828, 0.0
      %v1922 = vsel %vm1402, %v1832, 0.0
      %v1923 = vsel %vm1403, %v1834, 0.0
      %v1924 = vsel %vm1402, %v1838, 0.0
      %v1925 = vsel %vm1403, %v1840, 0.0
      %v1926 = vsel %vm1402, %v1844, 0.0
      %v1927 = vsel %vm1403, %v1846, 0.0
      %v1928 = vsel %vm1402, %v1850, 0.0
      %v1929 = vsel %vm1403, %v1852, 0.0
      %v1930 = vsel %vm1402, %v1856, 0.0
      %v1931 = vsel %vm1403, %v1858, 0.0
      %v1932 = vsel %vm1402, %v1862, 0.0
      %v1933 = vsel %vm1403, %v1864, 0.0
      %v1934 = vsel %vm1402, %v1868, 0.0
      %v1935 = vsel %vm1403, %v1870, 0.0
      %v1936 = vsel %vm1402, %v1874, 0.0
      %v1937 = vsel %vm1403, %v1876, 0.0
      %v1938 = vsel %vm1402, %v1880, 0.0
      %v1939 = vsel %vm1403, %v1882, 0.0
      %v1940 = vsel %vm1402, %v1886, 0.0
      %v1941 = vsel %vm1403, %v1888, 0.0
      %v1942 = vsel %vm1402, %v1892, 0.0
      %v1943 = vsel %vm1403, %v1894, 0.0
      %v1944 = vsel %vm1402, %v1898, 0.0
      %v1945 = vsel %vm1403, %v1900, 0.0
      %v1946 = vsel %vm1402, %v1904, 0.0
      %v1947 = vsel %vm1403, %v1906, 0.0
      %v1948 = vsel %vm1402, %v1910, 0.0
      %v1949 = vsel %vm1403, %v1912, 0.0
      %v1950 = vsel %vm1402, %v1916, 0.0
      %v1951 = vsel %vm1403, %v1918, 0.0
      %vm1952 = vcmp.ge.s32.totalorder %v155, 32
      %vm1953 = vcmp.ge.s32.totalorder %v156, 32
      %vm1954 = vcmp.lt.s32.totalorder %v155, 64
      %vm1955 = vcmp.lt.s32.totalorder %v156, 64
      %vm1956 = vmand %vm1952, %vm1954
      %vm1957 = vmand %vm1953, %vm1955
      %v1958 = vsel %vm1956, %v908, 0.0
      %v1959 = vsel %vm1957, %v910, 0.0
      %v1960 = vsel %vm1956, %v912, 0.0
      %v1961 = vsel %vm1957, %v914, 0.0
      %v1962 = vsel %vm1956, %v918, 0.0
      %v1963 = vsel %vm1957, %v920, 0.0
      %v1964 = vsel %vm1956, %v922, 0.0
      %v1965 = vsel %vm1957, %v924, 0.0
      %v1966 = vsel %vm1956, %v928, 0.0
      %v1967 = vsel %vm1957, %v930, 0.0
      %v1968 = vsel %vm1956, %v932, 0.0
      %v1969 = vsel %vm1957, %v934, 0.0
      %v1970 = vsel %vm1956, %v938, 0.0
      %v1971 = vsel %vm1957, %v940, 0.0
      %v1972 = vsel %vm1956, %v942, 0.0
      %v1973 = vsel %vm1957, %v944, 0.0
      %v1974 = vsel %vm1956, %v948, 0.0
      %v1975 = vsel %vm1957, %v950, 0.0
      %v1976 = vsel %vm1956, %v952, 0.0
      %v1977 = vsel %vm1957, %v954, 0.0
      %v1978 = vsel %vm1956, %v958, 0.0
      %v1979 = vsel %vm1957, %v960, 0.0
      %v1980 = vsel %vm1956, %v962, 0.0
      %v1981 = vsel %vm1957, %v964, 0.0
      %v1982 = vsel %vm1956, %v968, 0.0
      %v1983 = vsel %vm1957, %v970, 0.0
      %v1984 = vsel %vm1956, %v972, 0.0
      %v1985 = vsel %vm1957, %v974, 0.0
      %v1986 = vsel %vm1956, %v978, 0.0
      %v1987 = vsel %vm1957, %v980, 0.0
      %v1988 = vsel %vm1956, %v982, 0.0
      %v1989 = vsel %vm1957, %v984, 0.0
      %1990 = vmatprep.subr.mxu0 %v1130
      %1991 = vmatpush1.xpose.msra.mxu0 %v1129
      %1992 = vmatprep.subr.mxu0 %v1128
      %1993 = vmatpush1.xpose.msra.mxu0 %v1127
      %1994 = vmatprep.subr.mxu0 %v1126
      %1995 = vmatpush1.xpose.msra.mxu0 %v1125
      %1996 = vmatprep.subr.mxu0 %v1124
      %1997 = vmatpush1.xpose.msra.mxu0 %v1123
      %1998 = vmatprep.subr.mxu0 %v1122
      %1999 = vmatpush1.xpose.msra.mxu0 %v1121
      %2000 = vmatprep.subr.mxu0 %v1120
      %2001 = vmatpush1.xpose.msra.mxu0 %v1119
      %2002 = vmatprep.subr.mxu0 %v1118
      %2003 = vmatpush1.xpose.msra.mxu0 %v1117
      %2004 = vmatprep.subr.mxu0 %v1116
      %2005 = vmatpush1.xpose.msra.mxu0 %v1115
      %2006 = vmatprep.subr.mxu0 %v1114
      %2007 = vmatpush1.xpose.msra.mxu0 %v1113
      %2008 = vmatprep.subr.mxu0 %v1112
      %2009 = vmatpush1.xpose.msra.mxu0 %v1111
      %2010 = vmatprep.subr.mxu0 %v1110
      %2011 = vmatpush1.xpose.msra.mxu0 %v1109
      %2012 = vmatprep.subr.mxu0 %v1108
      %2013 = vmatpush1.xpose.msra.mxu0 %v1107
      %2014 = vmatprep.subr.mxu0 %v1106
      %2015 = vmatpush1.xpose.msra.mxu0 %v1105
      %2016 = vmatprep.subr.mxu0 %v1104
      %2017 = vmatpush1.xpose.msra.mxu0 %v1103
      %2018 = vmatprep.subr.mxu0 %v1102
      %2019 = vmatpush1.xpose.msra.mxu0 %v1101
      %2020 = vmatprep.subr.mxu0 %v1100
      %2021 = vmatpush1.xpose.msra.mxu0 %v1099
      %2022 = vmatprep.subr.mxu0 0.0
      %2023 = vmatpush2.xpose.msra.mxu0 0.0
      %2024 = vmatprep.subr.mxu0 0.0
      %2025 = vmatpush2.xpose.msra.mxu0 0.0
      %2026 = vmatprep.subr.mxu0 0.0
      %2027 = vmatpush2.xpose.msra.mxu0 0.0
      %2028 = vmatprep.subr.mxu0 0.0
      %2029 = vmatpush2.xpose.msra.mxu0 0.0
      %2030 = vmatprep.subr.mxu0 0.0
      %2031 = vmatpush2.xpose.msra.mxu0 0.0
      %2032 = vmatprep.subr.mxu0 0.0
      %2033 = vmatpush2.xpose.msra.mxu0 0.0
      %2034 = vmatprep.subr.mxu0 0.0
      %2035 = vmatpush2.xpose.msra.mxu0 0.0
      %2036 = vmatprep.subr.mxu0 0.0
      %2037 = vmatpush2.xpose.msra.mxu0 0.0
      %2038 = vmatprep.subr.mxu0 0.0
      %2039 = vmatpush2.xpose.msra.mxu0 0.0
      %2040 = vmatprep.subr.mxu0 0.0
      %2041 = vmatpush2.xpose.msra.mxu0 0.0
      %2042 = vmatprep.subr.mxu0 0.0
      %2043 = vmatpush2.xpose.msra.mxu0 0.0
      %2044 = vmatprep.subr.mxu0 0.0
      %2045 = vmatpush2.xpose.msra.mxu0 0.0
      %2046 = vmatprep.subr.mxu0 0.0
      %2047 = vmatpush2.xpose.msra.mxu0 0.0
      %2048 = vmatprep.subr.mxu0 0.0
      %2049 = vmatpush2.xpose.msra.mxu0 0.0
      %2050 = vmatprep.subr.mxu0 0.0
      %2051 = vmatpush2.xpose.msra.mxu0 0.0
      %2052 = vmatprep.subr.mxu0 0.0
      %2053 = vmatpush2.xpose.msra.mxu0 0.0
      %2054 = vmatprep.mubr.f32.mxu0 %v1959
      %2055 = vmatmul.mubr.f32.gmra.mxu0 %v1958
      %v2056 = vpop.f32.mrf.mxu0
      %v2057 = vadd.f32 0.0, %v2056
      %v2058 = vpop.f32.mrf.mxu0
      %2059 = vmatprep.mubr.f32.mxu0 %v1961
      %2060 = vmatmul.mubr.f32.gmra.mxu0 %v1960
      %v2061 = vpop.f32.mrf.mxu0
      %v2062 = vadd.f32 0.0, %v2061
      %v2063 = vpop.f32.mrf.mxu0
      %2064 = vmatprep.mubr.f32.mxu0 %v1963
      %2065 = vmatmul.mubr.f32.gmra.mxu0 %v1962
      %v2066 = vpop.f32.mrf.mxu0
      %v2067 = vadd.f32 0.0, %v2066
      %v2068 = vpop.f32.mrf.mxu0
      %2069 = vmatprep.mubr.f32.mxu0 %v1965
      %2070 = vmatmul.mubr.f32.gmra.mxu0 %v1964
      %v2071 = vpop.f32.mrf.mxu0
      %v2072 = vadd.f32 0.0, %v2071
      %v2073 = vpop.f32.mrf.mxu0
      %2074 = vmatprep.mubr.f32.mxu0 %v1967
      %2075 = vmatmul.mubr.f32.gmra.mxu0 %v1966
      %v2076 = vpop.f32.mrf.mxu0
      %v2077 = vadd.f32 0.0, %v2076
      %v2078 = vpop.f32.mrf.mxu0
      %2079 = vmatprep.mubr.f32.mxu0 %v1969
      %2080 = vmatmul.mubr.f32.gmra.mxu0 %v1968
      %v2081 = vpop.f32.mrf.mxu0
      %v2082 = vadd.f32 0.0, %v2081
      %v2083 = vpop.f32.mrf.mxu0
      %2084 = vmatprep.mubr.f32.mxu0 %v1971
      %2085 = vmatmul.mubr.f32.gmra.mxu0 %v1970
      %v2086 = vpop.f32.mrf.mxu0
      %v2087 = vadd.f32 0.0, %v2086
      %v2088 = vpop.f32.mrf.mxu0
      %2089 = vmatprep.mubr.f32.mxu0 %v1973
      %2090 = vmatmul.mubr.f32.gmra.mxu0 %v1972
      %v2091 = vpop.f32.mrf.mxu0
      %v2092 = vadd.f32 0.0, %v2091
      %v2093 = vpop.f32.mrf.mxu0
      %2094 = vmatprep.mubr.f32.mxu0 %v1975
      %2095 = vmatmul.mubr.f32.gmra.mxu0 %v1974
      %v2096 = vpop.f32.mrf.mxu0
      %v2097 = vadd.f32 0.0, %v2096
      %v2098 = vpop.f32.mrf.mxu0
      %2099 = vmatprep.mubr.f32.mxu0 %v1977
      %2100 = vmatmul.mubr.f32.gmra.mxu0 %v1976
      %v2101 = vpop.f32.mrf.mxu0
      %v2102 = vadd.f32 0.0, %v2101
      %v2103 = vpop.f32.mrf.mxu0
      %2104 = vmatprep.mubr.f32.mxu0 %v1979
      %2105 = vmatmul.mubr.f32.gmra.mxu0 %v1978
      %v2106 = vpop.f32.mrf.mxu0
      %v2107 = vadd.f32 0.0, %v2106
      %v2108 = vpop.f32.mrf.mxu0
      %2109 = vmatprep.mubr.f32.mxu0 %v1981
      %2110 = vmatmul.mubr.f32.gmra.mxu0 %v1980
      %v2111 = vpop.f32.mrf.mxu0
      %v2112 = vadd.f32 0.0, %v2111
      %v2113 = vpop.f32.mrf.mxu0
      %2114 = vmatprep.mubr.f32.mxu0 %v1983
      %2115 = vmatmul.mubr.f32.gmra.mxu0 %v1982
      %v2116 = vpop.f32.mrf.mxu0
      %v2117 = vadd.f32 0.0, %v2116
      %v2118 = vpop.f32.mrf.mxu0
      %2119 = vmatprep.mubr.f32.mxu0 %v1985
      %2120 = vmatmul.mubr.f32.gmra.mxu0 %v1984
      %v2121 = vpop.f32.mrf.mxu0
      %v2122 = vadd.f32 0.0, %v2121
      %v2123 = vpop.f32.mrf.mxu0
      %2124 = vmatprep.mubr.f32.mxu0 %v1987
      %2125 = vmatmul.mubr.f32.gmra.mxu0 %v1986
      %v2126 = vpop.f32.mrf.mxu0
      %v2127 = vadd.f32 0.0, %v2126
      %v2128 = vpop.f32.mrf.mxu0
      %2129 = vmatprep.mubr.f32.mxu0 %v1989
      %2130 = vmatmul.mubr.f32.gmra.mxu0 %v1988
      %v2131 = vpop.f32.mrf.mxu0
      %v2132 = vadd.f32 0.0, %v2131
      %v2133 = vpop.f32.mrf.mxu0
      %2134 = vdwg.mxu0
      %v2135 = vsel %vm157, %v2057, -1e+30
      %v2136 = vsel %vm157, %v2062, -1e+30
      %v2137 = vsel %vm157, %v2067, -1e+30
      %v2138 = vsel %vm157, %v2072, -1e+30
      %v2139 = vsel %vm157, %v2077, -1e+30
      %v2140 = vsel %vm157, %v2082, -1e+30
      %v2141 = vsel %vm157, %v2087, -1e+30
      %v2142 = vsel %vm157, %v2092, -1e+30
      %v2143 = vsel %vm157, %v2097, -1e+30
      %v2144 = vsel %vm157, %v2102, -1e+30
      %v2145 = vsel %vm157, %v2107, -1e+30
      %v2146 = vsel %vm157, %v2112, -1e+30
      %v2147 = vsel %vm157, %v2117, -1e+30
      %v2148 = vsel %vm157, %v2122, -1e+30
      %v2149 = vsel %vm157, %v2127, -1e+30
      %v2150 = vsel %vm157, %v2132, -1e+30
      %2151 = vmax.xlane.f32.xlu0 %v2135
      %v2152 = vpop.xlane.xlu0 %2151
      %2153 = vmax.xlane.f32.xlu0 %v2136
      %v2154 = vpop.xlane.xlu0 %2153
      %2155 = vmax.xlane.f32.xlu0 %v2137
      %v2156 = vpop.xlane.xlu0 %2155
      %2157 = vmax.xlane.f32.xlu0 %v2138
      %v2158 = vpop.xlane.xlu0 %2157
      %2159 = vmax.xlane.f32.xlu0 %v2139
      %v2160 = vpop.xlane.xlu0 %2159
      %2161 = vmax.xlane.f32.xlu0 %v2140
      %v2162 = vpop.xlane.xlu0 %2161
      %2163 = vmax.xlane.f32.xlu0 %v2141
      %v2164 = vpop.xlane.xlu0 %2163
      %2165 = vmax.xlane.f32.xlu0 %v2142
      %v2166 = vpop.xlane.xlu0 %2165
      %2167 = vmax.xlane.f32.xlu0 %v2143
      %v2168 = vpop.xlane.xlu0 %2167
      %2169 = vmax.xlane.f32.xlu0 %v2144
      %v2170 = vpop.xlane.xlu0 %2169
      %2171 = vmax.xlane.f32.xlu0 %v2145
      %v2172 = vpop.xlane.xlu0 %2171
      %2173 = vmax.xlane.f32.xlu0 %v2146
      %v2174 = vpop.xlane.xlu0 %2173
      %2175 = vmax.xlane.f32.xlu0 %v2147
      %v2176 = vpop.xlane.xlu0 %2175
      %2177 = vmax.xlane.f32.xlu0 %v2148
      %v2178 = vpop.xlane.xlu0 %2177
      %2179 = vmax.xlane.f32.xlu0 %v2149
      %v2180 = vpop.xlane.xlu0 %2179
      %2181 = vmax.xlane.f32.xlu0 %v2150
      %v2182 = vpop.xlane.xlu0 %2181
      %v2183 = vsub.f32 %v2135, %v2152
      %v2184 = vsub.f32 %v2136, %v2154
      %v2185 = vsub.f32 %v2137, %v2156
      %v2186 = vsub.f32 %v2138, %v2158
      %v2187 = vsub.f32 %v2139, %v2160
      %v2188 = vsub.f32 %v2140, %v2162
      %v2189 = vsub.f32 %v2141, %v2164
      %v2190 = vsub.f32 %v2142, %v2166
      %v2191 = vsub.f32 %v2143, %v2168
      %v2192 = vsub.f32 %v2144, %v2170
      %v2193 = vsub.f32 %v2145, %v2172
      %v2194 = vsub.f32 %v2146, %v2174
      %v2195 = vsub.f32 %v2147, %v2176
      %v2196 = vsub.f32 %v2148, %v2178
      %v2197 = vsub.f32 %v2149, %v2180
      %v2198 = vsub.f32 %v2150, %v2182
      %v2199 = vmul.f32 %v2183, 1.442695
      %v2200 = vpow.pop %v2199
      %v2201 = vmul.f32 %v2184, 1.442695
      %v2202 = vpow.pop %v2201
      %v2203 = vmul.f32 %v2185, 1.442695
      %v2204 = vpow.pop %v2203
      %v2205 = vmul.f32 %v2186, 1.442695
      %v2206 = vpow.pop %v2205
      %v2207 = vmul.f32 %v2187, 1.442695
      %v2208 = vpow.pop %v2207
      %v2209 = vmul.f32 %v2188, 1.442695
      %v2210 = vpow.pop %v2209
      %v2211 = vmul.f32 %v2189, 1.442695
      %v2212 = vpow.pop %v2211
      %v2213 = vmul.f32 %v2190, 1.442695
      %v2214 = vpow.pop %v2213
      %v2215 = vmul.f32 %v2191, 1.442695
      %v2216 = vpow.pop %v2215
      %v2217 = vmul.f32 %v2192, 1.442695
      %v2218 = vpow.pop %v2217
      %v2219 = vmul.f32 %v2193, 1.442695
      %v2220 = vpow.pop %v2219
      %v2221 = vmul.f32 %v2194, 1.442695
      %v2222 = vpow.pop %v2221
      %v2223 = vmul.f32 %v2195, 1.442695
      %v2224 = vpow.pop %v2223
      %v2225 = vmul.f32 %v2196, 1.442695
      %v2226 = vpow.pop %v2225
      %v2227 = vmul.f32 %v2197, 1.442695
      %v2228 = vpow.pop %v2227
      %v2229 = vmul.f32 %v2198, 1.442695
      %v2230 = vpow.pop %v2229
      %2231 = vadd.xlane.f32.xlu0 %v2200
      %v2232 = vpop.xlane.xlu0 %2231
      %2233 = vadd.xlane.f32.xlu0 %v2202
      %v2234 = vpop.xlane.xlu0 %2233
      %2235 = vadd.xlane.f32.xlu0 %v2204
      %v2236 = vpop.xlane.xlu0 %2235
      %2237 = vadd.xlane.f32.xlu0 %v2206
      %v2238 = vpop.xlane.xlu0 %2237
      %2239 = vadd.xlane.f32.xlu0 %v2208
      %v2240 = vpop.xlane.xlu0 %2239
      %2241 = vadd.xlane.f32.xlu0 %v2210
      %v2242 = vpop.xlane.xlu0 %2241
      %2243 = vadd.xlane.f32.xlu0 %v2212
      %v2244 = vpop.xlane.xlu0 %2243
      %2245 = vadd.xlane.f32.xlu0 %v2214
      %v2246 = vpop.xlane.xlu0 %2245
      %2247 = vadd.xlane.f32.xlu0 %v2216
      %v2248 = vpop.xlane.xlu0 %2247
      %2249 = vadd.xlane.f32.xlu0 %v2218
      %v2250 = vpop.xlane.xlu0 %2249
      %2251 = vadd.xlane.f32.xlu0 %v2220
      %v2252 = vpop.xlane.xlu0 %2251
      %2253 = vadd.xlane.f32.xlu0 %v2222
      %v2254 = vpop.xlane.xlu0 %2253
      %2255 = vadd.xlane.f32.xlu0 %v2224
      %v2256 = vpop.xlane.xlu0 %2255
      %2257 = vadd.xlane.f32.xlu0 %v2226
      %v2258 = vpop.xlane.xlu0 %2257
      %2259 = vadd.xlane.f32.xlu0 %v2228
      %v2260 = vpop.xlane.xlu0 %2259
      %2261 = vadd.xlane.f32.xlu0 %v2230
      %v2262 = vpop.xlane.xlu0 %2261
      %v2263 = vrcp.pop %v2232
      %v2264 = vrcp.pop %v2234
      %v2265 = vrcp.pop %v2236
      %v2266 = vrcp.pop %v2238
      %v2267 = vrcp.pop %v2240
      %v2268 = vrcp.pop %v2242
      %v2269 = vrcp.pop %v2244
      %v2270 = vrcp.pop %v2246
      %v2271 = vrcp.pop %v2248
      %v2272 = vrcp.pop %v2250
      %v2273 = vrcp.pop %v2252
      %v2274 = vrcp.pop %v2254
      %v2275 = vrcp.pop %v2256
      %v2276 = vrcp.pop %v2258
      %v2277 = vrcp.pop %v2260
      %v2278 = vrcp.pop %v2262
      %v2279 = vmul.f32 %v2200, %v2263
      %v2280 = vmul.f32 %v2202, %v2264
      %v2281 = vmul.f32 %v2204, %v2265
      %v2282 = vmul.f32 %v2206, %v2266
      %v2283 = vmul.f32 %v2208, %v2267
      %v2284 = vmul.f32 %v2210, %v2268
      %v2285 = vmul.f32 %v2212, %v2269
      %v2286 = vmul.f32 %v2214, %v2270
      %v2287 = vmul.f32 %v2216, %v2271
      %v2288 = vmul.f32 %v2218, %v2272
      %v2289 = vmul.f32 %v2220, %v2273
      %v2290 = vmul.f32 %v2222, %v2274
      %v2291 = vmul.f32 %v2224, %v2275
      %v2292 = vmul.f32 %v2226, %v2276
      %v2293 = vmul.f32 %v2228, %v2277
      %v2294 = vmul.f32 %v2230, %v2278
      %s2295 = sadd.s32 128, %s1741
      %s2296 = scalar_lea.vmem [#allocation9], %s2295
      %2297 = vst [vmem:[%s2296] sm:$0xff] %v2279
      %2298 = vst [vmem:[%s2296 + $0x8] sm:$0xff] %v2280
      %2299 = vst [vmem:[%s2296 + $0x10] sm:$0xff] %v2281
      %2300 = vst [vmem:[%s2296 + $0x18] sm:$0xff] %v2282
      %2301 = vst [vmem:[%s2296 + $0x20] sm:$0xff] %v2283
      %2302 = vst [vmem:[%s2296 + $0x28] sm:$0xff] %v2284
      %2303 = vst [vmem:[%s2296 + $0x30] sm:$0xff] %v2285
      %2304 = vst [vmem:[%s2296 + $0x38] sm:$0xff] %v2286
      %2305 = vst [vmem:[%s2296 + $0x40] sm:$0xff] %v2287
      %2306 = vst [vmem:[%s2296 + $0x48] sm:$0xff] %v2288
      %2307 = vst [vmem:[%s2296 + $0x50] sm:$0xff] %v2289
      %2308 = vst [vmem:[%s2296 + $0x58] sm:$0xff] %v2290
      %2309 = vst [vmem:[%s2296 + $0x60] sm:$0xff] %v2291
      %2310 = vst [vmem:[%s2296 + $0x68] sm:$0xff] %v2292
      %2311 = vst [vmem:[%s2296 + $0x70] sm:$0xff] %v2293
      %2312 = vst [vmem:[%s2296 + $0x78] sm:$0xff] %v2294
      %2313 = vmatprep.subr.mxu0 %v984
      %2314 = vmatpush1.msra.mxu0 %v982
      %2315 = vmatprep.subr.mxu0 %v980
      %2316 = vmatpush1.msra.mxu0 %v978
      %2317 = vmatprep.subr.mxu0 %v974
      %2318 = vmatpush1.msra.mxu0 %v972
      %2319 = vmatprep.subr.mxu0 %v970
      %2320 = vmatpush1.msra.mxu0 %v968
      %2321 = vmatprep.subr.mxu0 %v964
      %2322 = vmatpush1.msra.mxu0 %v962
      %2323 = vmatprep.subr.mxu0 %v960
      %2324 = vmatpush1.msra.mxu0 %v958
      %2325 = vmatprep.subr.mxu0 %v954
      %2326 = vmatpush1.msra.mxu0 %v952
      %2327 = vmatprep.subr.mxu0 %v950
      %2328 = vmatpush1.msra.mxu0 %v948
      %2329 = vmatprep.subr.mxu0 %v944
      %2330 = vmatpush1.msra.mxu0 %v942
      %2331 = vmatprep.subr.mxu0 %v940
      %2332 = vmatpush1.msra.mxu0 %v938
      %2333 = vmatprep.subr.mxu0 %v934
      %2334 = vmatpush1.msra.mxu0 %v932
      %2335 = vmatprep.subr.mxu0 %v930
      %2336 = vmatpush1.msra.mxu0 %v928
      %2337 = vmatprep.subr.mxu0 %v924
      %2338 = vmatpush1.msra.mxu0 %v922
      %2339 = vmatprep.subr.mxu0 %v920
      %2340 = vmatpush1.msra.mxu0 %v918
      %2341 = vmatprep.subr.mxu0 %v914
      %2342 = vmatpush1.msra.mxu0 %v912
      %2343 = vmatprep.subr.mxu0 %v910
      %2344 = vmatpush1.msra.mxu0 %v908
      %2345 = vmatprep.subr.mxu0 0.0
      %2346 = vmatpush2.msra.mxu0 0.0
      %2347 = vmatprep.subr.mxu0 0.0
      %2348 = vmatpush2.msra.mxu0 0.0
      %2349 = vmatprep.subr.mxu0 0.0
      %2350 = vmatpush2.msra.mxu0 0.0
      %2351 = vmatprep.subr.mxu0 0.0
      %2352 = vmatpush2.msra.mxu0 0.0
      %2353 = vmatprep.subr.mxu0 0.0
      %2354 = vmatpush2.msra.mxu0 0.0
      %2355 = vmatprep.subr.mxu0 0.0
      %2356 = vmatpush2.msra.mxu0 0.0
      %2357 = vmatprep.subr.mxu0 0.0
      %2358 = vmatpush2.msra.mxu0 0.0
      %2359 = vmatprep.subr.mxu0 0.0
      %2360 = vmatpush2.msra.mxu0 0.0
      %2361 = vmatprep.subr.mxu0 0.0
      %2362 = vmatpush2.msra.mxu0 0.0
      %2363 = vmatprep.subr.mxu0 0.0
      %2364 = vmatpush2.msra.mxu0 0.0
      %2365 = vmatprep.subr.mxu0 0.0
      %2366 = vmatpush2.msra.mxu0 0.0
      %2367 = vmatprep.subr.mxu0 0.0
      %2368 = vmatpush2.msra.mxu0 0.0
      %2369 = vmatprep.subr.mxu0 0.0
      %2370 = vmatpush2.msra.mxu0 0.0
      %2371 = vmatprep.subr.mxu0 0.0
      %2372 = vmatpush2.msra.mxu0 0.0
      %2373 = vmatprep.subr.mxu0 0.0
      %2374 = vmatpush2.msra.mxu0 0.0
      %2375 = vmatprep.subr.mxu0 0.0
      %2376 = vmatpush2.msra.mxu0 0.0
      %2377 = vmatprep.mubr.f32.mxu0 0.0
      %2378 = vmatmul.mubr.f32.gmra.mxu0 %v2279
      %v2379 = vpop.f32.mrf.mxu0
      %v2380 = vadd.f32 0.0, %v2379
      %v2381 = vpop.f32.mrf.mxu0
      %v2382 = vadd.f32 0.0, %v2381
      %2383 = vmatprep.mubr.f32.mxu0 0.0
      %2384 = vmatmul.mubr.f32.gmra.mxu0 %v2280
      %v2385 = vpop.f32.mrf.mxu0
      %v2386 = vadd.f32 0.0, %v2385
      %v2387 = vpop.f32.mrf.mxu0
      %v2388 = vadd.f32 0.0, %v2387
      %2389 = vmatprep.mubr.f32.mxu0 0.0
      %2390 = vmatmul.mubr.f32.gmra.mxu0 %v2281
      %v2391 = vpop.f32.mrf.mxu0
      %v2392 = vadd.f32 0.0, %v2391
      %v2393 = vpop.f32.mrf.mxu0
      %v2394 = vadd.f32 0.0, %v2393
      %2395 = vmatprep.mubr.f32.mxu0 0.0
      %2396 = vmatmul.mubr.f32.gmra.mxu0 %v2282
      %v2397 = vpop.f32.mrf.mxu0
      %v2398 = vadd.f32 0.0, %v2397
      %v2399 = vpop.f32.mrf.mxu0
      %v2400 = vadd.f32 0.0, %v2399
      %2401 = vmatprep.mubr.f32.mxu0 0.0
      %2402 = vmatmul.mubr.f32.gmra.mxu0 %v2283
      %v2403 = vpop.f32.mrf.mxu0
      %v2404 = vadd.f32 0.0, %v2403
      %v2405 = vpop.f32.mrf.mxu0
      %v2406 = vadd.f32 0.0, %v2405
      %2407 = vmatprep.mubr.f32.mxu0 0.0
      %2408 = vmatmul.mubr.f32.gmra.mxu0 %v2284
      %v2409 = vpop.f32.mrf.mxu0
      %v2410 = vadd.f32 0.0, %v2409
      %v2411 = vpop.f32.mrf.mxu0
      %v2412 = vadd.f32 0.0, %v2411
      %2413 = vmatprep.mubr.f32.mxu0 0.0
      %2414 = vmatmul.mubr.f32.gmra.mxu0 %v2285
      %v2415 = vpop.f32.mrf.mxu0
      %v2416 = vadd.f32 0.0, %v2415
      %v2417 = vpop.f32.mrf.mxu0
      %v2418 = vadd.f32 0.0, %v2417
      %2419 = vmatprep.mubr.f32.mxu0 0.0
      %2420 = vmatmul.mubr.f32.gmra.mxu0 %v2286
      %v2421 = vpop.f32.mrf.mxu0
      %v2422 = vadd.f32 0.0, %v2421
      %v2423 = vpop.f32.mrf.mxu0
      %v2424 = vadd.f32 0.0, %v2423
      %2425 = vmatprep.mubr.f32.mxu0 0.0
      %2426 = vmatmul.mubr.f32.gmra.mxu0 %v2287
      %v2427 = vpop.f32.mrf.mxu0
      %v2428 = vadd.f32 0.0, %v2427
      %v2429 = vpop.f32.mrf.mxu0
      %v2430 = vadd.f32 0.0, %v2429
      %2431 = vmatprep.mubr.f32.mxu0 0.0
      %2432 = vmatmul.mubr.f32.gmra.mxu0 %v2288
      %v2433 = vpop.f32.mrf.mxu0
      %v2434 = vadd.f32 0.0, %v2433
      %v2435 = vpop.f32.mrf.mxu0
      %v2436 = vadd.f32 0.0, %v2435
      %2437 = vmatprep.mubr.f32.mxu0 0.0
      %2438 = vmatmul.mubr.f32.gmra.mxu0 %v2289
      %v2439 = vpop.f32.mrf.mxu0
      %v2440 = vadd.f32 0.0, %v2439
      %v2441 = vpop.f32.mrf.mxu0
      %v2442 = vadd.f32 0.0, %v2441
      %2443 = vmatprep.mubr.f32.mxu0 0.0
      %2444 = vmatmul.mubr.f32.gmra.mxu0 %v2290
      %v2445 = vpop.f32.mrf.mxu0
      %v2446 = vadd.f32 0.0, %v2445
      %v2447 = vpop.f32.mrf.mxu0
      %v2448 = vadd.f32 0.0, %v2447
      %2449 = vmatprep.mubr.f32.mxu0 0.0
      %2450 = vmatmul.mubr.f32.gmra.mxu0 %v2291
      %v2451 = vpop.f32.mrf.mxu0
      %v2452 = vadd.f32 0.0, %v2451
      %v2453 = vpop.f32.mrf.mxu0
      %v2454 = vadd.f32 0.0, %v2453
      %2455 = vmatprep.mubr.f32.mxu0 0.0
      %2456 = vmatmul.mubr.f32.gmra.mxu0 %v2292
      %v2457 = vpop.f32.mrf.mxu0
      %v2458 = vadd.f32 0.0, %v2457
      %v2459 = vpop.f32.mrf.mxu0
      %v2460 = vadd.f32 0.0, %v2459
      %2461 = vmatprep.mubr.f32.mxu0 0.0
      %2462 = vmatmul.mubr.f32.gmra.mxu0 %v2293
      %v2463 = vpop.f32.mrf.mxu0
      %v2464 = vadd.f32 0.0, %v2463
      %v2465 = vpop.f32.mrf.mxu0
      %v2466 = vadd.f32 0.0, %v2465
      %2467 = vmatprep.mubr.f32.mxu0 0.0
      %2468 = vmatmul.mubr.f32.gmra.mxu0 %v2294
      %v2469 = vpop.f32.mrf.mxu0
      %v2470 = vadd.f32 0.0, %v2469
      %v2471 = vpop.f32.mrf.mxu0
      %v2472 = vadd.f32 0.0, %v2471
      %2473 = vdwg.mxu0
      %v2474 = vsel %vm1956, %v2380, %v1920
      %v2475 = vsel %vm1957, %v2382, %v1921
      %v2476 = vsel %vm1956, %v2386, %v1922
      %v2477 = vsel %vm1957, %v2388, %v1923
      %v2478 = vsel %vm1956, %v2392, %v1924
      %v2479 = vsel %vm1957, %v2394, %v1925
      %v2480 = vsel %vm1956, %v2398, %v1926
      %v2481 = vsel %vm1957, %v2400, %v1927
      %v2482 = vsel %vm1956, %v2404, %v1928
      %v2483 = vsel %vm1957, %v2406, %v1929
      %v2484 = vsel %vm1956, %v2410, %v1930
      %v2485 = vsel %vm1957, %v2412, %v1931
      %v2486 = vsel %vm1956, %v2416, %v1932
      %v2487 = vsel %vm1957, %v2418, %v1933
      %v2488 = vsel %vm1956, %v2422, %v1934
      %v2489 = vsel %vm1957, %v2424, %v1935
      %v2490 = vsel %vm1956, %v2428, %v1936
      %v2491 = vsel %vm1957, %v2430, %v1937
      %v2492 = vsel %vm1956, %v2434, %v1938
      %v2493 = vsel %vm1957, %v2436, %v1939
      %v2494 = vsel %vm1956, %v2440, %v1940
      %v2495 = vsel %vm1957, %v2442, %v1941
      %v2496 = vsel %vm1956, %v2446, %v1942
      %v2497 = vsel %vm1957, %v2448, %v1943
      %v2498 = vsel %vm1956, %v2452, %v1944
      %v2499 = vsel %vm1957, %v2454, %v1945
      %v2500 = vsel %vm1956, %v2458, %v1946
      %v2501 = vsel %vm1957, %v2460, %v1947
      %v2502 = vsel %vm1956, %v2464, %v1948
      %v2503 = vsel %vm1957, %v2466, %v1949
      %v2504 = vsel %vm1956, %v2470, %v1950
      %v2505 = vsel %vm1957, %v2472, %v1951
      %vm2506 = vcmp.ge.s32.totalorder %v155, 64
      %vm2507 = vcmp.ge.s32.totalorder %v156, 64
      %vm2508 = vcmp.lt.s32.totalorder %v155, 96
      %vm2509 = vcmp.lt.s32.totalorder %v156, 96
      %vm2510 = vmand %vm2506, %vm2508
      %vm2511 = vmand %vm2507, %vm2509
      %v2512 = vsel %vm2510, %v908, 0.0
      %v2513 = vsel %vm2511, %v910, 0.0
      %v2514 = vsel %vm2510, %v912, 0.0
      %v2515 = vsel %vm2511, %v914, 0.0
      %v2516 = vsel %vm2510, %v918, 0.0
      %v2517 = vsel %vm2511, %v920, 0.0
      %v2518 = vsel %vm2510, %v922, 0.0
      %v2519 = vsel %vm2511, %v924, 0.0
      %v2520 = vsel %vm2510, %v928, 0.0
      %v2521 = vsel %vm2511, %v930, 0.0
      %v2522 = vsel %vm2510, %v932, 0.0
      %v2523 = vsel %vm2511, %v934, 0.0
      %v2524 = vsel %vm2510, %v938, 0.0
      %v2525 = vsel %vm2511, %v940, 0.0
      %v2526 = vsel %vm2510, %v942, 0.0
      %v2527 = vsel %vm2511, %v944, 0.0
      %v2528 = vsel %vm2510, %v948, 0.0
      %v2529 = vsel %vm2511, %v950, 0.0
      %v2530 = vsel %vm2510, %v952, 0.0
      %v2531 = vsel %vm2511, %v954, 0.0
      %v2532 = vsel %vm2510, %v958, 0.0
      %v2533 = vsel %vm2511, %v960, 0.0
      %v2534 = vsel %vm2510, %v962, 0.0
      %v2535 = vsel %vm2511, %v964, 0.0
      %v2536 = vsel %vm2510, %v968, 0.0
      %v2537 = vsel %vm2511, %v970, 0.0
      %v2538 = vsel %vm2510, %v972, 0.0
      %v2539 = vsel %vm2511, %v974, 0.0
      %v2540 = vsel %vm2510, %v978, 0.0
      %v2541 = vsel %vm2511, %v980, 0.0
      %v2542 = vsel %vm2510, %v982, 0.0
      %v2543 = vsel %vm2511, %v984, 0.0
      %2544 = vmatprep.subr.mxu0 %v1130
      %2545 = vmatpush1.xpose.msra.mxu0 %v1129
      %2546 = vmatprep.subr.mxu0 %v1128
      %2547 = vmatpush1.xpose.msra.mxu0 %v1127
      %2548 = vmatprep.subr.mxu0 %v1126
      %2549 = vmatpush1.xpose.msra.mxu0 %v1125
      %2550 = vmatprep.subr.mxu0 %v1124
      %2551 = vmatpush1.xpose.msra.mxu0 %v1123
      %2552 = vmatprep.subr.mxu0 %v1122
      %2553 = vmatpush1.xpose.msra.mxu0 %v1121
      %2554 = vmatprep.subr.mxu0 %v1120
      %2555 = vmatpush1.xpose.msra.mxu0 %v1119
      %2556 = vmatprep.subr.mxu0 %v1118
      %2557 = vmatpush1.xpose.msra.mxu0 %v1117
      %2558 = vmatprep.subr.mxu0 %v1116
      %2559 = vmatpush1.xpose.msra.mxu0 %v1115
      %2560 = vmatprep.subr.mxu0 %v1114
      %2561 = vmatpush1.xpose.msra.mxu0 %v1113
      %2562 = vmatprep.subr.mxu0 %v1112
      %2563 = vmatpush1.xpose.msra.mxu0 %v1111
      %2564 = vmatprep.subr.mxu0 %v1110
      %2565 = vmatpush1.xpose.msra.mxu0 %v1109
      %2566 = vmatprep.subr.mxu0 %v1108
      %2567 = vmatpush1.xpose.msra.mxu0 %v1107
      %2568 = vmatprep.subr.mxu0 %v1106
      %2569 = vmatpush1.xpose.msra.mxu0 %v1105
      %2570 = vmatprep.subr.mxu0 %v1104
      %2571 = vmatpush1.xpose.msra.mxu0 %v1103
      %2572 = vmatprep.subr.mxu0 %v1102
      %2573 = vmatpush1.xpose.msra.mxu0 %v1101
      %2574 = vmatprep.subr.mxu0 %v1100
      %2575 = vmatpush1.xpose.msra.mxu0 %v1099
      %2576 = vmatprep.subr.mxu0 0.0
      %2577 = vmatpush2.xpose.msra.mxu0 0.0
      %2578 = vmatprep.subr.mxu0 0.0
      %2579 = vmatpush2.xpose.msra.mxu0 0.0
      %2580 = vmatprep.subr.mxu0 0.0
      %2581 = vmatpush2.xpose.msra.mxu0 0.0
      %2582 = vmatprep.subr.mxu0 0.0
      %2583 = vmatpush2.xpose.msra.mxu0 0.0
      %2584 = vmatprep.subr.mxu0 0.0
      %2585 = vmatpush2.xpose.msra.mxu0 0.0
      %2586 = vmatprep.subr.mxu0 0.0
      %2587 = vmatpush2.xpose.msra.mxu0 0.0
      %2588 = vmatprep.subr.mxu0 0.0
      %2589 = vmatpush2.xpose.msra.mxu0 0.0
      %2590 = vmatprep.subr.mxu0 0.0
      %2591 = vmatpush2.xpose.msra.mxu0 0.0
      %2592 = vmatprep.subr.mxu0 0.0
      %2593 = vmatpush2.xpose.msra.mxu0 0.0
      %2594 = vmatprep.subr.mxu0 0.0
      %2595 = vmatpush2.xpose.msra.mxu0 0.0
      %2596 = vmatprep.subr.mxu0 0.0
      %2597 = vmatpush2.xpose.msra.mxu0 0.0
      %2598 = vmatprep.subr.mxu0 0.0
      %2599 = vmatpush2.xpose.msra.mxu0 0.0
      %2600 = vmatprep.subr.mxu0 0.0
      %2601 = vmatpush2.xpose.msra.mxu0 0.0
      %2602 = vmatprep.subr.mxu0 0.0
      %2603 = vmatpush2.xpose.msra.mxu0 0.0
      %2604 = vmatprep.subr.mxu0 0.0
      %2605 = vmatpush2.xpose.msra.mxu0 0.0
      %2606 = vmatprep.subr.mxu0 0.0
      %2607 = vmatpush2.xpose.msra.mxu0 0.0
      %2608 = vmatprep.mubr.f32.mxu0 %v2513
      %2609 = vmatmul.mubr.f32.gmra.mxu0 %v2512
      %v2610 = vpop.f32.mrf.mxu0
      %v2611 = vadd.f32 0.0, %v2610
      %v2612 = vpop.f32.mrf.mxu0
      %2613 = vmatprep.mubr.f32.mxu0 %v2515
      %2614 = vmatmul.mubr.f32.gmra.mxu0 %v2514
      %v2615 = vpop.f32.mrf.mxu0
      %v2616 = vadd.f32 0.0, %v2615
      %v2617 = vpop.f32.mrf.mxu0
      %2618 = vmatprep.mubr.f32.mxu0 %v2517
      %2619 = vmatmul.mubr.f32.gmra.mxu0 %v2516
      %v2620 = vpop.f32.mrf.mxu0
      %v2621 = vadd.f32 0.0, %v2620
      %v2622 = vpop.f32.mrf.mxu0
      %2623 = vmatprep.mubr.f32.mxu0 %v2519
      %2624 = vmatmul.mubr.f32.gmra.mxu0 %v2518
      %v2625 = vpop.f32.mrf.mxu0
      %v2626 = vadd.f32 0.0, %v2625
      %v2627 = vpop.f32.mrf.mxu0
      %2628 = vmatprep.mubr.f32.mxu0 %v2521
      %2629 = vmatmul.mubr.f32.gmra.mxu0 %v2520
      %v2630 = vpop.f32.mrf.mxu0
      %v2631 = vadd.f32 0.0, %v2630
      %v2632 = vpop.f32.mrf.mxu0
      %2633 = vmatprep.mubr.f32.mxu0 %v2523
      %2634 = vmatmul.mubr.f32.gmra.mxu0 %v2522
      %v2635 = vpop.f32.mrf.mxu0
      %v2636 = vadd.f32 0.0, %v2635
      %v2637 = vpop.f32.mrf.mxu0
      %2638 = vmatprep.mubr.f32.mxu0 %v2525
      %2639 = vmatmul.mubr.f32.gmra.mxu0 %v2524
      %v2640 = vpop.f32.mrf.mxu0
      %v2641 = vadd.f32 0.0, %v2640
      %v2642 = vpop.f32.mrf.mxu0
      %2643 = vmatprep.mubr.f32.mxu0 %v2527
      %2644 = vmatmul.mubr.f32.gmra.mxu0 %v2526
      %v2645 = vpop.f32.mrf.mxu0
      %v2646 = vadd.f32 0.0, %v2645
      %v2647 = vpop.f32.mrf.mxu0
      %2648 = vmatprep.mubr.f32.mxu0 %v2529
      %2649 = vmatmul.mubr.f32.gmra.mxu0 %v2528
      %v2650 = vpop.f32.mrf.mxu0
      %v2651 = vadd.f32 0.0, %v2650
      %v2652 = vpop.f32.mrf.mxu0
      %2653 = vmatprep.mubr.f32.mxu0 %v2531
      %2654 = vmatmul.mubr.f32.gmra.mxu0 %v2530
      %v2655 = vpop.f32.mrf.mxu0
      %v2656 = vadd.f32 0.0, %v2655
      %v2657 = vpop.f32.mrf.mxu0
      %2658 = vmatprep.mubr.f32.mxu0 %v2533
      %2659 = vmatmul.mubr.f32.gmra.mxu0 %v2532
      %v2660 = vpop.f32.mrf.mxu0
      %v2661 = vadd.f32 0.0, %v2660
      %v2662 = vpop.f32.mrf.mxu0
      %2663 = vmatprep.mubr.f32.mxu0 %v2535
      %2664 = vmatmul.mubr.f32.gmra.mxu0 %v2534
      %v2665 = vpop.f32.mrf.mxu0
      %v2666 = vadd.f32 0.0, %v2665
      %v2667 = vpop.f32.mrf.mxu0
      %2668 = vmatprep.mubr.f32.mxu0 %v2537
      %2669 = vmatmul.mubr.f32.gmra.mxu0 %v2536
      %v2670 = vpop.f32.mrf.mxu0
      %v2671 = vadd.f32 0.0, %v2670
      %v2672 = vpop.f32.mrf.mxu0
      %2673 = vmatprep.mubr.f32.mxu0 %v2539
      %2674 = vmatmul.mubr.f32.gmra.mxu0 %v2538
      %v2675 = vpop.f32.mrf.mxu0
      %v2676 = vadd.f32 0.0, %v2675
      %v2677 = vpop.f32.mrf.mxu0
      %2678 = vmatprep.mubr.f32.mxu0 %v2541
      %2679 = vmatmul.mubr.f32.gmra.mxu0 %v2540
      %v2680 = vpop.f32.mrf.mxu0
      %v2681 = vadd.f32 0.0, %v2680
      %v2682 = vpop.f32.mrf.mxu0
      %2683 = vmatprep.mubr.f32.mxu0 %v2543
      %2684 = vmatmul.mubr.f32.gmra.mxu0 %v2542
      %v2685 = vpop.f32.mrf.mxu0
      %v2686 = vadd.f32 0.0, %v2685
      %v2687 = vpop.f32.mrf.mxu0
      %2688 = vdwg.mxu0
      %v2689 = vsel %vm157, %v2611, -1e+30
      %v2690 = vsel %vm157, %v2616, -1e+30
      %v2691 = vsel %vm157, %v2621, -1e+30
      %v2692 = vsel %vm157, %v2626, -1e+30
      %v2693 = vsel %vm157, %v2631, -1e+30
      %v2694 = vsel %vm157, %v2636, -1e+30
      %v2695 = vsel %vm157, %v2641, -1e+30
      %v2696 = vsel %vm157, %v2646, -1e+30
      %v2697 = vsel %vm157, %v2651, -1e+30
      %v2698 = vsel %vm157, %v2656, -1e+30
      %v2699 = vsel %vm157, %v2661, -1e+30
      %v2700 = vsel %vm157, %v2666, -1e+30
      %v2701 = vsel %vm157, %v2671, -1e+30
      %v2702 = vsel %vm157, %v2676, -1e+30
      %v2703 = vsel %vm157, %v2681, -1e+30
      %v2704 = vsel %vm157, %v2686, -1e+30
      %2705 = vmax.xlane.f32.xlu0 %v2689
      %v2706 = vpop.xlane.xlu0 %2705
      %2707 = vmax.xlane.f32.xlu0 %v2690
      %v2708 = vpop.xlane.xlu0 %2707
      %2709 = vmax.xlane.f32.xlu0 %v2691
      %v2710 = vpop.xlane.xlu0 %2709
      %2711 = vmax.xlane.f32.xlu0 %v2692
      %v2712 = vpop.xlane.xlu0 %2711
      %2713 = vmax.xlane.f32.xlu0 %v2693
      %v2714 = vpop.xlane.xlu0 %2713
      %2715 = vmax.xlane.f32.xlu0 %v2694
      %v2716 = vpop.xlane.xlu0 %2715
      %2717 = vmax.xlane.f32.xlu0 %v2695
      %v2718 = vpop.xlane.xlu0 %2717
      %2719 = vmax.xlane.f32.xlu0 %v2696
      %v2720 = vpop.xlane.xlu0 %2719
      %2721 = vmax.xlane.f32.xlu0 %v2697
      %v2722 = vpop.xlane.xlu0 %2721
      %2723 = vmax.xlane.f32.xlu0 %v2698
      %v2724 = vpop.xlane.xlu0 %2723
      %2725 = vmax.xlane.f32.xlu0 %v2699
      %v2726 = vpop.xlane.xlu0 %2725
      %2727 = vmax.xlane.f32.xlu0 %v2700
      %v2728 = vpop.xlane.xlu0 %2727
      %2729 = vmax.xlane.f32.xlu0 %v2701
      %v2730 = vpop.xlane.xlu0 %2729
      %2731 = vmax.xlane.f32.xlu0 %v2702
      %v2732 = vpop.xlane.xlu0 %2731
      %2733 = vmax.xlane.f32.xlu0 %v2703
      %v2734 = vpop.xlane.xlu0 %2733
      %2735 = vmax.xlane.f32.xlu0 %v2704
      %v2736 = vpop.xlane.xlu0 %2735
      %v2737 = vsub.f32 %v2689, %v2706
      %v2738 = vsub.f32 %v2690, %v2708
      %v2739 = vsub.f32 %v2691, %v2710
      %v2740 = vsub.f32 %v2692, %v2712
      %v2741 = vsub.f32 %v2693, %v2714
      %v2742 = vsub.f32 %v2694, %v2716
      %v2743 = vsub.f32 %v2695, %v2718
      %v2744 = vsub.f32 %v2696, %v2720
      %v2745 = vsub.f32 %v2697, %v2722
      %v2746 = vsub.f32 %v2698, %v2724
      %v2747 = vsub.f32 %v2699, %v2726
      %v2748 = vsub.f32 %v2700, %v2728
      %v2749 = vsub.f32 %v2701, %v2730
      %v2750 = vsub.f32 %v2702, %v2732
      %v2751 = vsub.f32 %v2703, %v2734
      %v2752 = vsub.f32 %v2704, %v2736
      %v2753 = vmul.f32 %v2737, 1.442695
      %v2754 = vpow.pop %v2753
      %v2755 = vmul.f32 %v2738, 1.442695
      %v2756 = vpow.pop %v2755
      %v2757 = vmul.f32 %v2739, 1.442695
      %v2758 = vpow.pop %v2757
      %v2759 = vmul.f32 %v2740, 1.442695
      %v2760 = vpow.pop %v2759
      %v2761 = vmul.f32 %v2741, 1.442695
      %v2762 = vpow.pop %v2761
      %v2763 = vmul.f32 %v2742, 1.442695
      %v2764 = vpow.pop %v2763
      %v2765 = vmul.f32 %v2743, 1.442695
      %v2766 = vpow.pop %v2765
      %v2767 = vmul.f32 %v2744, 1.442695
      %v2768 = vpow.pop %v2767
      %v2769 = vmul.f32 %v2745, 1.442695
      %v2770 = vpow.pop %v2769
      %v2771 = vmul.f32 %v2746, 1.442695
      %v2772 = vpow.pop %v2771
      %v2773 = vmul.f32 %v2747, 1.442695
      %v2774 = vpow.pop %v2773
      %v2775 = vmul.f32 %v2748, 1.442695
      %v2776 = vpow.pop %v2775
      %v2777 = vmul.f32 %v2749, 1.442695
      %v2778 = vpow.pop %v2777
      %v2779 = vmul.f32 %v2750, 1.442695
      %v2780 = vpow.pop %v2779
      %v2781 = vmul.f32 %v2751, 1.442695
      %v2782 = vpow.pop %v2781
      %v2783 = vmul.f32 %v2752, 1.442695
      %v2784 = vpow.pop %v2783
      %2785 = vadd.xlane.f32.xlu0 %v2754
      %v2786 = vpop.xlane.xlu0 %2785
      %2787 = vadd.xlane.f32.xlu0 %v2756
      %v2788 = vpop.xlane.xlu0 %2787
      %2789 = vadd.xlane.f32.xlu0 %v2758
      %v2790 = vpop.xlane.xlu0 %2789
      %2791 = vadd.xlane.f32.xlu0 %v2760
      %v2792 = vpop.xlane.xlu0 %2791
      %2793 = vadd.xlane.f32.xlu0 %v2762
      %v2794 = vpop.xlane.xlu0 %2793
      %2795 = vadd.xlane.f32.xlu0 %v2764
      %v2796 = vpop.xlane.xlu0 %2795
      %2797 = vadd.xlane.f32.xlu0 %v2766
      %v2798 = vpop.xlane.xlu0 %2797
      %2799 = vadd.xlane.f32.xlu0 %v2768
      %v2800 = vpop.xlane.xlu0 %2799
      %2801 = vadd.xlane.f32.xlu0 %v2770
      %v2802 = vpop.xlane.xlu0 %2801
      %2803 = vadd.xlane.f32.xlu0 %v2772
      %v2804 = vpop.xlane.xlu0 %2803
      %2805 = vadd.xlane.f32.xlu0 %v2774
      %v2806 = vpop.xlane.xlu0 %2805
      %2807 = vadd.xlane.f32.xlu0 %v2776
      %v2808 = vpop.xlane.xlu0 %2807
      %2809 = vadd.xlane.f32.xlu0 %v2778
      %v2810 = vpop.xlane.xlu0 %2809
      %2811 = vadd.xlane.f32.xlu0 %v2780
      %v2812 = vpop.xlane.xlu0 %2811
      %2813 = vadd.xlane.f32.xlu0 %v2782
      %v2814 = vpop.xlane.xlu0 %2813
      %2815 = vadd.xlane.f32.xlu0 %v2784
      %v2816 = vpop.xlane.xlu0 %2815
      %v2817 = vrcp.pop %v2786
      %v2818 = vrcp.pop %v2788
      %v2819 = vrcp.pop %v2790
      %v2820 = vrcp.pop %v2792
      %v2821 = vrcp.pop %v2794
      %v2822 = vrcp.pop %v2796
      %v2823 = vrcp.pop %v2798
      %v2824 = vrcp.pop %v2800
      %v2825 = vrcp.pop %v2802
      %v2826 = vrcp.pop %v2804
      %v2827 = vrcp.pop %v2806
      %v2828 = vrcp.pop %v2808
      %v2829 = vrcp.pop %v2810
      %v2830 = vrcp.pop %v2812
      %v2831 = vrcp.pop %v2814
      %v2832 = vrcp.pop %v2816
      %v2833 = vmul.f32 %v2754, %v2817
      %v2834 = vmul.f32 %v2756, %v2818
      %v2835 = vmul.f32 %v2758, %v2819
      %v2836 = vmul.f32 %v2760, %v2820
      %v2837 = vmul.f32 %v2762, %v2821
      %v2838 = vmul.f32 %v2764, %v2822
      %v2839 = vmul.f32 %v2766, %v2823
      %v2840 = vmul.f32 %v2768, %v2824
      %v2841 = vmul.f32 %v2770, %v2825
      %v2842 = vmul.f32 %v2772, %v2826
      %v2843 = vmul.f32 %v2774, %v2827
      %v2844 = vmul.f32 %v2776, %v2828
      %v2845 = vmul.f32 %v2778, %v2829
      %v2846 = vmul.f32 %v2780, %v2830
      %v2847 = vmul.f32 %v2782, %v2831
      %v2848 = vmul.f32 %v2784, %v2832
      %s2849 = sadd.s32 256, %s1741
      %s2850 = scalar_lea.vmem [#allocation9], %s2849
      %2851 = vst [vmem:[%s2850] sm:$0xff] %v2833
      %2852 = vst [vmem:[%s2850 + $0x8] sm:$0xff] %v2834
      %2853 = vst [vmem:[%s2850 + $0x10] sm:$0xff] %v2835
      %2854 = vst [vmem:[%s2850 + $0x18] sm:$0xff] %v2836
      %2855 = vst [vmem:[%s2850 + $0x20] sm:$0xff] %v2837
      %2856 = vst [vmem:[%s2850 + $0x28] sm:$0xff] %v2838
      %2857 = vst [vmem:[%s2850 + $0x30] sm:$0xff] %v2839
      %2858 = vst [vmem:[%s2850 + $0x38] sm:$0xff] %v2840
      %2859 = vst [vmem:[%s2850 + $0x40] sm:$0xff] %v2841
      %2860 = vst [vmem:[%s2850 + $0x48] sm:$0xff] %v2842
      %2861 = vst [vmem:[%s2850 + $0x50] sm:$0xff] %v2843
      %2862 = vst [vmem:[%s2850 + $0x58] sm:$0xff] %v2844
      %2863 = vst [vmem:[%s2850 + $0x60] sm:$0xff] %v2845
      %2864 = vst [vmem:[%s2850 + $0x68] sm:$0xff] %v2846
      %2865 = vst [vmem:[%s2850 + $0x70] sm:$0xff] %v2847
      %2866 = vst [vmem:[%s2850 + $0x78] sm:$0xff] %v2848
      %2867 = vmatprep.subr.mxu0 %v984
      %2868 = vmatpush1.msra.mxu0 %v982
      %2869 = vmatprep.subr.mxu0 %v980
      %2870 = vmatpush1.msra.mxu0 %v978
      %2871 = vmatprep.subr.mxu0 %v974
      %2872 = vmatpush1.msra.mxu0 %v972
      %2873 = vmatprep.subr.mxu0 %v970
      %2874 = vmatpush1.msra.mxu0 %v968
      %2875 = vmatprep.subr.mxu0 %v964
      %2876 = vmatpush1.msra.mxu0 %v962
      %2877 = vmatprep.subr.mxu0 %v960
      %2878 = vmatpush1.msra.mxu0 %v958
      %2879 = vmatprep.subr.mxu0 %v954
      %2880 = vmatpush1.msra.mxu0 %v952
      %2881 = vmatprep.subr.mxu0 %v950
      %2882 = vmatpush1.msra.mxu0 %v948
      %2883 = vmatprep.subr.mxu0 %v944
      %2884 = vmatpush1.msra.mxu0 %v942
      %2885 = vmatprep.subr.mxu0 %v940
      %2886 = vmatpush1.msra.mxu0 %v938
      %2887 = vmatprep.subr.mxu0 %v934
      %2888 = vmatpush1.msra.mxu0 %v932
      %2889 = vmatprep.subr.mxu0 %v930
      %2890 = vmatpush1.msra.mxu0 %v928
      %2891 = vmatprep.subr.mxu0 %v924
      %2892 = vmatpush1.msra.mxu0 %v922
      %2893 = vmatprep.subr.mxu0 %v920
      %2894 = vmatpush1.msra.mxu0 %v918
      %2895 = vmatprep.subr.mxu0 %v914
      %2896 = vmatpush1.msra.mxu0 %v912
      %2897 = vmatprep.subr.mxu0 %v910
      %2898 = vmatpush1.msra.mxu0 %v908
      %2899 = vmatprep.subr.mxu0 0.0
      %2900 = vmatpush2.msra.mxu0 0.0
      %2901 = vmatprep.subr.mxu0 0.0
      %2902 = vmatpush2.msra.mxu0 0.0
      %2903 = vmatprep.subr.mxu0 0.0
      %2904 = vmatpush2.msra.mxu0 0.0
      %2905 = vmatprep.subr.mxu0 0.0
      %2906 = vmatpush2.msra.mxu0 0.0
      %2907 = vmatprep.subr.mxu0 0.0
      %2908 = vmatpush2.msra.mxu0 0.0
      %2909 = vmatprep.subr.mxu0 0.0
      %2910 = vmatpush2.msra.mxu0 0.0
      %2911 = vmatprep.subr.mxu0 0.0
      %2912 = vmatpush2.msra.mxu0 0.0
      %2913 = vmatprep.subr.mxu0 0.0
      %2914 = vmatpush2.msra.mxu0 0.0
      %2915 = vmatprep.subr.mxu0 0.0
      %2916 = vmatpush2.msra.mxu0 0.0
      %2917 = vmatprep.subr.mxu0 0.0
      %2918 = vmatpush2.msra.mxu0 0.0
      %2919 = vmatprep.subr.mxu0 0.0
      %2920 = vmatpush2.msra.mxu0 0.0
      %2921 = vmatprep.subr.mxu0 0.0
      %2922 = vmatpush2.msra.mxu0 0.0
      %2923 = vmatprep.subr.mxu0 0.0
      %2924 = vmatpush2.msra.mxu0 0.0
      %2925 = vmatprep.subr.mxu0 0.0
      %2926 = vmatpush2.msra.mxu0 0.0
      %2927 = vmatprep.subr.mxu0 0.0
      %2928 = vmatpush2.msra.mxu0 0.0
      %2929 = vmatprep.subr.mxu0 0.0
      %2930 = vmatpush2.msra.mxu0 0.0
      %2931 = vmatprep.mubr.f32.mxu0 0.0
      %2932 = vmatmul.mubr.f32.gmra.mxu0 %v2833
      %v2933 = vpop.f32.mrf.mxu0
      %v2934 = vadd.f32 0.0, %v2933
      %v2935 = vpop.f32.mrf.mxu0
      %v2936 = vadd.f32 0.0, %v2935
      %2937 = vmatprep.mubr.f32.mxu0 0.0
      %2938 = vmatmul.mubr.f32.gmra.mxu0 %v2834
      %v2939 = vpop.f32.mrf.mxu0
      %v2940 = vadd.f32 0.0, %v2939
      %v2941 = vpop.f32.mrf.mxu0
      %v2942 = vadd.f32 0.0, %v2941
      %2943 = vmatprep.mubr.f32.mxu0 0.0
      %2944 = vmatmul.mubr.f32.gmra.mxu0 %v2835
      %v2945 = vpop.f32.mrf.mxu0
      %v2946 = vadd.f32 0.0, %v2945
      %v2947 = vpop.f32.mrf.mxu0
      %v2948 = vadd.f32 0.0, %v2947
      %2949 = vmatprep.mubr.f32.mxu0 0.0
      %2950 = vmatmul.mubr.f32.gmra.mxu0 %v2836
      %v2951 = vpop.f32.mrf.mxu0
      %v2952 = vadd.f32 0.0, %v2951
      %v2953 = vpop.f32.mrf.mxu0
      %v2954 = vadd.f32 0.0, %v2953
      %2955 = vmatprep.mubr.f32.mxu0 0.0
      %2956 = vmatmul.mubr.f32.gmra.mxu0 %v2837
      %v2957 = vpop.f32.mrf.mxu0
      %v2958 = vadd.f32 0.0, %v2957
      %v2959 = vpop.f32.mrf.mxu0
      %v2960 = vadd.f32 0.0, %v2959
      %2961 = vmatprep.mubr.f32.mxu0 0.0
      %2962 = vmatmul.mubr.f32.gmra.mxu0 %v2838
      %v2963 = vpop.f32.mrf.mxu0
      %v2964 = vadd.f32 0.0, %v2963
      %v2965 = vpop.f32.mrf.mxu0
      %v2966 = vadd.f32 0.0, %v2965
      %2967 = vmatprep.mubr.f32.mxu0 0.0
      %2968 = vmatmul.mubr.f32.gmra.mxu0 %v2839
      %v2969 = vpop.f32.mrf.mxu0
      %v2970 = vadd.f32 0.0, %v2969
      %v2971 = vpop.f32.mrf.mxu0
      %v2972 = vadd.f32 0.0, %v2971
      %2973 = vmatprep.mubr.f32.mxu0 0.0
      %2974 = vmatmul.mubr.f32.gmra.mxu0 %v2840
      %v2975 = vpop.f32.mrf.mxu0
      %v2976 = vadd.f32 0.0, %v2975
      %v2977 = vpop.f32.mrf.mxu0
      %v2978 = vadd.f32 0.0, %v2977
      %2979 = vmatprep.mubr.f32.mxu0 0.0
      %2980 = vmatmul.mubr.f32.gmra.mxu0 %v2841
      %v2981 = vpop.f32.mrf.mxu0
      %v2982 = vadd.f32 0.0, %v2981
      %v2983 = vpop.f32.mrf.mxu0
      %v2984 = vadd.f32 0.0, %v2983
      %2985 = vmatprep.mubr.f32.mxu0 0.0
      %2986 = vmatmul.mubr.f32.gmra.mxu0 %v2842
      %v2987 = vpop.f32.mrf.mxu0
      %v2988 = vadd.f32 0.0, %v2987
      %v2989 = vpop.f32.mrf.mxu0
      %v2990 = vadd.f32 0.0, %v2989
      %2991 = vmatprep.mubr.f32.mxu0 0.0
      %2992 = vmatmul.mubr.f32.gmra.mxu0 %v2843
      %v2993 = vpop.f32.mrf.mxu0
      %v2994 = vadd.f32 0.0, %v2993
      %v2995 = vpop.f32.mrf.mxu0
      %v2996 = vadd.f32 0.0, %v2995
      %2997 = vmatprep.mubr.f32.mxu0 0.0
      %2998 = vmatmul.mubr.f32.gmra.mxu0 %v2844
      %v2999 = vpop.f32.mrf.mxu0
      %v3000 = vadd.f32 0.0, %v2999
      %v3001 = vpop.f32.mrf.mxu0
      %v3002 = vadd.f32 0.0, %v3001
      %3003 = vmatprep.mubr.f32.mxu0 0.0
      %3004 = vmatmul.mubr.f32.gmra.mxu0 %v2845
      %v3005 = vpop.f32.mrf.mxu0
      %v3006 = vadd.f32 0.0, %v3005
      %v3007 = vpop.f32.mrf.mxu0
      %v3008 = vadd.f32 0.0, %v3007
      %3009 = vmatprep.mubr.f32.mxu0 0.0
      %3010 = vmatmul.mubr.f32.gmra.mxu0 %v2846
      %v3011 = vpop.f32.mrf.mxu0
      %v3012 = vadd.f32 0.0, %v3011
      %v3013 = vpop.f32.mrf.mxu0
      %v3014 = vadd.f32 0.0, %v3013
      %3015 = vmatprep.mubr.f32.mxu0 0.0
      %3016 = vmatmul.mubr.f32.gmra.mxu0 %v2847
      %v3017 = vpop.f32.mrf.mxu0
      %v3018 = vadd.f32 0.0, %v3017
      %v3019 = vpop.f32.mrf.mxu0
      %v3020 = vadd.f32 0.0, %v3019
      %3021 = vmatprep.mubr.f32.mxu0 0.0
      %3022 = vmatmul.mubr.f32.gmra.mxu0 %v2848
      %v3023 = vpop.f32.mrf.mxu0
      %v3024 = vadd.f32 0.0, %v3023
      %v3025 = vpop.f32.mrf.mxu0
      %v3026 = vadd.f32 0.0, %v3025
      %3027 = vdwg.mxu0
      %v3028 = vsel %vm2510, %v2934, %v2474
      %v3029 = vsel %vm2511, %v2936, %v2475
      %v3030 = vsel %vm2510, %v2940, %v2476
      %v3031 = vsel %vm2511, %v2942, %v2477
      %v3032 = vsel %vm2510, %v2946, %v2478
      %v3033 = vsel %vm2511, %v2948, %v2479
      %v3034 = vsel %vm2510, %v2952, %v2480
      %v3035 = vsel %vm2511, %v2954, %v2481
      %v3036 = vsel %vm2510, %v2958, %v2482
      %v3037 = vsel %vm2511, %v2960, %v2483
      %v3038 = vsel %vm2510, %v2964, %v2484
      %v3039 = vsel %vm2511, %v2966, %v2485
      %v3040 = vsel %vm2510, %v2970, %v2486
      %v3041 = vsel %vm2511, %v2972, %v2487
      %v3042 = vsel %vm2510, %v2976, %v2488
      %v3043 = vsel %vm2511, %v2978, %v2489
      %v3044 = vsel %vm2510, %v2982, %v2490
      %v3045 = vsel %vm2511, %v2984, %v2491
      %v3046 = vsel %vm2510, %v2988, %v2492
      %v3047 = vsel %vm2511, %v2990, %v2493
      %v3048 = vsel %vm2510, %v2994, %v2494
      %v3049 = vsel %vm2511, %v2996, %v2495
      %v3050 = vsel %vm2510, %v3000, %v2496
      %v3051 = vsel %vm2511, %v3002, %v2497
      %v3052 = vsel %vm2510, %v3006, %v2498
      %v3053 = vsel %vm2511, %v3008, %v2499
      %v3054 = vsel %vm2510, %v3012, %v2500
      %v3055 = vsel %vm2511, %v3014, %v2501
      %v3056 = vsel %vm2510, %v3018, %v2502
      %v3057 = vsel %vm2511, %v3020, %v2503
      %v3058 = vsel %vm2510, %v3024, %v2504
      %v3059 = vsel %vm2511, %v3026, %v2505
      %vm3060 = vcmp.ge.s32.totalorder %v155, 96
      %vm3061 = vcmp.ge.s32.totalorder %v156, 96
      %vm3062 = vcmp.lt.s32.totalorder %v155, 128
      %vm3063 = vcmp.lt.s32.totalorder %v156, 128
      %vm3064 = vmand %vm3060, %vm3062
      %vm3065 = vmand %vm3061, %vm3063
      %v3066 = vsel %vm3064, %v908, 0.0
      %v3067 = vsel %vm3065, %v910, 0.0
      %v3068 = vsel %vm3064, %v912, 0.0
      %v3069 = vsel %vm3065, %v914, 0.0
      %v3070 = vsel %vm3064, %v918, 0.0
      %v3071 = vsel %vm3065, %v920, 0.0
      %v3072 = vsel %vm3064, %v922, 0.0
      %v3073 = vsel %vm3065, %v924, 0.0
      %v3074 = vsel %vm3064, %v928, 0.0
      %v3075 = vsel %vm3065, %v930, 0.0
      %v3076 = vsel %vm3064, %v932, 0.0
      %v3077 = vsel %vm3065, %v934, 0.0
      %v3078 = vsel %vm3064, %v938, 0.0
      %v3079 = vsel %vm3065, %v940, 0.0
      %v3080 = vsel %vm3064, %v942, 0.0
      %v3081 = vsel %vm3065, %v944, 0.0
      %v3082 = vsel %vm3064, %v948, 0.0
      %v3083 = vsel %vm3065, %v950, 0.0
      %v3084 = vsel %vm3064, %v952, 0.0
      %v3085 = vsel %vm3065, %v954, 0.0
      %v3086 = vsel %vm3064, %v958, 0.0
      %v3087 = vsel %vm3065, %v960, 0.0
      %v3088 = vsel %vm3064, %v962, 0.0
      %v3089 = vsel %vm3065, %v964, 0.0
      %v3090 = vsel %vm3064, %v968, 0.0
      %v3091 = vsel %vm3065, %v970, 0.0
      %v3092 = vsel %vm3064, %v972, 0.0
      %v3093 = vsel %vm3065, %v974, 0.0
      %v3094 = vsel %vm3064, %v978, 0.0
      %v3095 = vsel %vm3065, %v980, 0.0
      %v3096 = vsel %vm3064, %v982, 0.0
      %v3097 = vsel %vm3065, %v984, 0.0
      %3098 = vmatprep.subr.mxu0 %v1130
      %3099 = vmatpush1.xpose.msra.mxu0 %v1129
      %3100 = vmatprep.subr.mxu0 %v1128
      %3101 = vmatpush1.xpose.msra.mxu0 %v1127
      %3102 = vmatprep.subr.mxu0 %v1126
      %3103 = vmatpush1.xpose.msra.mxu0 %v1125
      %3104 = vmatprep.subr.mxu0 %v1124
      %3105 = vmatpush1.xpose.msra.mxu0 %v1123
      %3106 = vmatprep.subr.mxu0 %v1122
      %3107 = vmatpush1.xpose.msra.mxu0 %v1121
      %3108 = vmatprep.subr.mxu0 %v1120
      %3109 = vmatpush1.xpose.msra.mxu0 %v1119
      %3110 = vmatprep.subr.mxu0 %v1118
      %3111 = vmatpush1.xpose.msra.mxu0 %v1117
      %3112 = vmatprep.subr.mxu0 %v1116
      %3113 = vmatpush1.xpose.msra.mxu0 %v1115
      %3114 = vmatprep.subr.mxu0 %v1114
      %3115 = vmatpush1.xpose.msra.mxu0 %v1113
      %3116 = vmatprep.subr.mxu0 %v1112
      %3117 = vmatpush1.xpose.msra.mxu0 %v1111
      %3118 = vmatprep.subr.mxu0 %v1110
      %3119 = vmatpush1.xpose.msra.mxu0 %v1109
      %3120 = vmatprep.subr.mxu0 %v1108
      %3121 = vmatpush1.xpose.msra.mxu0 %v1107
      %3122 = vmatprep.subr.mxu0 %v1106
      %3123 = vmatpush1.xpose.msra.mxu0 %v1105
      %3124 = vmatprep.subr.mxu0 %v1104
      %3125 = vmatpush1.xpose.msra.mxu0 %v1103
      %3126 = vmatprep.subr.mxu0 %v1102
      %3127 = vmatpush1.xpose.msra.mxu0 %v1101
      %3128 = vmatprep.subr.mxu0 %v1100
      %3129 = vmatpush1.xpose.msra.mxu0 %v1099
      %3130 = vmatprep.subr.mxu0 0.0
      %3131 = vmatpush2.xpose.msra.mxu0 0.0
      %3132 = vmatprep.subr.mxu0 0.0
      %3133 = vmatpush2.xpose.msra.mxu0 0.0
      %3134 = vmatprep.subr.mxu0 0.0
      %3135 = vmatpush2.xpose.msra.mxu0 0.0
      %3136 = vmatprep.subr.mxu0 0.0
      %3137 = vmatpush2.xpose.msra.mxu0 0.0
      %3138 = vmatprep.subr.mxu0 0.0
      %3139 = vmatpush2.xpose.msra.mxu0 0.0
      %3140 = vmatprep.subr.mxu0 0.0
      %3141 = vmatpush2.xpose.msra.mxu0 0.0
      %3142 = vmatprep.subr.mxu0 0.0
      %3143 = vmatpush2.xpose.msra.mxu0 0.0
      %3144 = vmatprep.subr.mxu0 0.0
      %3145 = vmatpush2.xpose.msra.mxu0 0.0
      %3146 = vmatprep.subr.mxu0 0.0
      %3147 = vmatpush2.xpose.msra.mxu0 0.0
      %3148 = vmatprep.subr.mxu0 0.0
      %3149 = vmatpush2.xpose.msra.mxu0 0.0
      %3150 = vmatprep.subr.mxu0 0.0
      %3151 = vmatpush2.xpose.msra.mxu0 0.0
      %3152 = vmatprep.subr.mxu0 0.0
      %3153 = vmatpush2.xpose.msra.mxu0 0.0
      %3154 = vmatprep.subr.mxu0 0.0
      %3155 = vmatpush2.xpose.msra.mxu0 0.0
      %3156 = vmatprep.subr.mxu0 0.0
      %3157 = vmatpush2.xpose.msra.mxu0 0.0
      %3158 = vmatprep.subr.mxu0 0.0
      %3159 = vmatpush2.xpose.msra.mxu0 0.0
      %3160 = vmatprep.subr.mxu0 0.0
      %3161 = vmatpush2.xpose.msra.mxu0 0.0
      %3162 = vmatprep.mubr.f32.mxu0 %v3067
      %3163 = vmatmul.mubr.f32.gmra.mxu0 %v3066
      %v3164 = vpop.f32.mrf.mxu0
      %v3165 = vadd.f32 0.0, %v3164
      %v3166 = vpop.f32.mrf.mxu0
      %3167 = vmatprep.mubr.f32.mxu0 %v3069
      %3168 = vmatmul.mubr.f32.gmra.mxu0 %v3068
      %v3169 = vpop.f32.mrf.mxu0
      %v3170 = vadd.f32 0.0, %v3169
      %v3171 = vpop.f32.mrf.mxu0
      %3172 = vmatprep.mubr.f32.mxu0 %v3071
      %3173 = vmatmul.mubr.f32.gmra.mxu0 %v3070
      %v3174 = vpop.f32.mrf.mxu0
      %v3175 = vadd.f32 0.0, %v3174
      %v3176 = vpop.f32.mrf.mxu0
      %3177 = vmatprep.mubr.f32.mxu0 %v3073
      %3178 = vmatmul.mubr.f32.gmra.mxu0 %v3072
      %v3179 = vpop.f32.mrf.mxu0
      %v3180 = vadd.f32 0.0, %v3179
      %v3181 = vpop.f32.mrf.mxu0
      %3182 = vmatprep.mubr.f32.mxu0 %v3075
      %3183 = vmatmul.mubr.f32.gmra.mxu0 %v3074
      %v3184 = vpop.f32.mrf.mxu0
      %v3185 = vadd.f32 0.0, %v3184
      %v3186 = vpop.f32.mrf.mxu0
      %3187 = vmatprep.mubr.f32.mxu0 %v3077
      %3188 = vmatmul.mubr.f32.gmra.mxu0 %v3076
      %v3189 = vpop.f32.mrf.mxu0
      %v3190 = vadd.f32 0.0, %v3189
      %v3191 = vpop.f32.mrf.mxu0
      %3192 = vmatprep.mubr.f32.mxu0 %v3079
      %3193 = vmatmul.mubr.f32.gmra.mxu0 %v3078
      %v3194 = vpop.f32.mrf.mxu0
      %v3195 = vadd.f32 0.0, %v3194
      %v3196 = vpop.f32.mrf.mxu0
      %3197 = vmatprep.mubr.f32.mxu0 %v3081
      %3198 = vmatmul.mubr.f32.gmra.mxu0 %v3080
      %v3199 = vpop.f32.mrf.mxu0
      %v3200 = vadd.f32 0.0, %v3199
      %v3201 = vpop.f32.mrf.mxu0
      %3202 = vmatprep.mubr.f32.mxu0 %v3083
      %3203 = vmatmul.mubr.f32.gmra.mxu0 %v3082
      %v3204 = vpop.f32.mrf.mxu0
      %v3205 = vadd.f32 0.0, %v3204
      %v3206 = vpop.f32.mrf.mxu0
      %3207 = vmatprep.mubr.f32.mxu0 %v3085
      %3208 = vmatmul.mubr.f32.gmra.mxu0 %v3084
      %v3209 = vpop.f32.mrf.mxu0
      %v3210 = vadd.f32 0.0, %v3209
      %v3211 = vpop.f32.mrf.mxu0
      %3212 = vmatprep.mubr.f32.mxu0 %v3087
      %3213 = vmatmul.mubr.f32.gmra.mxu0 %v3086
      %v3214 = vpop.f32.mrf.mxu0
      %v3215 = vadd.f32 0.0, %v3214
      %v3216 = vpop.f32.mrf.mxu0
      %3217 = vmatprep.mubr.f32.mxu0 %v3089
      %3218 = vmatmul.mubr.f32.gmra.mxu0 %v3088
      %v3219 = vpop.f32.mrf.mxu0
      %v3220 = vadd.f32 0.0, %v3219
      %v3221 = vpop.f32.mrf.mxu0
      %3222 = vmatprep.mubr.f32.mxu0 %v3091
      %3223 = vmatmul.mubr.f32.gmra.mxu0 %v3090
      %v3224 = vpop.f32.mrf.mxu0
      %v3225 = vadd.f32 0.0, %v3224
      %v3226 = vpop.f32.mrf.mxu0
      %3227 = vmatprep.mubr.f32.mxu0 %v3093
      %3228 = vmatmul.mubr.f32.gmra.mxu0 %v3092
      %v3229 = vpop.f32.mrf.mxu0
      %v3230 = vadd.f32 0.0, %v3229
      %v3231 = vpop.f32.mrf.mxu0
      %3232 = vmatprep.mubr.f32.mxu0 %v3095
      %3233 = vmatmul.mubr.f32.gmra.mxu0 %v3094
      %v3234 = vpop.f32.mrf.mxu0
      %v3235 = vadd.f32 0.0, %v3234
      %v3236 = vpop.f32.mrf.mxu0
      %3237 = vmatprep.mubr.f32.mxu0 %v3097
      %3238 = vmatmul.mubr.f32.gmra.mxu0 %v3096
      %v3239 = vpop.f32.mrf.mxu0
      %v3240 = vadd.f32 0.0, %v3239
      %v3241 = vpop.f32.mrf.mxu0
      %3242 = vdwg.mxu0
      %v3243 = vsel %vm157, %v3165, -1e+30
      %v3244 = vsel %vm157, %v3170, -1e+30
      %v3245 = vsel %vm157, %v3175, -1e+30
      %v3246 = vsel %vm157, %v3180, -1e+30
      %v3247 = vsel %vm157, %v3185, -1e+30
      %v3248 = vsel %vm157, %v3190, -1e+30
      %v3249 = vsel %vm157, %v3195, -1e+30
      %v3250 = vsel %vm157, %v3200, -1e+30
      %v3251 = vsel %vm157, %v3205, -1e+30
      %v3252 = vsel %vm157, %v3210, -1e+30
      %v3253 = vsel %vm157, %v3215, -1e+30
      %v3254 = vsel %vm157, %v3220, -1e+30
      %v3255 = vsel %vm157, %v3225, -1e+30
      %v3256 = vsel %vm157, %v3230, -1e+30
      %v3257 = vsel %vm157, %v3235, -1e+30
      %v3258 = vsel %vm157, %v3240, -1e+30
      %3259 = vmax.xlane.f32.xlu0 %v3243
      %v3260 = vpop.xlane.xlu0 %3259
      %3261 = vmax.xlane.f32.xlu0 %v3244
      %v3262 = vpop.xlane.xlu0 %3261
      %3263 = vmax.xlane.f32.xlu0 %v3245
      %v3264 = vpop.xlane.xlu0 %3263
      %3265 = vmax.xlane.f32.xlu0 %v3246
      %v3266 = vpop.xlane.xlu0 %3265
      %3267 = vmax.xlane.f32.xlu0 %v3247
      %v3268 = vpop.xlane.xlu0 %3267
      %3269 = vmax.xlane.f32.xlu0 %v3248
      %v3270 = vpop.xlane.xlu0 %3269
      %3271 = vmax.xlane.f32.xlu0 %v3249
      %v3272 = vpop.xlane.xlu0 %3271
      %3273 = vmax.xlane.f32.xlu0 %v3250
      %v3274 = vpop.xlane.xlu0 %3273
      %3275 = vmax.xlane.f32.xlu0 %v3251
      %v3276 = vpop.xlane.xlu0 %3275
      %3277 = vmax.xlane.f32.xlu0 %v3252
      %v3278 = vpop.xlane.xlu0 %3277
      %3279 = vmax.xlane.f32.xlu0 %v3253
      %v3280 = vpop.xlane.xlu0 %3279
      %3281 = vmax.xlane.f32.xlu0 %v3254
      %v3282 = vpop.xlane.xlu0 %3281
      %3283 = vmax.xlane.f32.xlu0 %v3255
      %v3284 = vpop.xlane.xlu0 %3283
      %3285 = vmax.xlane.f32.xlu0 %v3256
      %v3286 = vpop.xlane.xlu0 %3285
      %3287 = vmax.xlane.f32.xlu0 %v3257
      %v3288 = vpop.xlane.xlu0 %3287
      %3289 = vmax.xlane.f32.xlu0 %v3258
      %v3290 = vpop.xlane.xlu0 %3289
      %v3291 = vsub.f32 %v3243, %v3260
      %v3292 = vsub.f32 %v3244, %v3262
      %v3293 = vsub.f32 %v3245, %v3264
      %v3294 = vsub.f32 %v3246, %v3266
      %v3295 = vsub.f32 %v3247, %v3268
      %v3296 = vsub.f32 %v3248, %v3270
      %v3297 = vsub.f32 %v3249, %v3272
      %v3298 = vsub.f32 %v3250, %v3274
      %v3299 = vsub.f32 %v3251, %v3276
      %v3300 = vsub.f32 %v3252, %v3278
      %v3301 = vsub.f32 %v3253, %v3280
      %v3302 = vsub.f32 %v3254, %v3282
      %v3303 = vsub.f32 %v3255, %v3284
      %v3304 = vsub.f32 %v3256, %v3286
      %v3305 = vsub.f32 %v3257, %v3288
      %v3306 = vsub.f32 %v3258, %v3290
      %v3307 = vmul.f32 %v3291, 1.442695
      %v3308 = vpow.pop %v3307
      %v3309 = vmul.f32 %v3292, 1.442695
      %v3310 = vpow.pop %v3309
      %v3311 = vmul.f32 %v3293, 1.442695
      %v3312 = vpow.pop %v3311
      %v3313 = vmul.f32 %v3294, 1.442695
      %v3314 = vpow.pop %v3313
      %v3315 = vmul.f32 %v3295, 1.442695
      %v3316 = vpow.pop %v3315
      %v3317 = vmul.f32 %v3296, 1.442695
      %v3318 = vpow.pop %v3317
      %v3319 = vmul.f32 %v3297, 1.442695
      %v3320 = vpow.pop %v3319
      %v3321 = vmul.f32 %v3298, 1.442695
      %v3322 = vpow.pop %v3321
      %v3323 = vmul.f32 %v3299, 1.442695
      %v3324 = vpow.pop %v3323
      %v3325 = vmul.f32 %v3300, 1.442695
      %v3326 = vpow.pop %v3325
      %v3327 = vmul.f32 %v3301, 1.442695
      %v3328 = vpow.pop %v3327
      %v3329 = vmul.f32 %v3302, 1.442695
      %v3330 = vpow.pop %v3329
      %v3331 = vmul.f32 %v3303, 1.442695
      %v3332 = vpow.pop %v3331
      %v3333 = vmul.f32 %v3304, 1.442695
      %v3334 = vpow.pop %v3333
      %v3335 = vmul.f32 %v3305, 1.442695
      %v3336 = vpow.pop %v3335
      %v3337 = vmul.f32 %v3306, 1.442695
      %v3338 = vpow.pop %v3337
      %3339 = vadd.xlane.f32.xlu0 %v3308
      %v3340 = vpop.xlane.xlu0 %3339
      %3341 = vadd.xlane.f32.xlu0 %v3310
      %v3342 = vpop.xlane.xlu0 %3341
      %3343 = vadd.xlane.f32.xlu0 %v3312
      %v3344 = vpop.xlane.xlu0 %3343
      %3345 = vadd.xlane.f32.xlu0 %v3314
      %v3346 = vpop.xlane.xlu0 %3345
      %3347 = vadd.xlane.f32.xlu0 %v3316
      %v3348 = vpop.xlane.xlu0 %3347
      %3349 = vadd.xlane.f32.xlu0 %v3318
      %v3350 = vpop.xlane.xlu0 %3349
      %3351 = vadd.xlane.f32.xlu0 %v3320
      %v3352 = vpop.xlane.xlu0 %3351
      %3353 = vadd.xlane.f32.xlu0 %v3322
      %v3354 = vpop.xlane.xlu0 %3353
      %3355 = vadd.xlane.f32.xlu0 %v3324
      %v3356 = vpop.xlane.xlu0 %3355
      %3357 = vadd.xlane.f32.xlu0 %v3326
      %v3358 = vpop.xlane.xlu0 %3357
      %3359 = vadd.xlane.f32.xlu0 %v3328
      %v3360 = vpop.xlane.xlu0 %3359
      %3361 = vadd.xlane.f32.xlu0 %v3330
      %v3362 = vpop.xlane.xlu0 %3361
      %3363 = vadd.xlane.f32.xlu0 %v3332
      %v3364 = vpop.xlane.xlu0 %3363
      %3365 = vadd.xlane.f32.xlu0 %v3334
      %v3366 = vpop.xlane.xlu0 %3365
      %3367 = vadd.xlane.f32.xlu0 %v3336
      %v3368 = vpop.xlane.xlu0 %3367
      %3369 = vadd.xlane.f32.xlu0 %v3338
      %v3370 = vpop.xlane.xlu0 %3369
      %v3371 = vrcp.pop %v3340
      %v3372 = vrcp.pop %v3342
      %v3373 = vrcp.pop %v3344
      %v3374 = vrcp.pop %v3346
      %v3375 = vrcp.pop %v3348
      %v3376 = vrcp.pop %v3350
      %v3377 = vrcp.pop %v3352
      %v3378 = vrcp.pop %v3354
      %v3379 = vrcp.pop %v3356
      %v3380 = vrcp.pop %v3358
      %v3381 = vrcp.pop %v3360
      %v3382 = vrcp.pop %v3362
      %v3383 = vrcp.pop %v3364
      %v3384 = vrcp.pop %v3366
      %v3385 = vrcp.pop %v3368
      %v3386 = vrcp.pop %v3370
      %v3387 = vmul.f32 %v3308, %v3371
      %v3388 = vmul.f32 %v3310, %v3372
      %v3389 = vmul.f32 %v3312, %v3373
      %v3390 = vmul.f32 %v3314, %v3374
      %v3391 = vmul.f32 %v3316, %v3375
      %v3392 = vmul.f32 %v3318, %v3376
      %v3393 = vmul.f32 %v3320, %v3377
      %v3394 = vmul.f32 %v3322, %v3378
      %v3395 = vmul.f32 %v3324, %v3379
      %v3396 = vmul.f32 %v3326, %v3380
      %v3397 = vmul.f32 %v3328, %v3381
      %v3398 = vmul.f32 %v3330, %v3382
      %v3399 = vmul.f32 %v3332, %v3383
      %v3400 = vmul.f32 %v3334, %v3384
      %v3401 = vmul.f32 %v3336, %v3385
      %v3402 = vmul.f32 %v3338, %v3386
      %s3403 = sadd.s32 384, %s1741
      %s3404 = scalar_lea.vmem [#allocation9], %s3403
      %3405 = vst [vmem:[%s3404] sm:$0xff] %v3387
      %3406 = vst [vmem:[%s3404 + $0x8] sm:$0xff] %v3388
      %3407 = vst [vmem:[%s3404 + $0x10] sm:$0xff] %v3389
      %3408 = vst [vmem:[%s3404 + $0x18] sm:$0xff] %v3390
      %3409 = vst [vmem:[%s3404 + $0x20] sm:$0xff] %v3391
      %3410 = vst [vmem:[%s3404 + $0x28] sm:$0xff] %v3392
      %3411 = vst [vmem:[%s3404 + $0x30] sm:$0xff] %v3393
      %3412 = vst [vmem:[%s3404 + $0x38] sm:$0xff] %v3394
      %3413 = vst [vmem:[%s3404 + $0x40] sm:$0xff] %v3395
      %3414 = vst [vmem:[%s3404 + $0x48] sm:$0xff] %v3396
      %3415 = vst [vmem:[%s3404 + $0x50] sm:$0xff] %v3397
      %3416 = vst [vmem:[%s3404 + $0x58] sm:$0xff] %v3398
      %3417 = vst [vmem:[%s3404 + $0x60] sm:$0xff] %v3399
      %3418 = vst [vmem:[%s3404 + $0x68] sm:$0xff] %v3400
      %3419 = vst [vmem:[%s3404 + $0x70] sm:$0xff] %v3401
      %3420 = vst [vmem:[%s3404 + $0x78] sm:$0xff] %v3402
      %3421 = vmatprep.subr.mxu0 %v984
      %3422 = vmatpush1.msra.mxu0 %v982
      %3423 = vmatprep.subr.mxu0 %v980
      %3424 = vmatpush1.msra.mxu0 %v978
      %3425 = vmatprep.subr.mxu0 %v974
      %3426 = vmatpush1.msra.mxu0 %v972
      %3427 = vmatprep.subr.mxu0 %v970
      %3428 = vmatpush1.msra.mxu0 %v968
      %3429 = vmatprep.subr.mxu0 %v964
      %3430 = vmatpush1.msra.mxu0 %v962
      %3431 = vmatprep.subr.mxu0 %v960
      %3432 = vmatpush1.msra.mxu0 %v958
      %3433 = vmatprep.subr.mxu0 %v954
      %3434 = vmatpush1.msra.mxu0 %v952
      %3435 = vmatprep.subr.mxu0 %v950
      %3436 = vmatpush1.msra.mxu0 %v948
      %3437 = vmatprep.subr.mxu0 %v944
      %3438 = vmatpush1.msra.mxu0 %v942
      %3439 = vmatprep.subr.mxu0 %v940
      %3440 = vmatpush1.msra.mxu0 %v938
      %3441 = vmatprep.subr.mxu0 %v934
      %3442 = vmatpush1.msra.mxu0 %v932
      %3443 = vmatprep.subr.mxu0 %v930
      %3444 = vmatpush1.msra.mxu0 %v928
      %3445 = vmatprep.subr.mxu0 %v924
      %3446 = vmatpush1.msra.mxu0 %v922
      %3447 = vmatprep.subr.mxu0 %v920
      %3448 = vmatpush1.msra.mxu0 %v918
      %3449 = vmatprep.subr.mxu0 %v914
      %3450 = vmatpush1.msra.mxu0 %v912
      %3451 = vmatprep.subr.mxu0 %v910
      %3452 = vmatpush1.msra.mxu0 %v908
      %3453 = vmatprep.subr.mxu0 0.0
      %3454 = vmatpush2.msra.mxu0 0.0
      %3455 = vmatprep.subr.mxu0 0.0
      %3456 = vmatpush2.msra.mxu0 0.0
      %3457 = vmatprep.subr.mxu0 0.0
      %3458 = vmatpush2.msra.mxu0 0.0
      %3459 = vmatprep.subr.mxu0 0.0
      %3460 = vmatpush2.msra.mxu0 0.0
      %3461 = vmatprep.subr.mxu0 0.0
      %3462 = vmatpush2.msra.mxu0 0.0
      %3463 = vmatprep.subr.mxu0 0.0
      %3464 = vmatpush2.msra.mxu0 0.0
      %3465 = vmatprep.subr.mxu0 0.0
      %3466 = vmatpush2.msra.mxu0 0.0
      %3467 = vmatprep.subr.mxu0 0.0
      %3468 = vmatpush2.msra.mxu0 0.0
      %3469 = vmatprep.subr.mxu0 0.0
      %3470 = vmatpush2.msra.mxu0 0.0
      %3471 = vmatprep.subr.mxu0 0.0
      %3472 = vmatpush2.msra.mxu0 0.0
      %3473 = vmatprep.subr.mxu0 0.0
      %3474 = vmatpush2.msra.mxu0 0.0
      %3475 = vmatprep.subr.mxu0 0.0
      %3476 = vmatpush2.msra.mxu0 0.0
      %3477 = vmatprep.subr.mxu0 0.0
      %3478 = vmatpush2.msra.mxu0 0.0
      %3479 = vmatprep.subr.mxu0 0.0
      %3480 = vmatpush2.msra.mxu0 0.0
      %3481 = vmatprep.subr.mxu0 0.0
      %3482 = vmatpush2.msra.mxu0 0.0
      %3483 = vmatprep.subr.mxu0 0.0
      %3484 = vmatpush2.msra.mxu0 0.0
      %3485 = vmatprep.mubr.f32.mxu0 0.0
      %3486 = vmatmul.mubr.f32.gmra.mxu0 %v3387
      %v3487 = vpop.f32.mrf.mxu0
      %v3488 = vadd.f32 0.0, %v3487
      %v3489 = vpop.f32.mrf.mxu0
      %v3490 = vadd.f32 0.0, %v3489
      %3491 = vmatprep.mubr.f32.mxu0 0.0
      %3492 = vmatmul.mubr.f32.gmra.mxu0 %v3388
      %v3493 = vpop.f32.mrf.mxu0
      %v3494 = vadd.f32 0.0, %v3493
      %v3495 = vpop.f32.mrf.mxu0
      %v3496 = vadd.f32 0.0, %v3495
      %3497 = vmatprep.mubr.f32.mxu0 0.0
      %3498 = vmatmul.mubr.f32.gmra.mxu0 %v3389
      %v3499 = vpop.f32.mrf.mxu0
      %v3500 = vadd.f32 0.0, %v3499
      %v3501 = vpop.f32.mrf.mxu0
      %v3502 = vadd.f32 0.0, %v3501
      %3503 = vmatprep.mubr.f32.mxu0 0.0
      %3504 = vmatmul.mubr.f32.gmra.mxu0 %v3390
      %v3505 = vpop.f32.mrf.mxu0
      %v3506 = vadd.f32 0.0, %v3505
      %v3507 = vpop.f32.mrf.mxu0
      %v3508 = vadd.f32 0.0, %v3507
      %3509 = vmatprep.mubr.f32.mxu0 0.0
      %3510 = vmatmul.mubr.f32.gmra.mxu0 %v3391
      %v3511 = vpop.f32.mrf.mxu0
      %v3512 = vadd.f32 0.0, %v3511
      %v3513 = vpop.f32.mrf.mxu0
      %v3514 = vadd.f32 0.0, %v3513
      %3515 = vmatprep.mubr.f32.mxu0 0.0
      %3516 = vmatmul.mubr.f32.gmra.mxu0 %v3392
      %v3517 = vpop.f32.mrf.mxu0
      %v3518 = vadd.f32 0.0, %v3517
      %v3519 = vpop.f32.mrf.mxu0
      %v3520 = vadd.f32 0.0, %v3519
      %3521 = vmatprep.mubr.f32.mxu0 0.0
      %3522 = vmatmul.mubr.f32.gmra.mxu0 %v3393
      %v3523 = vpop.f32.mrf.mxu0
      %v3524 = vadd.f32 0.0, %v3523
      %v3525 = vpop.f32.mrf.mxu0
      %v3526 = vadd.f32 0.0, %v3525
      %3527 = vmatprep.mubr.f32.mxu0 0.0
      %3528 = vmatmul.mubr.f32.gmra.mxu0 %v3394
      %v3529 = vpop.f32.mrf.mxu0
      %v3530 = vadd.f32 0.0, %v3529
      %v3531 = vpop.f32.mrf.mxu0
      %v3532 = vadd.f32 0.0, %v3531
      %3533 = vmatprep.mubr.f32.mxu0 0.0
      %3534 = vmatmul.mubr.f32.gmra.mxu0 %v3395
      %v3535 = vpop.f32.mrf.mxu0
      %v3536 = vadd.f32 0.0, %v3535
      %v3537 = vpop.f32.mrf.mxu0
      %v3538 = vadd.f32 0.0, %v3537
      %3539 = vmatprep.mubr.f32.mxu0 0.0
      %3540 = vmatmul.mubr.f32.gmra.mxu0 %v3396
      %v3541 = vpop.f32.mrf.mxu0
      %v3542 = vadd.f32 0.0, %v3541
      %v3543 = vpop.f32.mrf.mxu0
      %v3544 = vadd.f32 0.0, %v3543
      %3545 = vmatprep.mubr.f32.mxu0 0.0
      %3546 = vmatmul.mubr.f32.gmra.mxu0 %v3397
      %v3547 = vpop.f32.mrf.mxu0
      %v3548 = vadd.f32 0.0, %v3547
      %v3549 = vpop.f32.mrf.mxu0
      %v3550 = vadd.f32 0.0, %v3549
      %3551 = vmatprep.mubr.f32.mxu0 0.0
      %3552 = vmatmul.mubr.f32.gmra.mxu0 %v3398
      %v3553 = vpop.f32.mrf.mxu0
      %v3554 = vadd.f32 0.0, %v3553
      %v3555 = vpop.f32.mrf.mxu0
      %v3556 = vadd.f32 0.0, %v3555
      %3557 = vmatprep.mubr.f32.mxu0 0.0
      %3558 = vmatmul.mubr.f32.gmra.mxu0 %v3399
      %v3559 = vpop.f32.mrf.mxu0
      %v3560 = vadd.f32 0.0, %v3559
      %v3561 = vpop.f32.mrf.mxu0
      %v3562 = vadd.f32 0.0, %v3561
      %3563 = vmatprep.mubr.f32.mxu0 0.0
      %3564 = vmatmul.mubr.f32.gmra.mxu0 %v3400
      %v3565 = vpop.f32.mrf.mxu0
      %v3566 = vadd.f32 0.0, %v3565
      %v3567 = vpop.f32.mrf.mxu0
      %v3568 = vadd.f32 0.0, %v3567
      %3569 = vmatprep.mubr.f32.mxu0 0.0
      %3570 = vmatmul.mubr.f32.gmra.mxu0 %v3401
      %v3571 = vpop.f32.mrf.mxu0
      %v3572 = vadd.f32 0.0, %v3571
      %v3573 = vpop.f32.mrf.mxu0
      %v3574 = vadd.f32 0.0, %v3573
      %3575 = vmatprep.mubr.f32.mxu0 0.0
      %3576 = vmatmul.mubr.f32.gmra.mxu0 %v3402
      %v3577 = vpop.f32.mrf.mxu0
      %v3578 = vadd.f32 0.0, %v3577
      %v3579 = vpop.f32.mrf.mxu0
      %v3580 = vadd.f32 0.0, %v3579
      %3581 = vdwg.mxu0
      %v3582 = vsel %vm3064, %v3488, %v3028
      %v3583 = vsel %vm3065, %v3490, %v3029
      %v3584 = vsel %vm3064, %v3494, %v3030
      %v3585 = vsel %vm3065, %v3496, %v3031
      %v3586 = vsel %vm3064, %v3500, %v3032
      %v3587 = vsel %vm3065, %v3502, %v3033
      %v3588 = vsel %vm3064, %v3506, %v3034
      %v3589 = vsel %vm3065, %v3508, %v3035
      %v3590 = vsel %vm3064, %v3512, %v3036
      %v3591 = vsel %vm3065, %v3514, %v3037
      %v3592 = vsel %vm3064, %v3518, %v3038
      %v3593 = vsel %vm3065, %v3520, %v3039
      %v3594 = vsel %vm3064, %v3524, %v3040
      %v3595 = vsel %vm3065, %v3526, %v3041
      %v3596 = vsel %vm3064, %v3530, %v3042
      %v3597 = vsel %vm3065, %v3532, %v3043
      %v3598 = vsel %vm3064, %v3536, %v3044
      %v3599 = vsel %vm3065, %v3538, %v3045
      %v3600 = vsel %vm3064, %v3542, %v3046
      %v3601 = vsel %vm3065, %v3544, %v3047
      %v3602 = vsel %vm3064, %v3548, %v3048
      %v3603 = vsel %vm3065, %v3550, %v3049
      %v3604 = vsel %vm3064, %v3554, %v3050
      %v3605 = vsel %vm3065, %v3556, %v3051
      %v3606 = vsel %vm3064, %v3560, %v3052
      %v3607 = vsel %vm3065, %v3562, %v3053
      %v3608 = vsel %vm3064, %v3566, %v3054
      %v3609 = vsel %vm3065, %v3568, %v3055
      %v3610 = vsel %vm3064, %v3572, %v3056
      %v3611 = vsel %vm3065, %v3574, %v3057
      %v3612 = vsel %vm3064, %v3578, %v3058
      %v3613 = vsel %vm3065, %v3580, %v3059
      %vm3614 = vcmp.ge.s32.totalorder %v155, 128
      %vm3615 = vcmp.ge.s32.totalorder %v156, 128
      %vm3616 = vcmp.lt.s32.totalorder %v155, 160
      %vm3617 = vcmp.lt.s32.totalorder %v156, 160
      %vm3618 = vmand %vm3614, %vm3616
      %vm3619 = vmand %vm3615, %vm3617
      %v3620 = vsel %vm3618, %v908, 0.0
      %v3621 = vsel %vm3619, %v910, 0.0
      %v3622 = vsel %vm3618, %v912, 0.0
      %v3623 = vsel %vm3619, %v914, 0.0
      %v3624 = vsel %vm3618, %v918, 0.0
      %v3625 = vsel %vm3619, %v920, 0.0
      %v3626 = vsel %vm3618, %v922, 0.0
      %v3627 = vsel %vm3619, %v924, 0.0
      %v3628 = vsel %vm3618, %v928, 0.0
      %v3629 = vsel %vm3619, %v930, 0.0
      %v3630 = vsel %vm3618, %v932, 0.0
      %v3631 = vsel %vm3619, %v934, 0.0
      %v3632 = vsel %vm3618, %v938, 0.0
      %v3633 = vsel %vm3619, %v940, 0.0
      %v3634 = vsel %vm3618, %v942, 0.0
      %v3635 = vsel %vm3619, %v944, 0.0
      %v3636 = vsel %vm3618, %v948, 0.0
      %v3637 = vsel %vm3619, %v950, 0.0
      %v3638 = vsel %vm3618, %v952, 0.0
      %v3639 = vsel %vm3619, %v954, 0.0
      %v3640 = vsel %vm3618, %v958, 0.0
      %v3641 = vsel %vm3619, %v960, 0.0
      %v3642 = vsel %vm3618, %v962, 0.0
      %v3643 = vsel %vm3619, %v964, 0.0
      %v3644 = vsel %vm3618, %v968, 0.0
      %v3645 = vsel %vm3619, %v970, 0.0
      %v3646 = vsel %vm3618, %v972, 0.0
      %v3647 = vsel %vm3619, %v974, 0.0
      %v3648 = vsel %vm3618, %v978, 0.0
      %v3649 = vsel %vm3619, %v980, 0.0
      %v3650 = vsel %vm3618, %v982, 0.0
      %v3651 = vsel %vm3619, %v984, 0.0
      %3652 = vmatprep.subr.mxu0 %v1130
      %3653 = vmatpush1.xpose.msra.mxu0 %v1129
      %3654 = vmatprep.subr.mxu0 %v1128
      %3655 = vmatpush1.xpose.msra.mxu0 %v1127
      %3656 = vmatprep.subr.mxu0 %v1126
      %3657 = vmatpush1.xpose.msra.mxu0 %v1125
      %3658 = vmatprep.subr.mxu0 %v1124
      %3659 = vmatpush1.xpose.msra.mxu0 %v1123
      %3660 = vmatprep.subr.mxu0 %v1122
      %3661 = vmatpush1.xpose.msra.mxu0 %v1121
      %3662 = vmatprep.subr.mxu0 %v1120
      %3663 = vmatpush1.xpose.msra.mxu0 %v1119
      %3664 = vmatprep.subr.mxu0 %v1118
      %3665 = vmatpush1.xpose.msra.mxu0 %v1117
      %3666 = vmatprep.subr.mxu0 %v1116
      %3667 = vmatpush1.xpose.msra.mxu0 %v1115
      %3668 = vmatprep.subr.mxu0 %v1114
      %3669 = vmatpush1.xpose.msra.mxu0 %v1113
      %3670 = vmatprep.subr.mxu0 %v1112
      %3671 = vmatpush1.xpose.msra.mxu0 %v1111
      %3672 = vmatprep.subr.mxu0 %v1110
      %3673 = vmatpush1.xpose.msra.mxu0 %v1109
      %3674 = vmatprep.subr.mxu0 %v1108
      %3675 = vmatpush1.xpose.msra.mxu0 %v1107
      %3676 = vmatprep.subr.mxu0 %v1106
      %3677 = vmatpush1.xpose.msra.mxu0 %v1105
      %3678 = vmatprep.subr.mxu0 %v1104
      %3679 = vmatpush1.xpose.msra.mxu0 %v1103
      %3680 = vmatprep.subr.mxu0 %v1102
      %3681 = vmatpush1.xpose.msra.mxu0 %v1101
      %3682 = vmatprep.subr.mxu0 %v1100
      %3683 = vmatpush1.xpose.msra.mxu0 %v1099
      %3684 = vmatprep.subr.mxu0 0.0
      %3685 = vmatpush2.xpose.msra.mxu0 0.0
      %3686 = vmatprep.subr.mxu0 0.0
      %3687 = vmatpush2.xpose.msra.mxu0 0.0
      %3688 = vmatprep.subr.mxu0 0.0
      %3689 = vmatpush2.xpose.msra.mxu0 0.0
      %3690 = vmatprep.subr.mxu0 0.0
      %3691 = vmatpush2.xpose.msra.mxu0 0.0
      %3692 = vmatprep.subr.mxu0 0.0
      %3693 = vmatpush2.xpose.msra.mxu0 0.0
      %3694 = vmatprep.subr.mxu0 0.0
      %3695 = vmatpush2.xpose.msra.mxu0 0.0
      %3696 = vmatprep.subr.mxu0 0.0
      %3697 = vmatpush2.xpose.msra.mxu0 0.0
      %3698 = vmatprep.subr.mxu0 0.0
      %3699 = vmatpush2.xpose.msra.mxu0 0.0
      %3700 = vmatprep.subr.mxu0 0.0
      %3701 = vmatpush2.xpose.msra.mxu0 0.0
      %3702 = vmatprep.subr.mxu0 0.0
      %3703 = vmatpush2.xpose.msra.mxu0 0.0
      %3704 = vmatprep.subr.mxu0 0.0
      %3705 = vmatpush2.xpose.msra.mxu0 0.0
      %3706 = vmatprep.subr.mxu0 0.0
      %3707 = vmatpush2.xpose.msra.mxu0 0.0
      %3708 = vmatprep.subr.mxu0 0.0
      %3709 = vmatpush2.xpose.msra.mxu0 0.0
      %3710 = vmatprep.subr.mxu0 0.0
      %3711 = vmatpush2.xpose.msra.mxu0 0.0
      %3712 = vmatprep.subr.mxu0 0.0
      %3713 = vmatpush2.xpose.msra.mxu0 0.0
      %3714 = vmatprep.subr.mxu0 0.0
      %3715 = vmatpush2.xpose.msra.mxu0 0.0
      %3716 = vmatprep.mubr.f32.mxu0 %v3621
      %3717 = vmatmul.mubr.f32.gmra.mxu0 %v3620
      %v3718 = vpop.f32.mrf.mxu0
      %v3719 = vadd.f32 0.0, %v3718
      %v3720 = vpop.f32.mrf.mxu0
      %3721 = vmatprep.mubr.f32.mxu0 %v3623
      %3722 = vmatmul.mubr.f32.gmra.mxu0 %v3622
      %v3723 = vpop.f32.mrf.mxu0
      %v3724 = vadd.f32 0.0, %v3723
      %v3725 = vpop.f32.mrf.mxu0
      %3726 = vmatprep.mubr.f32.mxu0 %v3625
      %3727 = vmatmul.mubr.f32.gmra.mxu0 %v3624
      %v3728 = vpop.f32.mrf.mxu0
      %v3729 = vadd.f32 0.0, %v3728
      %v3730 = vpop.f32.mrf.mxu0
      %3731 = vmatprep.mubr.f32.mxu0 %v3627
      %3732 = vmatmul.mubr.f32.gmra.mxu0 %v3626
      %v3733 = vpop.f32.mrf.mxu0
      %v3734 = vadd.f32 0.0, %v3733
      %v3735 = vpop.f32.mrf.mxu0
      %3736 = vmatprep.mubr.f32.mxu0 %v3629
      %3737 = vmatmul.mubr.f32.gmra.mxu0 %v3628
      %v3738 = vpop.f32.mrf.mxu0
      %v3739 = vadd.f32 0.0, %v3738
      %v3740 = vpop.f32.mrf.mxu0
      %3741 = vmatprep.mubr.f32.mxu0 %v3631
      %3742 = vmatmul.mubr.f32.gmra.mxu0 %v3630
      %v3743 = vpop.f32.mrf.mxu0
      %v3744 = vadd.f32 0.0, %v3743
      %v3745 = vpop.f32.mrf.mxu0
      %3746 = vmatprep.mubr.f32.mxu0 %v3633
      %3747 = vmatmul.mubr.f32.gmra.mxu0 %v3632
      %v3748 = vpop.f32.mrf.mxu0
      %v3749 = vadd.f32 0.0, %v3748
      %v3750 = vpop.f32.mrf.mxu0
      %3751 = vmatprep.mubr.f32.mxu0 %v3635
      %3752 = vmatmul.mubr.f32.gmra.mxu0 %v3634
      %v3753 = vpop.f32.mrf.mxu0
      %v3754 = vadd.f32 0.0, %v3753
      %v3755 = vpop.f32.mrf.mxu0
      %3756 = vmatprep.mubr.f32.mxu0 %v3637
      %3757 = vmatmul.mubr.f32.gmra.mxu0 %v3636
      %v3758 = vpop.f32.mrf.mxu0
      %v3759 = vadd.f32 0.0, %v3758
      %v3760 = vpop.f32.mrf.mxu0
      %3761 = vmatprep.mubr.f32.mxu0 %v3639
      %3762 = vmatmul.mubr.f32.gmra.mxu0 %v3638
      %v3763 = vpop.f32.mrf.mxu0
      %v3764 = vadd.f32 0.0, %v3763
      %v3765 = vpop.f32.mrf.mxu0
      %3766 = vmatprep.mubr.f32.mxu0 %v3641
      %3767 = vmatmul.mubr.f32.gmra.mxu0 %v3640
      %v3768 = vpop.f32.mrf.mxu0
      %v3769 = vadd.f32 0.0, %v3768
      %v3770 = vpop.f32.mrf.mxu0
      %3771 = vmatprep.mubr.f32.mxu0 %v3643
      %3772 = vmatmul.mubr.f32.gmra.mxu0 %v3642
      %v3773 = vpop.f32.mrf.mxu0
      %v3774 = vadd.f32 0.0, %v3773
      %v3775 = vpop.f32.mrf.mxu0
      %3776 = vmatprep.mubr.f32.mxu0 %v3645
      %3777 = vmatmul.mubr.f32.gmra.mxu0 %v3644
      %v3778 = vpop.f32.mrf.mxu0
      %v3779 = vadd.f32 0.0, %v3778
      %v3780 = vpop.f32.mrf.mxu0
      %3781 = vmatprep.mubr.f32.mxu0 %v3647
      %3782 = vmatmul.mubr.f32.gmra.mxu0 %v3646
      %v3783 = vpop.f32.mrf.mxu0
      %v3784 = vadd.f32 0.0, %v3783
      %v3785 = vpop.f32.mrf.mxu0
      %3786 = vmatprep.mubr.f32.mxu0 %v3649
      %3787 = vmatmul.mubr.f32.gmra.mxu0 %v3648
      %v3788 = vpop.f32.mrf.mxu0
      %v3789 = vadd.f32 0.0, %v3788
      %v3790 = vpop.f32.mrf.mxu0
      %3791 = vmatprep.mubr.f32.mxu0 %v3651
      %3792 = vmatmul.mubr.f32.gmra.mxu0 %v3650
      %v3793 = vpop.f32.mrf.mxu0
      %v3794 = vadd.f32 0.0, %v3793
      %v3795 = vpop.f32.mrf.mxu0
      %3796 = vdwg.mxu0
      %v3797 = vsel %vm157, %v3719, -1e+30
      %v3798 = vsel %vm157, %v3724, -1e+30
      %v3799 = vsel %vm157, %v3729, -1e+30
      %v3800 = vsel %vm157, %v3734, -1e+30
      %v3801 = vsel %vm157, %v3739, -1e+30
      %v3802 = vsel %vm157, %v3744, -1e+30
      %v3803 = vsel %vm157, %v3749, -1e+30
      %v3804 = vsel %vm157, %v3754, -1e+30
      %v3805 = vsel %vm157, %v3759, -1e+30
      %v3806 = vsel %vm157, %v3764, -1e+30
      %v3807 = vsel %vm157, %v3769, -1e+30
      %v3808 = vsel %vm157, %v3774, -1e+30
      %v3809 = vsel %vm157, %v3779, -1e+30
      %v3810 = vsel %vm157, %v3784, -1e+30
      %v3811 = vsel %vm157, %v3789, -1e+30
      %v3812 = vsel %vm157, %v3794, -1e+30
      %3813 = vmax.xlane.f32.xlu0 %v3797
      %v3814 = vpop.xlane.xlu0 %3813
      %3815 = vmax.xlane.f32.xlu0 %v3798
      %v3816 = vpop.xlane.xlu0 %3815
      %3817 = vmax.xlane.f32.xlu0 %v3799
      %v3818 = vpop.xlane.xlu0 %3817
      %3819 = vmax.xlane.f32.xlu0 %v3800
      %v3820 = vpop.xlane.xlu0 %3819
      %3821 = vmax.xlane.f32.xlu0 %v3801
      %v3822 = vpop.xlane.xlu0 %3821
      %3823 = vmax.xlane.f32.xlu0 %v3802
      %v3824 = vpop.xlane.xlu0 %3823
      %3825 = vmax.xlane.f32.xlu0 %v3803
      %v3826 = vpop.xlane.xlu0 %3825
      %3827 = vmax.xlane.f32.xlu0 %v3804
      %v3828 = vpop.xlane.xlu0 %3827
      %3829 = vmax.xlane.f32.xlu0 %v3805
      %v3830 = vpop.xlane.xlu0 %3829
      %3831 = vmax.xlane.f32.xlu0 %v3806
      %v3832 = vpop.xlane.xlu0 %3831
      %3833 = vmax.xlane.f32.xlu0 %v3807
      %v3834 = vpop.xlane.xlu0 %3833
      %3835 = vmax.xlane.f32.xlu0 %v3808
      %v3836 = vpop.xlane.xlu0 %3835
      %3837 = vmax.xlane.f32.xlu0 %v3809
      %v3838 = vpop.xlane.xlu0 %3837
      %3839 = vmax.xlane.f32.xlu0 %v3810
      %v3840 = vpop.xlane.xlu0 %3839
      %3841 = vmax.xlane.f32.xlu0 %v3811
      %v3842 = vpop.xlane.xlu0 %3841
      %3843 = vmax.xlane.f32.xlu0 %v3812
      %v3844 = vpop.xlane.xlu0 %3843
      %v3845 = vsub.f32 %v3797, %v3814
      %v3846 = vsub.f32 %v3798, %v3816
      %v3847 = vsub.f32 %v3799, %v3818
      %v3848 = vsub.f32 %v3800, %v3820
      %v3849 = vsub.f32 %v3801, %v3822
      %v3850 = vsub.f32 %v3802, %v3824
      %v3851 = vsub.f32 %v3803, %v3826
      %v3852 = vsub.f32 %v3804, %v3828
      %v3853 = vsub.f32 %v3805, %v3830
      %v3854 = vsub.f32 %v3806, %v3832
      %v3855 = vsub.f32 %v3807, %v3834
      %v3856 = vsub.f32 %v3808, %v3836
      %v3857 = vsub.f32 %v3809, %v3838
      %v3858 = vsub.f32 %v3810, %v3840
      %v3859 = vsub.f32 %v3811, %v3842
      %v3860 = vsub.f32 %v3812, %v3844
      %v3861 = vmul.f32 %v3845, 1.442695
      %v3862 = vpow.pop %v3861
      %v3863 = vmul.f32 %v3846, 1.442695
      %v3864 = vpow.pop %v3863
      %v3865 = vmul.f32 %v3847, 1.442695
      %v3866 = vpow.pop %v3865
      %v3867 = vmul.f32 %v3848, 1.442695
      %v3868 = vpow.pop %v3867
      %v3869 = vmul.f32 %v3849, 1.442695
      %v3870 = vpow.pop %v3869
      %v3871 = vmul.f32 %v3850, 1.442695
      %v3872 = vpow.pop %v3871
      %v3873 = vmul.f32 %v3851, 1.442695
      %v3874 = vpow.pop %v3873
      %v3875 = vmul.f32 %v3852, 1.442695
      %v3876 = vpow.pop %v3875
      %v3877 = vmul.f32 %v3853, 1.442695
      %v3878 = vpow.pop %v3877
      %v3879 = vmul.f32 %v3854, 1.442695
      %v3880 = vpow.pop %v3879
      %v3881 = vmul.f32 %v3855, 1.442695
      %v3882 = vpow.pop %v3881
      %v3883 = vmul.f32 %v3856, 1.442695
      %v3884 = vpow.pop %v3883
      %v3885 = vmul.f32 %v3857, 1.442695
      %v3886 = vpow.pop %v3885
      %v3887 = vmul.f32 %v3858, 1.442695
      %v3888 = vpow.pop %v3887
      %v3889 = vmul.f32 %v3859, 1.442695
      %v3890 = vpow.pop %v3889
      %v3891 = vmul.f32 %v3860, 1.442695
      %v3892 = vpow.pop %v3891
      %3893 = vadd.xlane.f32.xlu0 %v3862
      %v3894 = vpop.xlane.xlu0 %3893
      %3895 = vadd.xlane.f32.xlu0 %v3864
      %v3896 = vpop.xlane.xlu0 %3895
      %3897 = vadd.xlane.f32.xlu0 %v3866
      %v3898 = vpop.xlane.xlu0 %3897
      %3899 = vadd.xlane.f32.xlu0 %v3868
      %v3900 = vpop.xlane.xlu0 %3899
      %3901 = vadd.xlane.f32.xlu0 %v3870
      %v3902 = vpop.xlane.xlu0 %3901
      %3903 = vadd.xlane.f32.xlu0 %v3872
      %v3904 = vpop.xlane.xlu0 %3903
      %3905 = vadd.xlane.f32.xlu0 %v3874
      %v3906 = vpop.xlane.xlu0 %3905
      %3907 = vadd.xlane.f32.xlu0 %v3876
      %v3908 = vpop.xlane.xlu0 %3907
      %3909 = vadd.xlane.f32.xlu0 %v3878
      %v3910 = vpop.xlane.xlu0 %3909
      %3911 = vadd.xlane.f32.xlu0 %v3880
      %v3912 = vpop.xlane.xlu0 %3911
      %3913 = vadd.xlane.f32.xlu0 %v3882
      %v3914 = vpop.xlane.xlu0 %3913
      %3915 = vadd.xlane.f32.xlu0 %v3884
      %v3916 = vpop.xlane.xlu0 %3915
      %3917 = vadd.xlane.f32.xlu0 %v3886
      %v3918 = vpop.xlane.xlu0 %3917
      %3919 = vadd.xlane.f32.xlu0 %v3888
      %v3920 = vpop.xlane.xlu0 %3919
      %3921 = vadd.xlane.f32.xlu0 %v3890
      %v3922 = vpop.xlane.xlu0 %3921
      %3923 = vadd.xlane.f32.xlu0 %v3892
      %v3924 = vpop.xlane.xlu0 %3923
      %v3925 = vrcp.pop %v3894
      %v3926 = vrcp.pop %v3896
      %v3927 = vrcp.pop %v3898
      %v3928 = vrcp.pop %v3900
      %v3929 = vrcp.pop %v3902
      %v3930 = vrcp.pop %v3904
      %v3931 = vrcp.pop %v3906
      %v3932 = vrcp.pop %v3908
      %v3933 = vrcp.pop %v3910
      %v3934 = vrcp.pop %v3912
      %v3935 = vrcp.pop %v3914
      %v3936 = vrcp.pop %v3916
      %v3937 = vrcp.pop %v3918
      %v3938 = vrcp.pop %v3920
      %v3939 = vrcp.pop %v3922
      %v3940 = vrcp.pop %v3924
      %v3941 = vmul.f32 %v3862, %v3925
      %v3942 = vmul.f32 %v3864, %v3926
      %v3943 = vmul.f32 %v3866, %v3927
      %v3944 = vmul.f32 %v3868, %v3928
      %v3945 = vmul.f32 %v3870, %v3929
      %v3946 = vmul.f32 %v3872, %v3930
      %v3947 = vmul.f32 %v3874, %v3931
      %v3948 = vmul.f32 %v3876, %v3932
      %v3949 = vmul.f32 %v3878, %v3933
      %v3950 = vmul.f32 %v3880, %v3934
      %v3951 = vmul.f32 %v3882, %v3935
      %v3952 = vmul.f32 %v3884, %v3936
      %v3953 = vmul.f32 %v3886, %v3937
      %v3954 = vmul.f32 %v3888, %v3938
      %v3955 = vmul.f32 %v3890, %v3939
      %v3956 = vmul.f32 %v3892, %v3940
      %s3957 = sadd.s32 512, %s1741
      %s3958 = scalar_lea.vmem [#allocation9], %s3957
      %3959 = vst [vmem:[%s3958] sm:$0xff] %v3941
      %3960 = vst [vmem:[%s3958 + $0x8] sm:$0xff] %v3942
      %3961 = vst [vmem:[%s3958 + $0x10] sm:$0xff] %v3943
      %3962 = vst [vmem:[%s3958 + $0x18] sm:$0xff] %v3944
      %3963 = vst [vmem:[%s3958 + $0x20] sm:$0xff] %v3945
      %3964 = vst [vmem:[%s3958 + $0x28] sm:$0xff] %v3946
      %3965 = vst [vmem:[%s3958 + $0x30] sm:$0xff] %v3947
      %3966 = vst [vmem:[%s3958 + $0x38] sm:$0xff] %v3948
      %3967 = vst [vmem:[%s3958 + $0x40] sm:$0xff] %v3949
      %3968 = vst [vmem:[%s3958 + $0x48] sm:$0xff] %v3950
      %3969 = vst [vmem:[%s3958 + $0x50] sm:$0xff] %v3951
      %3970 = vst [vmem:[%s3958 + $0x58] sm:$0xff] %v3952
      %3971 = vst [vmem:[%s3958 + $0x60] sm:$0xff] %v3953
      %3972 = vst [vmem:[%s3958 + $0x68] sm:$0xff] %v3954
      %3973 = vst [vmem:[%s3958 + $0x70] sm:$0xff] %v3955
      %3974 = vst [vmem:[%s3958 + $0x78] sm:$0xff] %v3956
      %3975 = vmatprep.subr.mxu0 %v984
      %3976 = vmatpush1.msra.mxu0 %v982
      %3977 = vmatprep.subr.mxu0 %v980
      %3978 = vmatpush1.msra.mxu0 %v978
      %3979 = vmatprep.subr.mxu0 %v974
      %3980 = vmatpush1.msra.mxu0 %v972
      %3981 = vmatprep.subr.mxu0 %v970
      %3982 = vmatpush1.msra.mxu0 %v968
      %3983 = vmatprep.subr.mxu0 %v964
      %3984 = vmatpush1.msra.mxu0 %v962
      %3985 = vmatprep.subr.mxu0 %v960
      %3986 = vmatpush1.msra.mxu0 %v958
      %3987 = vmatprep.subr.mxu0 %v954
      %3988 = vmatpush1.msra.mxu0 %v952
      %3989 = vmatprep.subr.mxu0 %v950
      %3990 = vmatpush1.msra.mxu0 %v948
      %3991 = vmatprep.subr.mxu0 %v944
      %3992 = vmatpush1.msra.mxu0 %v942
      %3993 = vmatprep.subr.mxu0 %v940
      %3994 = vmatpush1.msra.mxu0 %v938
      %3995 = vmatprep.subr.mxu0 %v934
      %3996 = vmatpush1.msra.mxu0 %v932
      %3997 = vmatprep.subr.mxu0 %v930
      %3998 = vmatpush1.msra.mxu0 %v928
      %3999 = vmatprep.subr.mxu0 %v924
      %4000 = vmatpush1.msra.mxu0 %v922
      %4001 = vmatprep.subr.mxu0 %v920
      %4002 = vmatpush1.msra.mxu0 %v918
      %4003 = vmatprep.subr.mxu0 %v914
      %4004 = vmatpush1.msra.mxu0 %v912
      %4005 = vmatprep.subr.mxu0 %v910
      %4006 = vmatpush1.msra.mxu0 %v908
      %4007 = vmatprep.subr.mxu0 0.0
      %4008 = vmatpush2.msra.mxu0 0.0
      %4009 = vmatprep.subr.mxu0 0.0
      %4010 = vmatpush2.msra.mxu0 0.0
      %4011 = vmatprep.subr.mxu0 0.0
      %4012 = vmatpush2.msra.mxu0 0.0
      %4013 = vmatprep.subr.mxu0 0.0
      %4014 = vmatpush2.msra.mxu0 0.0
      %4015 = vmatprep.subr.mxu0 0.0
      %4016 = vmatpush2.msra.mxu0 0.0
      %4017 = vmatprep.subr.mxu0 0.0
      %4018 = vmatpush2.msra.mxu0 0.0
      %4019 = vmatprep.subr.mxu0 0.0
      %4020 = vmatpush2.msra.mxu0 0.0
      %4021 = vmatprep.subr.mxu0 0.0
      %4022 = vmatpush2.msra.mxu0 0.0
      %4023 = vmatprep.subr.mxu0 0.0
      %4024 = vmatpush2.msra.mxu0 0.0
      %4025 = vmatprep.subr.mxu0 0.0
      %4026 = vmatpush2.msra.mxu0 0.0
      %4027 = vmatprep.subr.mxu0 0.0
      %4028 = vmatpush2.msra.mxu0 0.0
      %4029 = vmatprep.subr.mxu0 0.0
      %4030 = vmatpush2.msra.mxu0 0.0
      %4031 = vmatprep.subr.mxu0 0.0
      %4032 = vmatpush2.msra.mxu0 0.0
      %4033 = vmatprep.subr.mxu0 0.0
      %4034 = vmatpush2.msra.mxu0 0.0
      %4035 = vmatprep.subr.mxu0 0.0
      %4036 = vmatpush2.msra.mxu0 0.0
      %4037 = vmatprep.subr.mxu0 0.0
      %4038 = vmatpush2.msra.mxu0 0.0
      %4039 = vmatprep.mubr.f32.mxu0 0.0
      %4040 = vmatmul.mubr.f32.gmra.mxu0 %v3941
      %v4041 = vpop.f32.mrf.mxu0
      %v4042 = vadd.f32 0.0, %v4041
      %v4043 = vpop.f32.mrf.mxu0
      %v4044 = vadd.f32 0.0, %v4043
      %4045 = vmatprep.mubr.f32.mxu0 0.0
      %4046 = vmatmul.mubr.f32.gmra.mxu0 %v3942
      %v4047 = vpop.f32.mrf.mxu0
      %v4048 = vadd.f32 0.0, %v4047
      %v4049 = vpop.f32.mrf.mxu0
      %v4050 = vadd.f32 0.0, %v4049
      %4051 = vmatprep.mubr.f32.mxu0 0.0
      %4052 = vmatmul.mubr.f32.gmra.mxu0 %v3943
      %v4053 = vpop.f32.mrf.mxu0
      %v4054 = vadd.f32 0.0, %v4053
      %v4055 = vpop.f32.mrf.mxu0
      %v4056 = vadd.f32 0.0, %v4055
      %4057 = vmatprep.mubr.f32.mxu0 0.0
      %4058 = vmatmul.mubr.f32.gmra.mxu0 %v3944
      %v4059 = vpop.f32.mrf.mxu0
      %v4060 = vadd.f32 0.0, %v4059
      %v4061 = vpop.f32.mrf.mxu0
      %v4062 = vadd.f32 0.0, %v4061
      %4063 = vmatprep.mubr.f32.mxu0 0.0
      %4064 = vmatmul.mubr.f32.gmra.mxu0 %v3945
      %v4065 = vpop.f32.mrf.mxu0
      %v4066 = vadd.f32 0.0, %v4065
      %v4067 = vpop.f32.mrf.mxu0
      %v4068 = vadd.f32 0.0, %v4067
      %4069 = vmatprep.mubr.f32.mxu0 0.0
      %4070 = vmatmul.mubr.f32.gmra.mxu0 %v3946
      %v4071 = vpop.f32.mrf.mxu0
      %v4072 = vadd.f32 0.0, %v4071
      %v4073 = vpop.f32.mrf.mxu0
      %v4074 = vadd.f32 0.0, %v4073
      %4075 = vmatprep.mubr.f32.mxu0 0.0
      %4076 = vmatmul.mubr.f32.gmra.mxu0 %v3947
      %v4077 = vpop.f32.mrf.mxu0
      %v4078 = vadd.f32 0.0, %v4077
      %v4079 = vpop.f32.mrf.mxu0
      %v4080 = vadd.f32 0.0, %v4079
      %4081 = vmatprep.mubr.f32.mxu0 0.0
      %4082 = vmatmul.mubr.f32.gmra.mxu0 %v3948
      %v4083 = vpop.f32.mrf.mxu0
      %v4084 = vadd.f32 0.0, %v4083
      %v4085 = vpop.f32.mrf.mxu0
      %v4086 = vadd.f32 0.0, %v4085
      %4087 = vmatprep.mubr.f32.mxu0 0.0
      %4088 = vmatmul.mubr.f32.gmra.mxu0 %v3949
      %v4089 = vpop.f32.mrf.mxu0
      %v4090 = vadd.f32 0.0, %v4089
      %v4091 = vpop.f32.mrf.mxu0
      %v4092 = vadd.f32 0.0, %v4091
      %4093 = vmatprep.mubr.f32.mxu0 0.0
      %4094 = vmatmul.mubr.f32.gmra.mxu0 %v3950
      %v4095 = vpop.f32.mrf.mxu0
      %v4096 = vadd.f32 0.0, %v4095
      %v4097 = vpop.f32.mrf.mxu0
      %v4098 = vadd.f32 0.0, %v4097
      %4099 = vmatprep.mubr.f32.mxu0 0.0
      %4100 = vmatmul.mubr.f32.gmra.mxu0 %v3951
      %v4101 = vpop.f32.mrf.mxu0
      %v4102 = vadd.f32 0.0, %v4101
      %v4103 = vpop.f32.mrf.mxu0
      %v4104 = vadd.f32 0.0, %v4103
      %4105 = vmatprep.mubr.f32.mxu0 0.0
      %4106 = vmatmul.mubr.f32.gmra.mxu0 %v3952
      %v4107 = vpop.f32.mrf.mxu0
      %v4108 = vadd.f32 0.0, %v4107
      %v4109 = vpop.f32.mrf.mxu0
      %v4110 = vadd.f32 0.0, %v4109
      %4111 = vmatprep.mubr.f32.mxu0 0.0
      %4112 = vmatmul.mubr.f32.gmra.mxu0 %v3953
      %v4113 = vpop.f32.mrf.mxu0
      %v4114 = vadd.f32 0.0, %v4113
      %v4115 = vpop.f32.mrf.mxu0
      %v4116 = vadd.f32 0.0, %v4115
      %4117 = vmatprep.mubr.f32.mxu0 0.0
      %4118 = vmatmul.mubr.f32.gmra.mxu0 %v3954
      %v4119 = vpop.f32.mrf.mxu0
      %v4120 = vadd.f32 0.0, %v4119
      %v4121 = vpop.f32.mrf.mxu0
      %v4122 = vadd.f32 0.0, %v4121
      %4123 = vmatprep.mubr.f32.mxu0 0.0
      %4124 = vmatmul.mubr.f32.gmra.mxu0 %v3955
      %v4125 = vpop.f32.mrf.mxu0
      %v4126 = vadd.f32 0.0, %v4125
      %v4127 = vpop.f32.mrf.mxu0
      %v4128 = vadd.f32 0.0, %v4127
      %4129 = vmatprep.mubr.f32.mxu0 0.0
      %4130 = vmatmul.mubr.f32.gmra.mxu0 %v3956
      %v4131 = vpop.f32.mrf.mxu0
      %v4132 = vadd.f32 0.0, %v4131
      %v4133 = vpop.f32.mrf.mxu0
      %v4134 = vadd.f32 0.0, %v4133
      %4135 = vdwg.mxu0
      %v4136 = vsel %vm3618, %v4042, %v3582
      %v4137 = vsel %vm3619, %v4044, %v3583
      %v4138 = vsel %vm3618, %v4048, %v3584
      %v4139 = vsel %vm3619, %v4050, %v3585
      %v4140 = vsel %vm3618, %v4054, %v3586
      %v4141 = vsel %vm3619, %v4056, %v3587
      %v4142 = vsel %vm3618, %v4060, %v3588
      %v4143 = vsel %vm3619, %v4062, %v3589
      %v4144 = vsel %vm3618, %v4066, %v3590
      %v4145 = vsel %vm3619, %v4068, %v3591
      %v4146 = vsel %vm3618, %v4072, %v3592
      %v4147 = vsel %vm3619, %v4074, %v3593
      %v4148 = vsel %vm3618, %v4078, %v3594
      %v4149 = vsel %vm3619, %v4080, %v3595
      %v4150 = vsel %vm3618, %v4084, %v3596
      %v4151 = vsel %vm3619, %v4086, %v3597
      %v4152 = vsel %vm3618, %v4090, %v3598
      %v4153 = vsel %vm3619, %v4092, %v3599
      %v4154 = vsel %vm3618, %v4096, %v3600
      %v4155 = vsel %vm3619, %v4098, %v3601
      %v4156 = vsel %vm3618, %v4102, %v3602
      %v4157 = vsel %vm3619, %v4104, %v3603
      %v4158 = vsel %vm3618, %v4108, %v3604
      %v4159 = vsel %vm3619, %v4110, %v3605
      %v4160 = vsel %vm3618, %v4114, %v3606
      %v4161 = vsel %vm3619, %v4116, %v3607
      %v4162 = vsel %vm3618, %v4120, %v3608
      %v4163 = vsel %vm3619, %v4122, %v3609
      %v4164 = vsel %vm3618, %v4126, %v3610
      %v4165 = vsel %vm3619, %v4128, %v3611
      %v4166 = vsel %vm3618, %v4132, %v3612
      %v4167 = vsel %vm3619, %v4134, %v3613
      %vm4168 = vcmp.ge.s32.totalorder %v155, 160
      %vm4169 = vcmp.ge.s32.totalorder %v156, 160
      %vm4170 = vcmp.lt.s32.totalorder %v155, 192
      %vm4171 = vcmp.lt.s32.totalorder %v156, 192
      %vm4172 = vmand %vm4168, %vm4170
      %vm4173 = vmand %vm4169, %vm4171
      %v4174 = vsel %vm4172, %v908, 0.0
      %v4175 = vsel %vm4173, %v910, 0.0
      %v4176 = vsel %vm4172, %v912, 0.0
      %v4177 = vsel %vm4173, %v914, 0.0
      %v4178 = vsel %vm4172, %v918, 0.0
      %v4179 = vsel %vm4173, %v920, 0.0
      %v4180 = vsel %vm4172, %v922, 0.0
      %v4181 = vsel %vm4173, %v924, 0.0
      %v4182 = vsel %vm4172, %v928, 0.0
      %v4183 = vsel %vm4173, %v930, 0.0
      %v4184 = vsel %vm4172, %v932, 0.0
      %v4185 = vsel %vm4173, %v934, 0.0
      %v4186 = vsel %vm4172, %v938, 0.0
      %v4187 = vsel %vm4173, %v940, 0.0
      %v4188 = vsel %vm4172, %v942, 0.0
      %v4189 = vsel %vm4173, %v944, 0.0
      %v4190 = vsel %vm4172, %v948, 0.0
      %v4191 = vsel %vm4173, %v950, 0.0
      %v4192 = vsel %vm4172, %v952, 0.0
      %v4193 = vsel %vm4173, %v954, 0.0
      %v4194 = vsel %vm4172, %v958, 0.0
      %v4195 = vsel %vm4173, %v960, 0.0
      %v4196 = vsel %vm4172, %v962, 0.0
      %v4197 = vsel %vm4173, %v964, 0.0
      %v4198 = vsel %vm4172, %v968, 0.0
      %v4199 = vsel %vm4173, %v970, 0.0
      %v4200 = vsel %vm4172, %v972, 0.0
      %v4201 = vsel %vm4173, %v974, 0.0
      %v4202 = vsel %vm4172, %v978, 0.0
      %v4203 = vsel %vm4173, %v980, 0.0
      %v4204 = vsel %vm4172, %v982, 0.0
      %v4205 = vsel %vm4173, %v984, 0.0
      %4206 = vmatprep.subr.mxu0 %v1130
      %4207 = vmatpush1.xpose.msra.mxu0 %v1129
      %4208 = vmatprep.subr.mxu0 %v1128
      %4209 = vmatpush1.xpose.msra.mxu0 %v1127
      %4210 = vmatprep.subr.mxu0 %v1126
      %4211 = vmatpush1.xpose.msra.mxu0 %v1125
      %4212 = vmatprep.subr.mxu0 %v1124
      %4213 = vmatpush1.xpose.msra.mxu0 %v1123
      %4214 = vmatprep.subr.mxu0 %v1122
      %4215 = vmatpush1.xpose.msra.mxu0 %v1121
      %4216 = vmatprep.subr.mxu0 %v1120
      %4217 = vmatpush1.xpose.msra.mxu0 %v1119
      %4218 = vmatprep.subr.mxu0 %v1118
      %4219 = vmatpush1.xpose.msra.mxu0 %v1117
      %4220 = vmatprep.subr.mxu0 %v1116
      %4221 = vmatpush1.xpose.msra.mxu0 %v1115
      %4222 = vmatprep.subr.mxu0 %v1114
      %4223 = vmatpush1.xpose.msra.mxu0 %v1113
      %4224 = vmatprep.subr.mxu0 %v1112
      %4225 = vmatpush1.xpose.msra.mxu0 %v1111
      %4226 = vmatprep.subr.mxu0 %v1110
      %4227 = vmatpush1.xpose.msra.mxu0 %v1109
      %4228 = vmatprep.subr.mxu0 %v1108
      %4229 = vmatpush1.xpose.msra.mxu0 %v1107
      %4230 = vmatprep.subr.mxu0 %v1106
      %4231 = vmatpush1.xpose.msra.mxu0 %v1105
      %4232 = vmatprep.subr.mxu0 %v1104
      %4233 = vmatpush1.xpose.msra.mxu0 %v1103
      %4234 = vmatprep.subr.mxu0 %v1102
      %4235 = vmatpush1.xpose.msra.mxu0 %v1101
      %4236 = vmatprep.subr.mxu0 %v1100
      %4237 = vmatpush1.xpose.msra.mxu0 %v1099
      %4238 = vmatprep.subr.mxu0 0.0
      %4239 = vmatpush2.xpose.msra.mxu0 0.0
      %4240 = vmatprep.subr.mxu0 0.0
      %4241 = vmatpush2.xpose.msra.mxu0 0.0
      %4242 = vmatprep.subr.mxu0 0.0
      %4243 = vmatpush2.xpose.msra.mxu0 0.0
      %4244 = vmatprep.subr.mxu0 0.0
      %4245 = vmatpush2.xpose.msra.mxu0 0.0
      %4246 = vmatprep.subr.mxu0 0.0
      %4247 = vmatpush2.xpose.msra.mxu0 0.0
      %4248 = vmatprep.subr.mxu0 0.0
      %4249 = vmatpush2.xpose.msra.mxu0 0.0
      %4250 = vmatprep.subr.mxu0 0.0
      %4251 = vmatpush2.xpose.msra.mxu0 0.0
      %4252 = vmatprep.subr.mxu0 0.0
      %4253 = vmatpush2.xpose.msra.mxu0 0.0
      %4254 = vmatprep.subr.mxu0 0.0
      %4255 = vmatpush2.xpose.msra.mxu0 0.0
      %4256 = vmatprep.subr.mxu0 0.0
      %4257 = vmatpush2.xpose.msra.mxu0 0.0
      %4258 = vmatprep.subr.mxu0 0.0
      %4259 = vmatpush2.xpose.msra.mxu0 0.0
      %4260 = vmatprep.subr.mxu0 0.0
      %4261 = vmatpush2.xpose.msra.mxu0 0.0
      %4262 = vmatprep.subr.mxu0 0.0
      %4263 = vmatpush2.xpose.msra.mxu0 0.0
      %4264 = vmatprep.subr.mxu0 0.0
      %4265 = vmatpush2.xpose.msra.mxu0 0.0
      %4266 = vmatprep.subr.mxu0 0.0
      %4267 = vmatpush2.xpose.msra.mxu0 0.0
      %4268 = vmatprep.subr.mxu0 0.0
      %4269 = vmatpush2.xpose.msra.mxu0 0.0
      %4270 = vmatprep.mubr.f32.mxu0 %v4175
      %4271 = vmatmul.mubr.f32.gmra.mxu0 %v4174
      %v4272 = vpop.f32.mrf.mxu0
      %v4273 = vadd.f32 0.0, %v4272
      %v4274 = vpop.f32.mrf.mxu0
      %4275 = vmatprep.mubr.f32.mxu0 %v4177
      %4276 = vmatmul.mubr.f32.gmra.mxu0 %v4176
      %v4277 = vpop.f32.mrf.mxu0
      %v4278 = vadd.f32 0.0, %v4277
      %v4279 = vpop.f32.mrf.mxu0
      %4280 = vmatprep.mubr.f32.mxu0 %v4179
      %4281 = vmatmul.mubr.f32.gmra.mxu0 %v4178
      %v4282 = vpop.f32.mrf.mxu0
      %v4283 = vadd.f32 0.0, %v4282
      %v4284 = vpop.f32.mrf.mxu0
      %4285 = vmatprep.mubr.f32.mxu0 %v4181
      %4286 = vmatmul.mubr.f32.gmra.mxu0 %v4180
      %v4287 = vpop.f32.mrf.mxu0
      %v4288 = vadd.f32 0.0, %v4287
      %v4289 = vpop.f32.mrf.mxu0
      %4290 = vmatprep.mubr.f32.mxu0 %v4183
      %4291 = vmatmul.mubr.f32.gmra.mxu0 %v4182
      %v4292 = vpop.f32.mrf.mxu0
      %v4293 = vadd.f32 0.0, %v4292
      %v4294 = vpop.f32.mrf.mxu0
      %4295 = vmatprep.mubr.f32.mxu0 %v4185
      %4296 = vmatmul.mubr.f32.gmra.mxu0 %v4184
      %v4297 = vpop.f32.mrf.mxu0
      %v4298 = vadd.f32 0.0, %v4297
      %v4299 = vpop.f32.mrf.mxu0
      %4300 = vmatprep.mubr.f32.mxu0 %v4187
      %4301 = vmatmul.mubr.f32.gmra.mxu0 %v4186
      %v4302 = vpop.f32.mrf.mxu0
      %v4303 = vadd.f32 0.0, %v4302
      %v4304 = vpop.f32.mrf.mxu0
      %4305 = vmatprep.mubr.f32.mxu0 %v4189
      %4306 = vmatmul.mubr.f32.gmra.mxu0 %v4188
      %v4307 = vpop.f32.mrf.mxu0
      %v4308 = vadd.f32 0.0, %v4307
      %v4309 = vpop.f32.mrf.mxu0
      %4310 = vmatprep.mubr.f32.mxu0 %v4191
      %4311 = vmatmul.mubr.f32.gmra.mxu0 %v4190
      %v4312 = vpop.f32.mrf.mxu0
      %v4313 = vadd.f32 0.0, %v4312
      %v4314 = vpop.f32.mrf.mxu0
      %4315 = vmatprep.mubr.f32.mxu0 %v4193
      %4316 = vmatmul.mubr.f32.gmra.mxu0 %v4192
      %v4317 = vpop.f32.mrf.mxu0
      %v4318 = vadd.f32 0.0, %v4317
      %v4319 = vpop.f32.mrf.mxu0
      %4320 = vmatprep.mubr.f32.mxu0 %v4195
      %4321 = vmatmul.mubr.f32.gmra.mxu0 %v4194
      %v4322 = vpop.f32.mrf.mxu0
      %v4323 = vadd.f32 0.0, %v4322
      %v4324 = vpop.f32.mrf.mxu0
      %4325 = vmatprep.mubr.f32.mxu0 %v4197
      %4326 = vmatmul.mubr.f32.gmra.mxu0 %v4196
      %v4327 = vpop.f32.mrf.mxu0
      %v4328 = vadd.f32 0.0, %v4327
      %v4329 = vpop.f32.mrf.mxu0
      %4330 = vmatprep.mubr.f32.mxu0 %v4199
      %4331 = vmatmul.mubr.f32.gmra.mxu0 %v4198
      %v4332 = vpop.f32.mrf.mxu0
      %v4333 = vadd.f32 0.0, %v4332
      %v4334 = vpop.f32.mrf.mxu0
      %4335 = vmatprep.mubr.f32.mxu0 %v4201
      %4336 = vmatmul.mubr.f32.gmra.mxu0 %v4200
      %v4337 = vpop.f32.mrf.mxu0
      %v4338 = vadd.f32 0.0, %v4337
      %v4339 = vpop.f32.mrf.mxu0
      %4340 = vmatprep.mubr.f32.mxu0 %v4203
      %4341 = vmatmul.mubr.f32.gmra.mxu0 %v4202
      %v4342 = vpop.f32.mrf.mxu0
      %v4343 = vadd.f32 0.0, %v4342
      %v4344 = vpop.f32.mrf.mxu0
      %4345 = vmatprep.mubr.f32.mxu0 %v4205
      %4346 = vmatmul.mubr.f32.gmra.mxu0 %v4204
      %v4347 = vpop.f32.mrf.mxu0
      %v4348 = vadd.f32 0.0, %v4347
      %v4349 = vpop.f32.mrf.mxu0
      %4350 = vdwg.mxu0
      %v4351 = vsel %vm157, %v4273, -1e+30
      %v4352 = vsel %vm157, %v4278, -1e+30
      %v4353 = vsel %vm157, %v4283, -1e+30
      %v4354 = vsel %vm157, %v4288, -1e+30
      %v4355 = vsel %vm157, %v4293, -1e+30
      %v4356 = vsel %vm157, %v4298, -1e+30
      %v4357 = vsel %vm157, %v4303, -1e+30
      %v4358 = vsel %vm157, %v4308, -1e+30
      %v4359 = vsel %vm157, %v4313, -1e+30
      %v4360 = vsel %vm157, %v4318, -1e+30
      %v4361 = vsel %vm157, %v4323, -1e+30
      %v4362 = vsel %vm157, %v4328, -1e+30
      %v4363 = vsel %vm157, %v4333, -1e+30
      %v4364 = vsel %vm157, %v4338, -1e+30
      %v4365 = vsel %vm157, %v4343, -1e+30
      %v4366 = vsel %vm157, %v4348, -1e+30
      %4367 = vmax.xlane.f32.xlu0 %v4351
      %v4368 = vpop.xlane.xlu0 %4367
      %4369 = vmax.xlane.f32.xlu0 %v4352
      %v4370 = vpop.xlane.xlu0 %4369
      %4371 = vmax.xlane.f32.xlu0 %v4353
      %v4372 = vpop.xlane.xlu0 %4371
      %4373 = vmax.xlane.f32.xlu0 %v4354
      %v4374 = vpop.xlane.xlu0 %4373
      %4375 = vmax.xlane.f32.xlu0 %v4355
      %v4376 = vpop.xlane.xlu0 %4375
      %4377 = vmax.xlane.f32.xlu0 %v4356
      %v4378 = vpop.xlane.xlu0 %4377
      %4379 = vmax.xlane.f32.xlu0 %v4357
      %v4380 = vpop.xlane.xlu0 %4379
      %4381 = vmax.xlane.f32.xlu0 %v4358
      %v4382 = vpop.xlane.xlu0 %4381
      %4383 = vmax.xlane.f32.xlu0 %v4359
      %v4384 = vpop.xlane.xlu0 %4383
      %4385 = vmax.xlane.f32.xlu0 %v4360
      %v4386 = vpop.xlane.xlu0 %4385
      %4387 = vmax.xlane.f32.xlu0 %v4361
      %v4388 = vpop.xlane.xlu0 %4387
      %4389 = vmax.xlane.f32.xlu0 %v4362
      %v4390 = vpop.xlane.xlu0 %4389
      %4391 = vmax.xlane.f32.xlu0 %v4363
      %v4392 = vpop.xlane.xlu0 %4391
      %4393 = vmax.xlane.f32.xlu0 %v4364
      %v4394 = vpop.xlane.xlu0 %4393
      %4395 = vmax.xlane.f32.xlu0 %v4365
      %v4396 = vpop.xlane.xlu0 %4395
      %4397 = vmax.xlane.f32.xlu0 %v4366
      %v4398 = vpop.xlane.xlu0 %4397
      %v4399 = vsub.f32 %v4351, %v4368
      %v4400 = vsub.f32 %v4352, %v4370
      %v4401 = vsub.f32 %v4353, %v4372
      %v4402 = vsub.f32 %v4354, %v4374
      %v4403 = vsub.f32 %v4355, %v4376
      %v4404 = vsub.f32 %v4356, %v4378
      %v4405 = vsub.f32 %v4357, %v4380
      %v4406 = vsub.f32 %v4358, %v4382
      %v4407 = vsub.f32 %v4359, %v4384
      %v4408 = vsub.f32 %v4360, %v4386
      %v4409 = vsub.f32 %v4361, %v4388
      %v4410 = vsub.f32 %v4362, %v4390
      %v4411 = vsub.f32 %v4363, %v4392
      %v4412 = vsub.f32 %v4364, %v4394
      %v4413 = vsub.f32 %v4365, %v4396
      %v4414 = vsub.f32 %v4366, %v4398
      %v4415 = vmul.f32 %v4399, 1.442695
      %v4416 = vpow.pop %v4415
      %v4417 = vmul.f32 %v4400, 1.442695
      %v4418 = vpow.pop %v4417
      %v4419 = vmul.f32 %v4401, 1.442695
      %v4420 = vpow.pop %v4419
      %v4421 = vmul.f32 %v4402, 1.442695
      %v4422 = vpow.pop %v4421
      %v4423 = vmul.f32 %v4403, 1.442695
      %v4424 = vpow.pop %v4423
      %v4425 = vmul.f32 %v4404, 1.442695
      %v4426 = vpow.pop %v4425
      %v4427 = vmul.f32 %v4405, 1.442695
      %v4428 = vpow.pop %v4427
      %v4429 = vmul.f32 %v4406, 1.442695
      %v4430 = vpow.pop %v4429
      %v4431 = vmul.f32 %v4407, 1.442695
      %v4432 = vpow.pop %v4431
      %v4433 = vmul.f32 %v4408, 1.442695
      %v4434 = vpow.pop %v4433
      %v4435 = vmul.f32 %v4409, 1.442695
      %v4436 = vpow.pop %v4435
      %v4437 = vmul.f32 %v4410, 1.442695
      %v4438 = vpow.pop %v4437
      %v4439 = vmul.f32 %v4411, 1.442695
      %v4440 = vpow.pop %v4439
      %v4441 = vmul.f32 %v4412, 1.442695
      %v4442 = vpow.pop %v4441
      %v4443 = vmul.f32 %v4413, 1.442695
      %v4444 = vpow.pop %v4443
      %v4445 = vmul.f32 %v4414, 1.442695
      %v4446 = vpow.pop %v4445
      %4447 = vadd.xlane.f32.xlu0 %v4416
      %v4448 = vpop.xlane.xlu0 %4447
      %4449 = vadd.xlane.f32.xlu0 %v4418
      %v4450 = vpop.xlane.xlu0 %4449
      %4451 = vadd.xlane.f32.xlu0 %v4420
      %v4452 = vpop.xlane.xlu0 %4451
      %4453 = vadd.xlane.f32.xlu0 %v4422
      %v4454 = vpop.xlane.xlu0 %4453
      %4455 = vadd.xlane.f32.xlu0 %v4424
      %v4456 = vpop.xlane.xlu0 %4455
      %4457 = vadd.xlane.f32.xlu0 %v4426
      %v4458 = vpop.xlane.xlu0 %4457
      %4459 = vadd.xlane.f32.xlu0 %v4428
      %v4460 = vpop.xlane.xlu0 %4459
      %4461 = vadd.xlane.f32.xlu0 %v4430
      %v4462 = vpop.xlane.xlu0 %4461
      %4463 = vadd.xlane.f32.xlu0 %v4432
      %v4464 = vpop.xlane.xlu0 %4463
      %4465 = vadd.xlane.f32.xlu0 %v4434
      %v4466 = vpop.xlane.xlu0 %4465
      %4467 = vadd.xlane.f32.xlu0 %v4436
      %v4468 = vpop.xlane.xlu0 %4467
      %4469 = vadd.xlane.f32.xlu0 %v4438
      %v4470 = vpop.xlane.xlu0 %4469
      %4471 = vadd.xlane.f32.xlu0 %v4440
      %v4472 = vpop.xlane.xlu0 %4471
      %4473 = vadd.xlane.f32.xlu0 %v4442
      %v4474 = vpop.xlane.xlu0 %4473
      %4475 = vadd.xlane.f32.xlu0 %v4444
      %v4476 = vpop.xlane.xlu0 %4475
      %4477 = vadd.xlane.f32.xlu0 %v4446
      %v4478 = vpop.xlane.xlu0 %4477
      %v4479 = vrcp.pop %v4448
      %v4480 = vrcp.pop %v4450
      %v4481 = vrcp.pop %v4452
      %v4482 = vrcp.pop %v4454
      %v4483 = vrcp.pop %v4456
      %v4484 = vrcp.pop %v4458
      %v4485 = vrcp.pop %v4460
      %v4486 = vrcp.pop %v4462
      %v4487 = vrcp.pop %v4464
      %v4488 = vrcp.pop %v4466
      %v4489 = vrcp.pop %v4468
      %v4490 = vrcp.pop %v4470
      %v4491 = vrcp.pop %v4472
      %v4492 = vrcp.pop %v4474
      %v4493 = vrcp.pop %v4476
      %v4494 = vrcp.pop %v4478
      %v4495 = vmul.f32 %v4416, %v4479
      %v4496 = vmul.f32 %v4418, %v4480
      %v4497 = vmul.f32 %v4420, %v4481
      %v4498 = vmul.f32 %v4422, %v4482
      %v4499 = vmul.f32 %v4424, %v4483
      %v4500 = vmul.f32 %v4426, %v4484
      %v4501 = vmul.f32 %v4428, %v4485
      %v4502 = vmul.f32 %v4430, %v4486
      %v4503 = vmul.f32 %v4432, %v4487
      %v4504 = vmul.f32 %v4434, %v4488
      %v4505 = vmul.f32 %v4436, %v4489
      %v4506 = vmul.f32 %v4438, %v4490
      %v4507 = vmul.f32 %v4440, %v4491
      %v4508 = vmul.f32 %v4442, %v4492
      %v4509 = vmul.f32 %v4444, %v4493
      %v4510 = vmul.f32 %v4446, %v4494
      %s4511 = sadd.s32 640, %s1741
      %s4512 = scalar_lea.vmem [#allocation9], %s4511
      %4513 = vst [vmem:[%s4512] sm:$0xff] %v4495
      %4514 = vst [vmem:[%s4512 + $0x8] sm:$0xff] %v4496
      %4515 = vst [vmem:[%s4512 + $0x10] sm:$0xff] %v4497
      %4516 = vst [vmem:[%s4512 + $0x18] sm:$0xff] %v4498
      %4517 = vst [vmem:[%s4512 + $0x20] sm:$0xff] %v4499
      %4518 = vst [vmem:[%s4512 + $0x28] sm:$0xff] %v4500
      %4519 = vst [vmem:[%s4512 + $0x30] sm:$0xff] %v4501
      %4520 = vst [vmem:[%s4512 + $0x38] sm:$0xff] %v4502
      %4521 = vst [vmem:[%s4512 + $0x40] sm:$0xff] %v4503
      %4522 = vst [vmem:[%s4512 + $0x48] sm:$0xff] %v4504
      %4523 = vst [vmem:[%s4512 + $0x50] sm:$0xff] %v4505
      %4524 = vst [vmem:[%s4512 + $0x58] sm:$0xff] %v4506
      %4525 = vst [vmem:[%s4512 + $0x60] sm:$0xff] %v4507
      %4526 = vst [vmem:[%s4512 + $0x68] sm:$0xff] %v4508
      %4527 = vst [vmem:[%s4512 + $0x70] sm:$0xff] %v4509
      %4528 = vst [vmem:[%s4512 + $0x78] sm:$0xff] %v4510
      %4529 = vmatprep.subr.mxu0 %v984
      %4530 = vmatpush1.msra.mxu0 %v982
      %4531 = vmatprep.subr.mxu0 %v980
      %4532 = vmatpush1.msra.mxu0 %v978
      %4533 = vmatprep.subr.mxu0 %v974
      %4534 = vmatpush1.msra.mxu0 %v972
      %4535 = vmatprep.subr.mxu0 %v970
      %4536 = vmatpush1.msra.mxu0 %v968
      %4537 = vmatprep.subr.mxu0 %v964
      %4538 = vmatpush1.msra.mxu0 %v962
      %4539 = vmatprep.subr.mxu0 %v960
      %4540 = vmatpush1.msra.mxu0 %v958
      %4541 = vmatprep.subr.mxu0 %v954
      %4542 = vmatpush1.msra.mxu0 %v952
      %4543 = vmatprep.subr.mxu0 %v950
      %4544 = vmatpush1.msra.mxu0 %v948
      %4545 = vmatprep.subr.mxu0 %v944
      %4546 = vmatpush1.msra.mxu0 %v942
      %4547 = vmatprep.subr.mxu0 %v940
      %4548 = vmatpush1.msra.mxu0 %v938
      %4549 = vmatprep.subr.mxu0 %v934
      %4550 = vmatpush1.msra.mxu0 %v932
      %4551 = vmatprep.subr.mxu0 %v930
      %4552 = vmatpush1.msra.mxu0 %v928
      %4553 = vmatprep.subr.mxu0 %v924
      %4554 = vmatpush1.msra.mxu0 %v922
      %4555 = vmatprep.subr.mxu0 %v920
      %4556 = vmatpush1.msra.mxu0 %v918
      %4557 = vmatprep.subr.mxu0 %v914
      %4558 = vmatpush1.msra.mxu0 %v912
      %4559 = vmatprep.subr.mxu0 %v910
      %4560 = vmatpush1.msra.mxu0 %v908
      %4561 = vmatprep.subr.mxu0 0.0
      %4562 = vmatpush2.msra.mxu0 0.0
      %4563 = vmatprep.subr.mxu0 0.0
      %4564 = vmatpush2.msra.mxu0 0.0
      %4565 = vmatprep.subr.mxu0 0.0
      %4566 = vmatpush2.msra.mxu0 0.0
      %4567 = vmatprep.subr.mxu0 0.0
      %4568 = vmatpush2.msra.mxu0 0.0
      %4569 = vmatprep.subr.mxu0 0.0
      %4570 = vmatpush2.msra.mxu0 0.0
      %4571 = vmatprep.subr.mxu0 0.0
      %4572 = vmatpush2.msra.mxu0 0.0
      %4573 = vmatprep.subr.mxu0 0.0
      %4574 = vmatpush2.msra.mxu0 0.0
      %4575 = vmatprep.subr.mxu0 0.0
      %4576 = vmatpush2.msra.mxu0 0.0
      %4577 = vmatprep.subr.mxu0 0.0
      %4578 = vmatpush2.msra.mxu0 0.0
      %4579 = vmatprep.subr.mxu0 0.0
      %4580 = vmatpush2.msra.mxu0 0.0
      %4581 = vmatprep.subr.mxu0 0.0
      %4582 = vmatpush2.msra.mxu0 0.0
      %4583 = vmatprep.subr.mxu0 0.0
      %4584 = vmatpush2.msra.mxu0 0.0
      %4585 = vmatprep.subr.mxu0 0.0
      %4586 = vmatpush2.msra.mxu0 0.0
      %4587 = vmatprep.subr.mxu0 0.0
      %4588 = vmatpush2.msra.mxu0 0.0
      %4589 = vmatprep.subr.mxu0 0.0
      %4590 = vmatpush2.msra.mxu0 0.0
      %4591 = vmatprep.subr.mxu0 0.0
      %4592 = vmatpush2.msra.mxu0 0.0
      %4593 = vmatprep.mubr.f32.mxu0 0.0
      %4594 = vmatmul.mubr.f32.gmra.mxu0 %v4495
      %v4595 = vpop.f32.mrf.mxu0
      %v4596 = vadd.f32 0.0, %v4595
      %v4597 = vpop.f32.mrf.mxu0
      %v4598 = vadd.f32 0.0, %v4597
      %4599 = vmatprep.mubr.f32.mxu0 0.0
      %4600 = vmatmul.mubr.f32.gmra.mxu0 %v4496
      %v4601 = vpop.f32.mrf.mxu0
      %v4602 = vadd.f32 0.0, %v4601
      %v4603 = vpop.f32.mrf.mxu0
      %v4604 = vadd.f32 0.0, %v4603
      %4605 = vmatprep.mubr.f32.mxu0 0.0
      %4606 = vmatmul.mubr.f32.gmra.mxu0 %v4497
      %v4607 = vpop.f32.mrf.mxu0
      %v4608 = vadd.f32 0.0, %v4607
      %v4609 = vpop.f32.mrf.mxu0
      %v4610 = vadd.f32 0.0, %v4609
      %4611 = vmatprep.mubr.f32.mxu0 0.0
      %4612 = vmatmul.mubr.f32.gmra.mxu0 %v4498
      %v4613 = vpop.f32.mrf.mxu0
      %v4614 = vadd.f32 0.0, %v4613
      %v4615 = vpop.f32.mrf.mxu0
      %v4616 = vadd.f32 0.0, %v4615
      %4617 = vmatprep.mubr.f32.mxu0 0.0
      %4618 = vmatmul.mubr.f32.gmra.mxu0 %v4499
      %v4619 = vpop.f32.mrf.mxu0
      %v4620 = vadd.f32 0.0, %v4619
      %v4621 = vpop.f32.mrf.mxu0
      %v4622 = vadd.f32 0.0, %v4621
      %4623 = vmatprep.mubr.f32.mxu0 0.0
      %4624 = vmatmul.mubr.f32.gmra.mxu0 %v4500
      %v4625 = vpop.f32.mrf.mxu0
      %v4626 = vadd.f32 0.0, %v4625
      %v4627 = vpop.f32.mrf.mxu0
      %v4628 = vadd.f32 0.0, %v4627
      %4629 = vmatprep.mubr.f32.mxu0 0.0
      %4630 = vmatmul.mubr.f32.gmra.mxu0 %v4501
      %v4631 = vpop.f32.mrf.mxu0
      %v4632 = vadd.f32 0.0, %v4631
      %v4633 = vpop.f32.mrf.mxu0
      %v4634 = vadd.f32 0.0, %v4633
      %4635 = vmatprep.mubr.f32.mxu0 0.0
      %4636 = vmatmul.mubr.f32.gmra.mxu0 %v4502
      %v4637 = vpop.f32.mrf.mxu0
      %v4638 = vadd.f32 0.0, %v4637
      %v4639 = vpop.f32.mrf.mxu0
      %v4640 = vadd.f32 0.0, %v4639
      %4641 = vmatprep.mubr.f32.mxu0 0.0
      %4642 = vmatmul.mubr.f32.gmra.mxu0 %v4503
      %v4643 = vpop.f32.mrf.mxu0
      %v4644 = vadd.f32 0.0, %v4643
      %v4645 = vpop.f32.mrf.mxu0
      %v4646 = vadd.f32 0.0, %v4645
      %4647 = vmatprep.mubr.f32.mxu0 0.0
      %4648 = vmatmul.mubr.f32.gmra.mxu0 %v4504
      %v4649 = vpop.f32.mrf.mxu0
      %v4650 = vadd.f32 0.0, %v4649
      %v4651 = vpop.f32.mrf.mxu0
      %v4652 = vadd.f32 0.0, %v4651
      %4653 = vmatprep.mubr.f32.mxu0 0.0
      %4654 = vmatmul.mubr.f32.gmra.mxu0 %v4505
      %v4655 = vpop.f32.mrf.mxu0
      %v4656 = vadd.f32 0.0, %v4655
      %v4657 = vpop.f32.mrf.mxu0
      %v4658 = vadd.f32 0.0, %v4657
      %4659 = vmatprep.mubr.f32.mxu0 0.0
      %4660 = vmatmul.mubr.f32.gmra.mxu0 %v4506
      %v4661 = vpop.f32.mrf.mxu0
      %v4662 = vadd.f32 0.0, %v4661
      %v4663 = vpop.f32.mrf.mxu0
      %v4664 = vadd.f32 0.0, %v4663
      %4665 = vmatprep.mubr.f32.mxu0 0.0
      %4666 = vmatmul.mubr.f32.gmra.mxu0 %v4507
      %v4667 = vpop.f32.mrf.mxu0
      %v4668 = vadd.f32 0.0, %v4667
      %v4669 = vpop.f32.mrf.mxu0
      %v4670 = vadd.f32 0.0, %v4669
      %4671 = vmatprep.mubr.f32.mxu0 0.0
      %4672 = vmatmul.mubr.f32.gmra.mxu0 %v4508
      %v4673 = vpop.f32.mrf.mxu0
      %v4674 = vadd.f32 0.0, %v4673
      %v4675 = vpop.f32.mrf.mxu0
      %v4676 = vadd.f32 0.0, %v4675
      %4677 = vmatprep.mubr.f32.mxu0 0.0
      %4678 = vmatmul.mubr.f32.gmra.mxu0 %v4509
      %v4679 = vpop.f32.mrf.mxu0
      %v4680 = vadd.f32 0.0, %v4679
      %v4681 = vpop.f32.mrf.mxu0
      %v4682 = vadd.f32 0.0, %v4681
      %4683 = vmatprep.mubr.f32.mxu0 0.0
      %4684 = vmatmul.mubr.f32.gmra.mxu0 %v4510
      %v4685 = vpop.f32.mrf.mxu0
      %v4686 = vadd.f32 0.0, %v4685
      %v4687 = vpop.f32.mrf.mxu0
      %v4688 = vadd.f32 0.0, %v4687
      %4689 = vdwg.mxu0
      %v4690 = vsel %vm4172, %v4596, %v4136
      %v4691 = vsel %vm4173, %v4598, %v4137
      %v4692 = vsel %vm4172, %v4602, %v4138
      %v4693 = vsel %vm4173, %v4604, %v4139
      %v4694 = vsel %vm4172, %v4608, %v4140
      %v4695 = vsel %vm4173, %v4610, %v4141
      %v4696 = vsel %vm4172, %v4614, %v4142
      %v4697 = vsel %vm4173, %v4616, %v4143
      %v4698 = vsel %vm4172, %v4620, %v4144
      %v4699 = vsel %vm4173, %v4622, %v4145
      %v4700 = vsel %vm4172, %v4626, %v4146
      %v4701 = vsel %vm4173, %v4628, %v4147
      %v4702 = vsel %vm4172, %v4632, %v4148
      %v4703 = vsel %vm4173, %v4634, %v4149
      %v4704 = vsel %vm4172, %v4638, %v4150
      %v4705 = vsel %vm4173, %v4640, %v4151
      %v4706 = vsel %vm4172, %v4644, %v4152
      %v4707 = vsel %vm4173, %v4646, %v4153
      %v4708 = vsel %vm4172, %v4650, %v4154
      %v4709 = vsel %vm4173, %v4652, %v4155
      %v4710 = vsel %vm4172, %v4656, %v4156
      %v4711 = vsel %vm4173, %v4658, %v4157
      %v4712 = vsel %vm4172, %v4662, %v4158
      %v4713 = vsel %vm4173, %v4664, %v4159
      %v4714 = vsel %vm4172, %v4668, %v4160
      %v4715 = vsel %vm4173, %v4670, %v4161
      %v4716 = vsel %vm4172, %v4674, %v4162
      %v4717 = vsel %vm4173, %v4676, %v4163
      %v4718 = vsel %vm4172, %v4680, %v4164
      %v4719 = vsel %vm4173, %v4682, %v4165
      %v4720 = vsel %vm4172, %v4686, %v4166
      %v4721 = vsel %vm4173, %v4688, %v4167
      %vm4722 = vcmp.ge.s32.totalorder %v155, 192
      %vm4723 = vcmp.ge.s32.totalorder %v156, 192
      %vm4724 = vcmp.lt.s32.totalorder %v155, 224
      %vm4725 = vcmp.lt.s32.totalorder %v156, 224
      %vm4726 = vmand %vm4722, %vm4724
      %vm4727 = vmand %vm4723, %vm4725
      %v4728 = vsel %vm4726, %v908, 0.0
      %v4729 = vsel %vm4727, %v910, 0.0
      %v4730 = vsel %vm4726, %v912, 0.0
      %v4731 = vsel %vm4727, %v914, 0.0
      %v4732 = vsel %vm4726, %v918, 0.0
      %v4733 = vsel %vm4727, %v920, 0.0
      %v4734 = vsel %vm4726, %v922, 0.0
      %v4735 = vsel %vm4727, %v924, 0.0
      %v4736 = vsel %vm4726, %v928, 0.0
      %v4737 = vsel %vm4727, %v930, 0.0
      %v4738 = vsel %vm4726, %v932, 0.0
      %v4739 = vsel %vm4727, %v934, 0.0
      %v4740 = vsel %vm4726, %v938, 0.0
      %v4741 = vsel %vm4727, %v940, 0.0
      %v4742 = vsel %vm4726, %v942, 0.0
      %v4743 = vsel %vm4727, %v944, 0.0
      %v4744 = vsel %vm4726, %v948, 0.0
      %v4745 = vsel %vm4727, %v950, 0.0
      %v4746 = vsel %vm4726, %v952, 0.0
      %v4747 = vsel %vm4727, %v954, 0.0
      %v4748 = vsel %vm4726, %v958, 0.0
      %v4749 = vsel %vm4727, %v960, 0.0
      %v4750 = vsel %vm4726, %v962, 0.0
      %v4751 = vsel %vm4727, %v964, 0.0
      %v4752 = vsel %vm4726, %v968, 0.0
      %v4753 = vsel %vm4727, %v970, 0.0
      %v4754 = vsel %vm4726, %v972, 0.0
      %v4755 = vsel %vm4727, %v974, 0.0
      %v4756 = vsel %vm4726, %v978, 0.0
      %v4757 = vsel %vm4727, %v980, 0.0
      %v4758 = vsel %vm4726, %v982, 0.0
      %v4759 = vsel %vm4727, %v984, 0.0
      %4760 = vmatprep.subr.mxu0 %v1130
      %4761 = vmatpush1.xpose.msra.mxu0 %v1129
      %4762 = vmatprep.subr.mxu0 %v1128
      %4763 = vmatpush1.xpose.msra.mxu0 %v1127
      %4764 = vmatprep.subr.mxu0 %v1126
      %4765 = vmatpush1.xpose.msra.mxu0 %v1125
      %4766 = vmatprep.subr.mxu0 %v1124
      %4767 = vmatpush1.xpose.msra.mxu0 %v1123
      %4768 = vmatprep.subr.mxu0 %v1122
      %4769 = vmatpush1.xpose.msra.mxu0 %v1121
      %4770 = vmatprep.subr.mxu0 %v1120
      %4771 = vmatpush1.xpose.msra.mxu0 %v1119
      %4772 = vmatprep.subr.mxu0 %v1118
      %4773 = vmatpush1.xpose.msra.mxu0 %v1117
      %4774 = vmatprep.subr.mxu0 %v1116
      %4775 = vmatpush1.xpose.msra.mxu0 %v1115
      %4776 = vmatprep.subr.mxu0 %v1114
      %4777 = vmatpush1.xpose.msra.mxu0 %v1113
      %4778 = vmatprep.subr.mxu0 %v1112
      %4779 = vmatpush1.xpose.msra.mxu0 %v1111
      %4780 = vmatprep.subr.mxu0 %v1110
      %4781 = vmatpush1.xpose.msra.mxu0 %v1109
      %4782 = vmatprep.subr.mxu0 %v1108
      %4783 = vmatpush1.xpose.msra.mxu0 %v1107
      %4784 = vmatprep.subr.mxu0 %v1106
      %4785 = vmatpush1.xpose.msra.mxu0 %v1105
      %4786 = vmatprep.subr.mxu0 %v1104
      %4787 = vmatpush1.xpose.msra.mxu0 %v1103
      %4788 = vmatprep.subr.mxu0 %v1102
      %4789 = vmatpush1.xpose.msra.mxu0 %v1101
      %4790 = vmatprep.subr.mxu0 %v1100
      %4791 = vmatpush1.xpose.msra.mxu0 %v1099
      %4792 = vmatprep.subr.mxu0 0.0
      %4793 = vmatpush2.xpose.msra.mxu0 0.0
      %4794 = vmatprep.subr.mxu0 0.0
      %4795 = vmatpush2.xpose.msra.mxu0 0.0
      %4796 = vmatprep.subr.mxu0 0.0
      %4797 = vmatpush2.xpose.msra.mxu0 0.0
      %4798 = vmatprep.subr.mxu0 0.0
      %4799 = vmatpush2.xpose.msra.mxu0 0.0
      %4800 = vmatprep.subr.mxu0 0.0
      %4801 = vmatpush2.xpose.msra.mxu0 0.0
      %4802 = vmatprep.subr.mxu0 0.0
      %4803 = vmatpush2.xpose.msra.mxu0 0.0
      %4804 = vmatprep.subr.mxu0 0.0
      %4805 = vmatpush2.xpose.msra.mxu0 0.0
      %4806 = vmatprep.subr.mxu0 0.0
      %4807 = vmatpush2.xpose.msra.mxu0 0.0
      %4808 = vmatprep.subr.mxu0 0.0
      %4809 = vmatpush2.xpose.msra.mxu0 0.0
      %4810 = vmatprep.subr.mxu0 0.0
      %4811 = vmatpush2.xpose.msra.mxu0 0.0
      %4812 = vmatprep.subr.mxu0 0.0
      %4813 = vmatpush2.xpose.msra.mxu0 0.0
      %4814 = vmatprep.subr.mxu0 0.0
      %4815 = vmatpush2.xpose.msra.mxu0 0.0
      %4816 = vmatprep.subr.mxu0 0.0
      %4817 = vmatpush2.xpose.msra.mxu0 0.0
      %4818 = vmatprep.subr.mxu0 0.0
      %4819 = vmatpush2.xpose.msra.mxu0 0.0
      %4820 = vmatprep.subr.mxu0 0.0
      %4821 = vmatpush2.xpose.msra.mxu0 0.0
      %4822 = vmatprep.subr.mxu0 0.0
      %4823 = vmatpush2.xpose.msra.mxu0 0.0
      %4824 = vmatprep.mubr.f32.mxu0 %v4729
      %4825 = vmatmul.mubr.f32.gmra.mxu0 %v4728
      %v4826 = vpop.f32.mrf.mxu0
      %v4827 = vadd.f32 0.0, %v4826
      %v4828 = vpop.f32.mrf.mxu0
      %4829 = vmatprep.mubr.f32.mxu0 %v4731
      %4830 = vmatmul.mubr.f32.gmra.mxu0 %v4730
      %v4831 = vpop.f32.mrf.mxu0
      %v4832 = vadd.f32 0.0, %v4831
      %v4833 = vpop.f32.mrf.mxu0
      %4834 = vmatprep.mubr.f32.mxu0 %v4733
      %4835 = vmatmul.mubr.f32.gmra.mxu0 %v4732
      %v4836 = vpop.f32.mrf.mxu0
      %v4837 = vadd.f32 0.0, %v4836
      %v4838 = vpop.f32.mrf.mxu0
      %4839 = vmatprep.mubr.f32.mxu0 %v4735
      %4840 = vmatmul.mubr.f32.gmra.mxu0 %v4734
      %v4841 = vpop.f32.mrf.mxu0
      %v4842 = vadd.f32 0.0, %v4841
      %v4843 = vpop.f32.mrf.mxu0
      %4844 = vmatprep.mubr.f32.mxu0 %v4737
      %4845 = vmatmul.mubr.f32.gmra.mxu0 %v4736
      %v4846 = vpop.f32.mrf.mxu0
      %v4847 = vadd.f32 0.0, %v4846
      %v4848 = vpop.f32.mrf.mxu0
      %4849 = vmatprep.mubr.f32.mxu0 %v4739
      %4850 = vmatmul.mubr.f32.gmra.mxu0 %v4738
      %v4851 = vpop.f32.mrf.mxu0
      %v4852 = vadd.f32 0.0, %v4851
      %v4853 = vpop.f32.mrf.mxu0
      %4854 = vmatprep.mubr.f32.mxu0 %v4741
      %4855 = vmatmul.mubr.f32.gmra.mxu0 %v4740
      %v4856 = vpop.f32.mrf.mxu0
      %v4857 = vadd.f32 0.0, %v4856
      %v4858 = vpop.f32.mrf.mxu0
      %4859 = vmatprep.mubr.f32.mxu0 %v4743
      %4860 = vmatmul.mubr.f32.gmra.mxu0 %v4742
      %v4861 = vpop.f32.mrf.mxu0
      %v4862 = vadd.f32 0.0, %v4861
      %v4863 = vpop.f32.mrf.mxu0
      %4864 = vmatprep.mubr.f32.mxu0 %v4745
      %4865 = vmatmul.mubr.f32.gmra.mxu0 %v4744
      %v4866 = vpop.f32.mrf.mxu0
      %v4867 = vadd.f32 0.0, %v4866
      %v4868 = vpop.f32.mrf.mxu0
      %4869 = vmatprep.mubr.f32.mxu0 %v4747
      %4870 = vmatmul.mubr.f32.gmra.mxu0 %v4746
      %v4871 = vpop.f32.mrf.mxu0
      %v4872 = vadd.f32 0.0, %v4871
      %v4873 = vpop.f32.mrf.mxu0
      %4874 = vmatprep.mubr.f32.mxu0 %v4749
      %4875 = vmatmul.mubr.f32.gmra.mxu0 %v4748
      %v4876 = vpop.f32.mrf.mxu0
      %v4877 = vadd.f32 0.0, %v4876
      %v4878 = vpop.f32.mrf.mxu0
      %4879 = vmatprep.mubr.f32.mxu0 %v4751
      %4880 = vmatmul.mubr.f32.gmra.mxu0 %v4750
      %v4881 = vpop.f32.mrf.mxu0
      %v4882 = vadd.f32 0.0, %v4881
      %v4883 = vpop.f32.mrf.mxu0
      %4884 = vmatprep.mubr.f32.mxu0 %v4753
      %4885 = vmatmul.mubr.f32.gmra.mxu0 %v4752
      %v4886 = vpop.f32.mrf.mxu0
      %v4887 = vadd.f32 0.0, %v4886
      %v4888 = vpop.f32.mrf.mxu0
      %4889 = vmatprep.mubr.f32.mxu0 %v4755
      %4890 = vmatmul.mubr.f32.gmra.mxu0 %v4754
      %v4891 = vpop.f32.mrf.mxu0
      %v4892 = vadd.f32 0.0, %v4891
      %v4893 = vpop.f32.mrf.mxu0
      %4894 = vmatprep.mubr.f32.mxu0 %v4757
      %4895 = vmatmul.mubr.f32.gmra.mxu0 %v4756
      %v4896 = vpop.f32.mrf.mxu0
      %v4897 = vadd.f32 0.0, %v4896
      %v4898 = vpop.f32.mrf.mxu0
      %4899 = vmatprep.mubr.f32.mxu0 %v4759
      %4900 = vmatmul.mubr.f32.gmra.mxu0 %v4758
      %v4901 = vpop.f32.mrf.mxu0
      %v4902 = vadd.f32 0.0, %v4901
      %v4903 = vpop.f32.mrf.mxu0
      %4904 = vdwg.mxu0
      %v4905 = vsel %vm157, %v4827, -1e+30
      %v4906 = vsel %vm157, %v4832, -1e+30
      %v4907 = vsel %vm157, %v4837, -1e+30
      %v4908 = vsel %vm157, %v4842, -1e+30
      %v4909 = vsel %vm157, %v4847, -1e+30
      %v4910 = vsel %vm157, %v4852, -1e+30
      %v4911 = vsel %vm157, %v4857, -1e+30
      %v4912 = vsel %vm157, %v4862, -1e+30
      %v4913 = vsel %vm157, %v4867, -1e+30
      %v4914 = vsel %vm157, %v4872, -1e+30
      %v4915 = vsel %vm157, %v4877, -1e+30
      %v4916 = vsel %vm157, %v4882, -1e+30
      %v4917 = vsel %vm157, %v4887, -1e+30
      %v4918 = vsel %vm157, %v4892, -1e+30
      %v4919 = vsel %vm157, %v4897, -1e+30
      %v4920 = vsel %vm157, %v4902, -1e+30
      %4921 = vmax.xlane.f32.xlu0 %v4905
      %v4922 = vpop.xlane.xlu0 %4921
      %4923 = vmax.xlane.f32.xlu0 %v4906
      %v4924 = vpop.xlane.xlu0 %4923
      %4925 = vmax.xlane.f32.xlu0 %v4907
      %v4926 = vpop.xlane.xlu0 %4925
      %4927 = vmax.xlane.f32.xlu0 %v4908
      %v4928 = vpop.xlane.xlu0 %4927
      %4929 = vmax.xlane.f32.xlu0 %v4909
      %v4930 = vpop.xlane.xlu0 %4929
      %4931 = vmax.xlane.f32.xlu0 %v4910
      %v4932 = vpop.xlane.xlu0 %4931
      %4933 = vmax.xlane.f32.xlu0 %v4911
      %v4934 = vpop.xlane.xlu0 %4933
      %4935 = vmax.xlane.f32.xlu0 %v4912
      %v4936 = vpop.xlane.xlu0 %4935
      %4937 = vmax.xlane.f32.xlu0 %v4913
      %v4938 = vpop.xlane.xlu0 %4937
      %4939 = vmax.xlane.f32.xlu0 %v4914
      %v4940 = vpop.xlane.xlu0 %4939
      %4941 = vmax.xlane.f32.xlu0 %v4915
      %v4942 = vpop.xlane.xlu0 %4941
      %4943 = vmax.xlane.f32.xlu0 %v4916
      %v4944 = vpop.xlane.xlu0 %4943
      %4945 = vmax.xlane.f32.xlu0 %v4917
      %v4946 = vpop.xlane.xlu0 %4945
      %4947 = vmax.xlane.f32.xlu0 %v4918
      %v4948 = vpop.xlane.xlu0 %4947
      %4949 = vmax.xlane.f32.xlu0 %v4919
      %v4950 = vpop.xlane.xlu0 %4949
      %4951 = vmax.xlane.f32.xlu0 %v4920
      %v4952 = vpop.xlane.xlu0 %4951
      %v4953 = vsub.f32 %v4905, %v4922
      %v4954 = vsub.f32 %v4906, %v4924
      %v4955 = vsub.f32 %v4907, %v4926
      %v4956 = vsub.f32 %v4908, %v4928
      %v4957 = vsub.f32 %v4909, %v4930
      %v4958 = vsub.f32 %v4910, %v4932
      %v4959 = vsub.f32 %v4911, %v4934
      %v4960 = vsub.f32 %v4912, %v4936
      %v4961 = vsub.f32 %v4913, %v4938
      %v4962 = vsub.f32 %v4914, %v4940
      %v4963 = vsub.f32 %v4915, %v4942
      %v4964 = vsub.f32 %v4916, %v4944
      %v4965 = vsub.f32 %v4917, %v4946
      %v4966 = vsub.f32 %v4918, %v4948
      %v4967 = vsub.f32 %v4919, %v4950
      %v4968 = vsub.f32 %v4920, %v4952
      %v4969 = vmul.f32 %v4953, 1.442695
      %v4970 = vpow.pop %v4969
      %v4971 = vmul.f32 %v4954, 1.442695
      %v4972 = vpow.pop %v4971
      %v4973 = vmul.f32 %v4955, 1.442695
      %v4974 = vpow.pop %v4973
      %v4975 = vmul.f32 %v4956, 1.442695
      %v4976 = vpow.pop %v4975
      %v4977 = vmul.f32 %v4957, 1.442695
      %v4978 = vpow.pop %v4977
      %v4979 = vmul.f32 %v4958, 1.442695
      %v4980 = vpow.pop %v4979
      %v4981 = vmul.f32 %v4959, 1.442695
      %v4982 = vpow.pop %v4981
      %v4983 = vmul.f32 %v4960, 1.442695
      %v4984 = vpow.pop %v4983
      %v4985 = vmul.f32 %v4961, 1.442695
      %v4986 = vpow.pop %v4985
      %v4987 = vmul.f32 %v4962, 1.442695
      %v4988 = vpow.pop %v4987
      %v4989 = vmul.f32 %v4963, 1.442695
      %v4990 = vpow.pop %v4989
      %v4991 = vmul.f32 %v4964, 1.442695
      %v4992 = vpow.pop %v4991
      %v4993 = vmul.f32 %v4965, 1.442695
      %v4994 = vpow.pop %v4993
      %v4995 = vmul.f32 %v4966, 1.442695
      %v4996 = vpow.pop %v4995
      %v4997 = vmul.f32 %v4967, 1.442695
      %v4998 = vpow.pop %v4997
      %v4999 = vmul.f32 %v4968, 1.442695
      %v5000 = vpow.pop %v4999
      %5001 = vadd.xlane.f32.xlu0 %v4970
      %v5002 = vpop.xlane.xlu0 %5001
      %5003 = vadd.xlane.f32.xlu0 %v4972
      %v5004 = vpop.xlane.xlu0 %5003
      %5005 = vadd.xlane.f32.xlu0 %v4974
      %v5006 = vpop.xlane.xlu0 %5005
      %5007 = vadd.xlane.f32.xlu0 %v4976
      %v5008 = vpop.xlane.xlu0 %5007
      %5009 = vadd.xlane.f32.xlu0 %v4978
      %v5010 = vpop.xlane.xlu0 %5009
      %5011 = vadd.xlane.f32.xlu0 %v4980
      %v5012 = vpop.xlane.xlu0 %5011
      %5013 = vadd.xlane.f32.xlu0 %v4982
      %v5014 = vpop.xlane.xlu0 %5013
      %5015 = vadd.xlane.f32.xlu0 %v4984
      %v5016 = vpop.xlane.xlu0 %5015
      %5017 = vadd.xlane.f32.xlu0 %v4986
      %v5018 = vpop.xlane.xlu0 %5017
      %5019 = vadd.xlane.f32.xlu0 %v4988
      %v5020 = vpop.xlane.xlu0 %5019
      %5021 = vadd.xlane.f32.xlu0 %v4990
      %v5022 = vpop.xlane.xlu0 %5021
      %5023 = vadd.xlane.f32.xlu0 %v4992
      %v5024 = vpop.xlane.xlu0 %5023
      %5025 = vadd.xlane.f32.xlu0 %v4994
      %v5026 = vpop.xlane.xlu0 %5025
      %5027 = vadd.xlane.f32.xlu0 %v4996
      %v5028 = vpop.xlane.xlu0 %5027
      %5029 = vadd.xlane.f32.xlu0 %v4998
      %v5030 = vpop.xlane.xlu0 %5029
      %5031 = vadd.xlane.f32.xlu0 %v5000
      %v5032 = vpop.xlane.xlu0 %5031
      %v5033 = vrcp.pop %v5002
      %v5034 = vrcp.pop %v5004
      %v5035 = vrcp.pop %v5006
      %v5036 = vrcp.pop %v5008
      %v5037 = vrcp.pop %v5010
      %v5038 = vrcp.pop %v5012
      %v5039 = vrcp.pop %v5014
      %v5040 = vrcp.pop %v5016
      %v5041 = vrcp.pop %v5018
      %v5042 = vrcp.pop %v5020
      %v5043 = vrcp.pop %v5022
      %v5044 = vrcp.pop %v5024
      %v5045 = vrcp.pop %v5026
      %v5046 = vrcp.pop %v5028
      %v5047 = vrcp.pop %v5030
      %v5048 = vrcp.pop %v5032
      %v5049 = vmul.f32 %v4970, %v5033
      %v5050 = vmul.f32 %v4972, %v5034
      %v5051 = vmul.f32 %v4974, %v5035
      %v5052 = vmul.f32 %v4976, %v5036
      %v5053 = vmul.f32 %v4978, %v5037
      %v5054 = vmul.f32 %v4980, %v5038
      %v5055 = vmul.f32 %v4982, %v5039
      %v5056 = vmul.f32 %v4984, %v5040
      %v5057 = vmul.f32 %v4986, %v5041
      %v5058 = vmul.f32 %v4988, %v5042
      %v5059 = vmul.f32 %v4990, %v5043
      %v5060 = vmul.f32 %v4992, %v5044
      %v5061 = vmul.f32 %v4994, %v5045
      %v5062 = vmul.f32 %v4996, %v5046
      %v5063 = vmul.f32 %v4998, %v5047
      %v5064 = vmul.f32 %v5000, %v5048
      %s5065 = sadd.s32 768, %s1741
      %s5066 = scalar_lea.vmem [#allocation9], %s5065
      %5067 = vst [vmem:[%s5066] sm:$0xff] %v5049
      %5068 = vst [vmem:[%s5066 + $0x8] sm:$0xff] %v5050
      %5069 = vst [vmem:[%s5066 + $0x10] sm:$0xff] %v5051
      %5070 = vst [vmem:[%s5066 + $0x18] sm:$0xff] %v5052
      %5071 = vst [vmem:[%s5066 + $0x20] sm:$0xff] %v5053
      %5072 = vst [vmem:[%s5066 + $0x28] sm:$0xff] %v5054
      %5073 = vst [vmem:[%s5066 + $0x30] sm:$0xff] %v5055
      %5074 = vst [vmem:[%s5066 + $0x38] sm:$0xff] %v5056
      %5075 = vst [vmem:[%s5066 + $0x40] sm:$0xff] %v5057
      %5076 = vst [vmem:[%s5066 + $0x48] sm:$0xff] %v5058
      %5077 = vst [vmem:[%s5066 + $0x50] sm:$0xff] %v5059
      %5078 = vst [vmem:[%s5066 + $0x58] sm:$0xff] %v5060
      %5079 = vst [vmem:[%s5066 + $0x60] sm:$0xff] %v5061
      %5080 = vst [vmem:[%s5066 + $0x68] sm:$0xff] %v5062
      %5081 = vst [vmem:[%s5066 + $0x70] sm:$0xff] %v5063
      %5082 = vst [vmem:[%s5066 + $0x78] sm:$0xff] %v5064
      %5083 = vmatprep.subr.mxu0 %v984
      %5084 = vmatpush1.msra.mxu0 %v982
      %5085 = vmatprep.subr.mxu0 %v980
      %5086 = vmatpush1.msra.mxu0 %v978
      %5087 = vmatprep.subr.mxu0 %v974
      %5088 = vmatpush1.msra.mxu0 %v972
      %5089 = vmatprep.subr.mxu0 %v970
      %5090 = vmatpush1.msra.mxu0 %v968
      %5091 = vmatprep.subr.mxu0 %v964
      %5092 = vmatpush1.msra.mxu0 %v962
      %5093 = vmatprep.subr.mxu0 %v960
      %5094 = vmatpush1.msra.mxu0 %v958
      %5095 = vmatprep.subr.mxu0 %v954
      %5096 = vmatpush1.msra.mxu0 %v952
      %5097 = vmatprep.subr.mxu0 %v950
      %5098 = vmatpush1.msra.mxu0 %v948
      %5099 = vmatprep.subr.mxu0 %v944
      %5100 = vmatpush1.msra.mxu0 %v942
      %5101 = vmatprep.subr.mxu0 %v940
      %5102 = vmatpush1.msra.mxu0 %v938
      %5103 = vmatprep.subr.mxu0 %v934
      %5104 = vmatpush1.msra.mxu0 %v932
      %5105 = vmatprep.subr.mxu0 %v930
      %5106 = vmatpush1.msra.mxu0 %v928
      %5107 = vmatprep.subr.mxu0 %v924
      %5108 = vmatpush1.msra.mxu0 %v922
      %5109 = vmatprep.subr.mxu0 %v920
      %5110 = vmatpush1.msra.mxu0 %v918
      %5111 = vmatprep.subr.mxu0 %v914
      %5112 = vmatpush1.msra.mxu0 %v912
      %5113 = vmatprep.subr.mxu0 %v910
      %5114 = vmatpush1.msra.mxu0 %v908
      %5115 = vmatprep.subr.mxu0 0.0
      %5116 = vmatpush2.msra.mxu0 0.0
      %5117 = vmatprep.subr.mxu0 0.0
      %5118 = vmatpush2.msra.mxu0 0.0
      %5119 = vmatprep.subr.mxu0 0.0
      %5120 = vmatpush2.msra.mxu0 0.0
      %5121 = vmatprep.subr.mxu0 0.0
      %5122 = vmatpush2.msra.mxu0 0.0
      %5123 = vmatprep.subr.mxu0 0.0
      %5124 = vmatpush2.msra.mxu0 0.0
      %5125 = vmatprep.subr.mxu0 0.0
      %5126 = vmatpush2.msra.mxu0 0.0
      %5127 = vmatprep.subr.mxu0 0.0
      %5128 = vmatpush2.msra.mxu0 0.0
      %5129 = vmatprep.subr.mxu0 0.0
      %5130 = vmatpush2.msra.mxu0 0.0
      %5131 = vmatprep.subr.mxu0 0.0
      %5132 = vmatpush2.msra.mxu0 0.0
      %5133 = vmatprep.subr.mxu0 0.0
      %5134 = vmatpush2.msra.mxu0 0.0
      %5135 = vmatprep.subr.mxu0 0.0
      %5136 = vmatpush2.msra.mxu0 0.0
      %5137 = vmatprep.subr.mxu0 0.0
      %5138 = vmatpush2.msra.mxu0 0.0
      %5139 = vmatprep.subr.mxu0 0.0
      %5140 = vmatpush2.msra.mxu0 0.0
      %5141 = vmatprep.subr.mxu0 0.0
      %5142 = vmatpush2.msra.mxu0 0.0
      %5143 = vmatprep.subr.mxu0 0.0
      %5144 = vmatpush2.msra.mxu0 0.0
      %5145 = vmatprep.subr.mxu0 0.0
      %5146 = vmatpush2.msra.mxu0 0.0
      %5147 = vmatprep.mubr.f32.mxu0 0.0
      %5148 = vmatmul.mubr.f32.gmra.mxu0 %v5049
      %v5149 = vpop.f32.mrf.mxu0
      %v5150 = vadd.f32 0.0, %v5149
      %v5151 = vpop.f32.mrf.mxu0
      %v5152 = vadd.f32 0.0, %v5151
      %5153 = vmatprep.mubr.f32.mxu0 0.0
      %5154 = vmatmul.mubr.f32.gmra.mxu0 %v5050
      %v5155 = vpop.f32.mrf.mxu0
      %v5156 = vadd.f32 0.0, %v5155
      %v5157 = vpop.f32.mrf.mxu0
      %v5158 = vadd.f32 0.0, %v5157
      %5159 = vmatprep.mubr.f32.mxu0 0.0
      %5160 = vmatmul.mubr.f32.gmra.mxu0 %v5051
      %v5161 = vpop.f32.mrf.mxu0
      %v5162 = vadd.f32 0.0, %v5161
      %v5163 = vpop.f32.mrf.mxu0
      %v5164 = vadd.f32 0.0, %v5163
      %5165 = vmatprep.mubr.f32.mxu0 0.0
      %5166 = vmatmul.mubr.f32.gmra.mxu0 %v5052
      %v5167 = vpop.f32.mrf.mxu0
      %v5168 = vadd.f32 0.0, %v5167
      %v5169 = vpop.f32.mrf.mxu0
      %v5170 = vadd.f32 0.0, %v5169
      %5171 = vmatprep.mubr.f32.mxu0 0.0
      %5172 = vmatmul.mubr.f32.gmra.mxu0 %v5053
      %v5173 = vpop.f32.mrf.mxu0
      %v5174 = vadd.f32 0.0, %v5173
      %v5175 = vpop.f32.mrf.mxu0
      %v5176 = vadd.f32 0.0, %v5175
      %5177 = vmatprep.mubr.f32.mxu0 0.0
      %5178 = vmatmul.mubr.f32.gmra.mxu0 %v5054
      %v5179 = vpop.f32.mrf.mxu0
      %v5180 = vadd.f32 0.0, %v5179
      %v5181 = vpop.f32.mrf.mxu0
      %v5182 = vadd.f32 0.0, %v5181
      %5183 = vmatprep.mubr.f32.mxu0 0.0
      %5184 = vmatmul.mubr.f32.gmra.mxu0 %v5055
      %v5185 = vpop.f32.mrf.mxu0
      %v5186 = vadd.f32 0.0, %v5185
      %v5187 = vpop.f32.mrf.mxu0
      %v5188 = vadd.f32 0.0, %v5187
      %5189 = vmatprep.mubr.f32.mxu0 0.0
      %5190 = vmatmul.mubr.f32.gmra.mxu0 %v5056
      %v5191 = vpop.f32.mrf.mxu0
      %v5192 = vadd.f32 0.0, %v5191
      %v5193 = vpop.f32.mrf.mxu0
      %v5194 = vadd.f32 0.0, %v5193
      %5195 = vmatprep.mubr.f32.mxu0 0.0
      %5196 = vmatmul.mubr.f32.gmra.mxu0 %v5057
      %v5197 = vpop.f32.mrf.mxu0
      %v5198 = vadd.f32 0.0, %v5197
      %v5199 = vpop.f32.mrf.mxu0
      %v5200 = vadd.f32 0.0, %v5199
      %5201 = vmatprep.mubr.f32.mxu0 0.0
      %5202 = vmatmul.mubr.f32.gmra.mxu0 %v5058
      %v5203 = vpop.f32.mrf.mxu0
      %v5204 = vadd.f32 0.0, %v5203
      %v5205 = vpop.f32.mrf.mxu0
      %v5206 = vadd.f32 0.0, %v5205
      %5207 = vmatprep.mubr.f32.mxu0 0.0
      %5208 = vmatmul.mubr.f32.gmra.mxu0 %v5059
      %v5209 = vpop.f32.mrf.mxu0
      %v5210 = vadd.f32 0.0, %v5209
      %v5211 = vpop.f32.mrf.mxu0
      %v5212 = vadd.f32 0.0, %v5211
      %5213 = vmatprep.mubr.f32.mxu0 0.0
      %5214 = vmatmul.mubr.f32.gmra.mxu0 %v5060
      %v5215 = vpop.f32.mrf.mxu0
      %v5216 = vadd.f32 0.0, %v5215
      %v5217 = vpop.f32.mrf.mxu0
      %v5218 = vadd.f32 0.0, %v5217
      %5219 = vmatprep.mubr.f32.mxu0 0.0
      %5220 = vmatmul.mubr.f32.gmra.mxu0 %v5061
      %v5221 = vpop.f32.mrf.mxu0
      %v5222 = vadd.f32 0.0, %v5221
      %v5223 = vpop.f32.mrf.mxu0
      %v5224 = vadd.f32 0.0, %v5223
      %5225 = vmatprep.mubr.f32.mxu0 0.0
      %5226 = vmatmul.mubr.f32.gmra.mxu0 %v5062
      %v5227 = vpop.f32.mrf.mxu0
      %v5228 = vadd.f32 0.0, %v5227
      %v5229 = vpop.f32.mrf.mxu0
      %v5230 = vadd.f32 0.0, %v5229
      %5231 = vmatprep.mubr.f32.mxu0 0.0
      %5232 = vmatmul.mubr.f32.gmra.mxu0 %v5063
      %v5233 = vpop.f32.mrf.mxu0
      %v5234 = vadd.f32 0.0, %v5233
      %v5235 = vpop.f32.mrf.mxu0
      %v5236 = vadd.f32 0.0, %v5235
      %5237 = vmatprep.mubr.f32.mxu0 0.0
      %5238 = vmatmul.mubr.f32.gmra.mxu0 %v5064
      %v5239 = vpop.f32.mrf.mxu0
      %v5240 = vadd.f32 0.0, %v5239
      %v5241 = vpop.f32.mrf.mxu0
      %v5242 = vadd.f32 0.0, %v5241
      %5243 = vdwg.mxu0
      %v5244 = vsel %vm4726, %v5150, %v4690
      %v5245 = vsel %vm4727, %v5152, %v4691
      %v5246 = vsel %vm4726, %v5156, %v4692
      %v5247 = vsel %vm4727, %v5158, %v4693
      %v5248 = vsel %vm4726, %v5162, %v4694
      %v5249 = vsel %vm4727, %v5164, %v4695
      %v5250 = vsel %vm4726, %v5168, %v4696
      %v5251 = vsel %vm4727, %v5170, %v4697
      %v5252 = vsel %vm4726, %v5174, %v4698
      %v5253 = vsel %vm4727, %v5176, %v4699
      %v5254 = vsel %vm4726, %v5180, %v4700
      %v5255 = vsel %vm4727, %v5182, %v4701
      %v5256 = vsel %vm4726, %v5186, %v4702
      %v5257 = vsel %vm4727, %v5188, %v4703
      %v5258 = vsel %vm4726, %v5192, %v4704
      %v5259 = vsel %vm4727, %v5194, %v4705
      %v5260 = vsel %vm4726, %v5198, %v4706
      %v5261 = vsel %vm4727, %v5200, %v4707
      %v5262 = vsel %vm4726, %v5204, %v4708
      %v5263 = vsel %vm4727, %v5206, %v4709
      %v5264 = vsel %vm4726, %v5210, %v4710
      %v5265 = vsel %vm4727, %v5212, %v4711
      %v5266 = vsel %vm4726, %v5216, %v4712
      %v5267 = vsel %vm4727, %v5218, %v4713
      %v5268 = vsel %vm4726, %v5222, %v4714
      %v5269 = vsel %vm4727, %v5224, %v4715
      %v5270 = vsel %vm4726, %v5228, %v4716
      %v5271 = vsel %vm4727, %v5230, %v4717
      %v5272 = vsel %vm4726, %v5234, %v4718
      %v5273 = vsel %vm4727, %v5236, %v4719
      %v5274 = vsel %vm4726, %v5240, %v4720
      %v5275 = vsel %vm4727, %v5242, %v4721
      %vm5276 = vcmp.ge.s32.totalorder %v155, 224
      %vm5277 = vcmp.ge.s32.totalorder %v156, 224
      %vm5278 = vcmp.lt.s32.totalorder %v155, 256
      %vm5279 = vcmp.lt.s32.totalorder %v156, 256
      %vm5280 = vmand %vm5276, %vm5278
      %vm5281 = vmand %vm5277, %vm5279
      %v5282 = vsel %vm5280, %v908, 0.0
      %v5283 = vsel %vm5281, %v910, 0.0
      %v5284 = vsel %vm5280, %v912, 0.0
      %v5285 = vsel %vm5281, %v914, 0.0
      %v5286 = vsel %vm5280, %v918, 0.0
      %v5287 = vsel %vm5281, %v920, 0.0
      %v5288 = vsel %vm5280, %v922, 0.0
      %v5289 = vsel %vm5281, %v924, 0.0
      %v5290 = vsel %vm5280, %v928, 0.0
      %v5291 = vsel %vm5281, %v930, 0.0
      %v5292 = vsel %vm5280, %v932, 0.0
      %v5293 = vsel %vm5281, %v934, 0.0
      %v5294 = vsel %vm5280, %v938, 0.0
      %v5295 = vsel %vm5281, %v940, 0.0
      %v5296 = vsel %vm5280, %v942, 0.0
      %v5297 = vsel %vm5281, %v944, 0.0
      %v5298 = vsel %vm5280, %v948, 0.0
      %v5299 = vsel %vm5281, %v950, 0.0
      %v5300 = vsel %vm5280, %v952, 0.0
      %v5301 = vsel %vm5281, %v954, 0.0
      %v5302 = vsel %vm5280, %v958, 0.0
      %v5303 = vsel %vm5281, %v960, 0.0
      %v5304 = vsel %vm5280, %v962, 0.0
      %v5305 = vsel %vm5281, %v964, 0.0
      %v5306 = vsel %vm5280, %v968, 0.0
      %v5307 = vsel %vm5281, %v970, 0.0
      %v5308 = vsel %vm5280, %v972, 0.0
      %v5309 = vsel %vm5281, %v974, 0.0
      %v5310 = vsel %vm5280, %v978, 0.0
      %v5311 = vsel %vm5281, %v980, 0.0
      %v5312 = vsel %vm5280, %v982, 0.0
      %v5313 = vsel %vm5281, %v984, 0.0
      %5314 = vmatprep.subr.mxu0 %v1130
      %5315 = vmatpush1.xpose.msra.mxu0 %v1129
      %5316 = vmatprep.subr.mxu0 %v1128
      %5317 = vmatpush1.xpose.msra.mxu0 %v1127
      %5318 = vmatprep.subr.mxu0 %v1126
      %5319 = vmatpush1.xpose.msra.mxu0 %v1125
      %5320 = vmatprep.subr.mxu0 %v1124
      %5321 = vmatpush1.xpose.msra.mxu0 %v1123
      %5322 = vmatprep.subr.mxu0 %v1122
      %5323 = vmatpush1.xpose.msra.mxu0 %v1121
      %5324 = vmatprep.subr.mxu0 %v1120
      %5325 = vmatpush1.xpose.msra.mxu0 %v1119
      %5326 = vmatprep.subr.mxu0 %v1118
      %5327 = vmatpush1.xpose.msra.mxu0 %v1117
      %5328 = vmatprep.subr.mxu0 %v1116
      %5329 = vmatpush1.xpose.msra.mxu0 %v1115
      %5330 = vmatprep.subr.mxu0 %v1114
      %5331 = vmatpush1.xpose.msra.mxu0 %v1113
      %5332 = vmatprep.subr.mxu0 %v1112
      %5333 = vmatpush1.xpose.msra.mxu0 %v1111
      %5334 = vmatprep.subr.mxu0 %v1110
      %5335 = vmatpush1.xpose.msra.mxu0 %v1109
      %5336 = vmatprep.subr.mxu0 %v1108
      %5337 = vmatpush1.xpose.msra.mxu0 %v1107
      %5338 = vmatprep.subr.mxu0 %v1106
      %5339 = vmatpush1.xpose.msra.mxu0 %v1105
      %5340 = vmatprep.subr.mxu0 %v1104
      %5341 = vmatpush1.xpose.msra.mxu0 %v1103
      %5342 = vmatprep.subr.mxu0 %v1102
      %5343 = vmatpush1.xpose.msra.mxu0 %v1101
      %5344 = vmatprep.subr.mxu0 %v1100
      %5345 = vmatpush1.xpose.msra.mxu0 %v1099
      %5346 = vmatprep.subr.mxu0 0.0
      %5347 = vmatpush2.xpose.msra.mxu0 0.0
      %5348 = vmatprep.subr.mxu0 0.0
      %5349 = vmatpush2.xpose.msra.mxu0 0.0
      %5350 = vmatprep.subr.mxu0 0.0
      %5351 = vmatpush2.xpose.msra.mxu0 0.0
      %5352 = vmatprep.subr.mxu0 0.0
      %5353 = vmatpush2.xpose.msra.mxu0 0.0
      %5354 = vmatprep.subr.mxu0 0.0
      %5355 = vmatpush2.xpose.msra.mxu0 0.0
      %5356 = vmatprep.subr.mxu0 0.0
      %5357 = vmatpush2.xpose.msra.mxu0 0.0
      %5358 = vmatprep.subr.mxu0 0.0
      %5359 = vmatpush2.xpose.msra.mxu0 0.0
      %5360 = vmatprep.subr.mxu0 0.0
      %5361 = vmatpush2.xpose.msra.mxu0 0.0
      %5362 = vmatprep.subr.mxu0 0.0
      %5363 = vmatpush2.xpose.msra.mxu0 0.0
      %5364 = vmatprep.subr.mxu0 0.0
      %5365 = vmatpush2.xpose.msra.mxu0 0.0
      %5366 = vmatprep.subr.mxu0 0.0
      %5367 = vmatpush2.xpose.msra.mxu0 0.0
      %5368 = vmatprep.subr.mxu0 0.0
      %5369 = vmatpush2.xpose.msra.mxu0 0.0
      %5370 = vmatprep.subr.mxu0 0.0
      %5371 = vmatpush2.xpose.msra.mxu0 0.0
      %5372 = vmatprep.subr.mxu0 0.0
      %5373 = vmatpush2.xpose.msra.mxu0 0.0
      %5374 = vmatprep.subr.mxu0 0.0
      %5375 = vmatpush2.xpose.msra.mxu0 0.0
      %5376 = vmatprep.subr.mxu0 0.0
      %5377 = vmatpush2.xpose.msra.mxu0 0.0
      %5378 = vmatprep.mubr.f32.mxu0 %v5283
      %5379 = vmatmul.mubr.f32.gmra.mxu0 %v5282
      %v5380 = vpop.f32.mrf.mxu0
      %v5381 = vadd.f32 0.0, %v5380
      %v5382 = vpop.f32.mrf.mxu0
      %5383 = vmatprep.mubr.f32.mxu0 %v5285
      %5384 = vmatmul.mubr.f32.gmra.mxu0 %v5284
      %v5385 = vpop.f32.mrf.mxu0
      %v5386 = vadd.f32 0.0, %v5385
      %v5387 = vpop.f32.mrf.mxu0
      %5388 = vmatprep.mubr.f32.mxu0 %v5287
      %5389 = vmatmul.mubr.f32.gmra.mxu0 %v5286
      %v5390 = vpop.f32.mrf.mxu0
      %v5391 = vadd.f32 0.0, %v5390
      %v5392 = vpop.f32.mrf.mxu0
      %5393 = vmatprep.mubr.f32.mxu0 %v5289
      %5394 = vmatmul.mubr.f32.gmra.mxu0 %v5288
      %v5395 = vpop.f32.mrf.mxu0
      %v5396 = vadd.f32 0.0, %v5395
      %v5397 = vpop.f32.mrf.mxu0
      %5398 = vmatprep.mubr.f32.mxu0 %v5291
      %5399 = vmatmul.mubr.f32.gmra.mxu0 %v5290
      %v5400 = vpop.f32.mrf.mxu0
      %v5401 = vadd.f32 0.0, %v5400
      %v5402 = vpop.f32.mrf.mxu0
      %5403 = vmatprep.mubr.f32.mxu0 %v5293
      %5404 = vmatmul.mubr.f32.gmra.mxu0 %v5292
      %v5405 = vpop.f32.mrf.mxu0
      %v5406 = vadd.f32 0.0, %v5405
      %v5407 = vpop.f32.mrf.mxu0
      %5408 = vmatprep.mubr.f32.mxu0 %v5295
      %5409 = vmatmul.mubr.f32.gmra.mxu0 %v5294
      %v5410 = vpop.f32.mrf.mxu0
      %v5411 = vadd.f32 0.0, %v5410
      %v5412 = vpop.f32.mrf.mxu0
      %5413 = vmatprep.mubr.f32.mxu0 %v5297
      %5414 = vmatmul.mubr.f32.gmra.mxu0 %v5296
      %v5415 = vpop.f32.mrf.mxu0
      %v5416 = vadd.f32 0.0, %v5415
      %v5417 = vpop.f32.mrf.mxu0
      %5418 = vmatprep.mubr.f32.mxu0 %v5299
      %5419 = vmatmul.mubr.f32.gmra.mxu0 %v5298
      %v5420 = vpop.f32.mrf.mxu0
      %v5421 = vadd.f32 0.0, %v5420
      %v5422 = vpop.f32.mrf.mxu0
      %5423 = vmatprep.mubr.f32.mxu0 %v5301
      %5424 = vmatmul.mubr.f32.gmra.mxu0 %v5300
      %v5425 = vpop.f32.mrf.mxu0
      %v5426 = vadd.f32 0.0, %v5425
      %v5427 = vpop.f32.mrf.mxu0
      %5428 = vmatprep.mubr.f32.mxu0 %v5303
      %5429 = vmatmul.mubr.f32.gmra.mxu0 %v5302
      %v5430 = vpop.f32.mrf.mxu0
      %v5431 = vadd.f32 0.0, %v5430
      %v5432 = vpop.f32.mrf.mxu0
      %5433 = vmatprep.mubr.f32.mxu0 %v5305
      %5434 = vmatmul.mubr.f32.gmra.mxu0 %v5304
      %v5435 = vpop.f32.mrf.mxu0
      %v5436 = vadd.f32 0.0, %v5435
      %v5437 = vpop.f32.mrf.mxu0
      %5438 = vmatprep.mubr.f32.mxu0 %v5307
      %5439 = vmatmul.mubr.f32.gmra.mxu0 %v5306
      %v5440 = vpop.f32.mrf.mxu0
      %v5441 = vadd.f32 0.0, %v5440
      %v5442 = vpop.f32.mrf.mxu0
      %5443 = vmatprep.mubr.f32.mxu0 %v5309
      %5444 = vmatmul.mubr.f32.gmra.mxu0 %v5308
      %v5445 = vpop.f32.mrf.mxu0
      %v5446 = vadd.f32 0.0, %v5445
      %v5447 = vpop.f32.mrf.mxu0
      %5448 = vmatprep.mubr.f32.mxu0 %v5311
      %5449 = vmatmul.mubr.f32.gmra.mxu0 %v5310
      %v5450 = vpop.f32.mrf.mxu0
      %v5451 = vadd.f32 0.0, %v5450
      %v5452 = vpop.f32.mrf.mxu0
      %5453 = vmatprep.mubr.f32.mxu0 %v5313
      %5454 = vmatmul.mubr.f32.gmra.mxu0 %v5312
      %v5455 = vpop.f32.mrf.mxu0
      %v5456 = vadd.f32 0.0, %v5455
      %v5457 = vpop.f32.mrf.mxu0
      %5458 = vdwg.mxu0
      %v5459 = vsel %vm157, %v5381, -1e+30
      %v5460 = vsel %vm157, %v5386, -1e+30
      %v5461 = vsel %vm157, %v5391, -1e+30
      %v5462 = vsel %vm157, %v5396, -1e+30
      %v5463 = vsel %vm157, %v5401, -1e+30
      %v5464 = vsel %vm157, %v5406, -1e+30
      %v5465 = vsel %vm157, %v5411, -1e+30
      %v5466 = vsel %vm157, %v5416, -1e+30
      %v5467 = vsel %vm157, %v5421, -1e+30
      %v5468 = vsel %vm157, %v5426, -1e+30
      %v5469 = vsel %vm157, %v5431, -1e+30
      %v5470 = vsel %vm157, %v5436, -1e+30
      %v5471 = vsel %vm157, %v5441, -1e+30
      %v5472 = vsel %vm157, %v5446, -1e+30
      %v5473 = vsel %vm157, %v5451, -1e+30
      %v5474 = vsel %vm157, %v5456, -1e+30
      %5475 = vmax.xlane.f32.xlu0 %v5459
      %v5476 = vpop.xlane.xlu0 %5475
      %5477 = vmax.xlane.f32.xlu0 %v5460
      %v5478 = vpop.xlane.xlu0 %5477
      %5479 = vmax.xlane.f32.xlu0 %v5461
      %v5480 = vpop.xlane.xlu0 %5479
      %5481 = vmax.xlane.f32.xlu0 %v5462
      %v5482 = vpop.xlane.xlu0 %5481
      %5483 = vmax.xlane.f32.xlu0 %v5463
      %v5484 = vpop.xlane.xlu0 %5483
      %5485 = vmax.xlane.f32.xlu0 %v5464
      %v5486 = vpop.xlane.xlu0 %5485
      %5487 = vmax.xlane.f32.xlu0 %v5465
      %v5488 = vpop.xlane.xlu0 %5487
      %5489 = vmax.xlane.f32.xlu0 %v5466
      %v5490 = vpop.xlane.xlu0 %5489
      %5491 = vmax.xlane.f32.xlu0 %v5467
      %v5492 = vpop.xlane.xlu0 %5491
      %5493 = vmax.xlane.f32.xlu0 %v5468
      %v5494 = vpop.xlane.xlu0 %5493
      %5495 = vmax.xlane.f32.xlu0 %v5469
      %v5496 = vpop.xlane.xlu0 %5495
      %5497 = vmax.xlane.f32.xlu0 %v5470
      %v5498 = vpop.xlane.xlu0 %5497
      %5499 = vmax.xlane.f32.xlu0 %v5471
      %v5500 = vpop.xlane.xlu0 %5499
      %5501 = vmax.xlane.f32.xlu0 %v5472
      %v5502 = vpop.xlane.xlu0 %5501
      %5503 = vmax.xlane.f32.xlu0 %v5473
      %v5504 = vpop.xlane.xlu0 %5503
      %5505 = vmax.xlane.f32.xlu0 %v5474
      %v5506 = vpop.xlane.xlu0 %5505
      %v5507 = vsub.f32 %v5459, %v5476
      %v5508 = vsub.f32 %v5460, %v5478
      %v5509 = vsub.f32 %v5461, %v5480
      %v5510 = vsub.f32 %v5462, %v5482
      %v5511 = vsub.f32 %v5463, %v5484
      %v5512 = vsub.f32 %v5464, %v5486
      %v5513 = vsub.f32 %v5465, %v5488
      %v5514 = vsub.f32 %v5466, %v5490
      %v5515 = vsub.f32 %v5467, %v5492
      %v5516 = vsub.f32 %v5468, %v5494
      %v5517 = vsub.f32 %v5469, %v5496
      %v5518 = vsub.f32 %v5470, %v5498
      %v5519 = vsub.f32 %v5471, %v5500
      %v5520 = vsub.f32 %v5472, %v5502
      %v5521 = vsub.f32 %v5473, %v5504
      %v5522 = vsub.f32 %v5474, %v5506
      %v5523 = vmul.f32 %v5507, 1.442695
      %v5524 = vpow.pop %v5523
      %v5525 = vmul.f32 %v5508, 1.442695
      %v5526 = vpow.pop %v5525
      %v5527 = vmul.f32 %v5509, 1.442695
      %v5528 = vpow.pop %v5527
      %v5529 = vmul.f32 %v5510, 1.442695
      %v5530 = vpow.pop %v5529
      %v5531 = vmul.f32 %v5511, 1.442695
      %v5532 = vpow.pop %v5531
      %v5533 = vmul.f32 %v5512, 1.442695
      %v5534 = vpow.pop %v5533
      %v5535 = vmul.f32 %v5513, 1.442695
      %v5536 = vpow.pop %v5535
      %v5537 = vmul.f32 %v5514, 1.442695
      %v5538 = vpow.pop %v5537
      %v5539 = vmul.f32 %v5515, 1.442695
      %v5540 = vpow.pop %v5539
      %v5541 = vmul.f32 %v5516, 1.442695
      %v5542 = vpow.pop %v5541
      %v5543 = vmul.f32 %v5517, 1.442695
      %v5544 = vpow.pop %v5543
      %v5545 = vmul.f32 %v5518, 1.442695
      %v5546 = vpow.pop %v5545
      %v5547 = vmul.f32 %v5519, 1.442695
      %v5548 = vpow.pop %v5547
      %v5549 = vmul.f32 %v5520, 1.442695
      %v5550 = vpow.pop %v5549
      %v5551 = vmul.f32 %v5521, 1.442695
      %v5552 = vpow.pop %v5551
      %v5553 = vmul.f32 %v5522, 1.442695
      %v5554 = vpow.pop %v5553
      %5555 = vadd.xlane.f32.xlu0 %v5524
      %v5556 = vpop.xlane.xlu0 %5555
      %5557 = vadd.xlane.f32.xlu0 %v5526
      %v5558 = vpop.xlane.xlu0 %5557
      %5559 = vadd.xlane.f32.xlu0 %v5528
      %v5560 = vpop.xlane.xlu0 %5559
      %5561 = vadd.xlane.f32.xlu0 %v5530
      %v5562 = vpop.xlane.xlu0 %5561
      %5563 = vadd.xlane.f32.xlu0 %v5532
      %v5564 = vpop.xlane.xlu0 %5563
      %5565 = vadd.xlane.f32.xlu0 %v5534
      %v5566 = vpop.xlane.xlu0 %5565
      %5567 = vadd.xlane.f32.xlu0 %v5536
      %v5568 = vpop.xlane.xlu0 %5567
      %5569 = vadd.xlane.f32.xlu0 %v5538
      %v5570 = vpop.xlane.xlu0 %5569
      %5571 = vadd.xlane.f32.xlu0 %v5540
      %v5572 = vpop.xlane.xlu0 %5571
      %5573 = vadd.xlane.f32.xlu0 %v5542
      %v5574 = vpop.xlane.xlu0 %5573
      %5575 = vadd.xlane.f32.xlu0 %v5544
      %v5576 = vpop.xlane.xlu0 %5575
      %5577 = vadd.xlane.f32.xlu0 %v5546
      %v5578 = vpop.xlane.xlu0 %5577
      %5579 = vadd.xlane.f32.xlu0 %v5548
      %v5580 = vpop.xlane.xlu0 %5579
      %5581 = vadd.xlane.f32.xlu0 %v5550
      %v5582 = vpop.xlane.xlu0 %5581
      %5583 = vadd.xlane.f32.xlu0 %v5552
      %v5584 = vpop.xlane.xlu0 %5583
      %5585 = vadd.xlane.f32.xlu0 %v5554
      %v5586 = vpop.xlane.xlu0 %5585
      %v5587 = vrcp.pop %v5556
      %v5588 = vrcp.pop %v5558
      %v5589 = vrcp.pop %v5560
      %v5590 = vrcp.pop %v5562
      %v5591 = vrcp.pop %v5564
      %v5592 = vrcp.pop %v5566
      %v5593 = vrcp.pop %v5568
      %v5594 = vrcp.pop %v5570
      %v5595 = vrcp.pop %v5572
      %v5596 = vrcp.pop %v5574
      %v5597 = vrcp.pop %v5576
      %v5598 = vrcp.pop %v5578
      %v5599 = vrcp.pop %v5580
      %v5600 = vrcp.pop %v5582
      %v5601 = vrcp.pop %v5584
      %v5602 = vrcp.pop %v5586
      %v5603 = vmul.f32 %v5524, %v5587
      %v5604 = vmul.f32 %v5526, %v5588
      %v5605 = vmul.f32 %v5528, %v5589
      %v5606 = vmul.f32 %v5530, %v5590
      %v5607 = vmul.f32 %v5532, %v5591
      %v5608 = vmul.f32 %v5534, %v5592
      %v5609 = vmul.f32 %v5536, %v5593
      %v5610 = vmul.f32 %v5538, %v5594
      %v5611 = vmul.f32 %v5540, %v5595
      %v5612 = vmul.f32 %v5542, %v5596
      %v5613 = vmul.f32 %v5544, %v5597
      %v5614 = vmul.f32 %v5546, %v5598
      %v5615 = vmul.f32 %v5548, %v5599
      %v5616 = vmul.f32 %v5550, %v5600
      %v5617 = vmul.f32 %v5552, %v5601
      %v5618 = vmul.f32 %v5554, %v5602
      %s5619 = sadd.s32 896, %s1741
      %s5620 = scalar_lea.vmem [#allocation9], %s5619
      %5621 = vst [vmem:[%s5620] sm:$0xff] %v5603
      %5622 = vst [vmem:[%s5620 + $0x8] sm:$0xff] %v5604
      %5623 = vst [vmem:[%s5620 + $0x10] sm:$0xff] %v5605
      %5624 = vst [vmem:[%s5620 + $0x18] sm:$0xff] %v5606
      %5625 = vst [vmem:[%s5620 + $0x20] sm:$0xff] %v5607
      %5626 = vst [vmem:[%s5620 + $0x28] sm:$0xff] %v5608
      %5627 = vst [vmem:[%s5620 + $0x30] sm:$0xff] %v5609
      %5628 = vst [vmem:[%s5620 + $0x38] sm:$0xff] %v5610
      %5629 = vst [vmem:[%s5620 + $0x40] sm:$0xff] %v5611
      %5630 = vst [vmem:[%s5620 + $0x48] sm:$0xff] %v5612
      %5631 = vst [vmem:[%s5620 + $0x50] sm:$0xff] %v5613
      %5632 = vst [vmem:[%s5620 + $0x58] sm:$0xff] %v5614
      %5633 = vst [vmem:[%s5620 + $0x60] sm:$0xff] %v5615
      %5634 = vst [vmem:[%s5620 + $0x68] sm:$0xff] %v5616
      %5635 = vst [vmem:[%s5620 + $0x70] sm:$0xff] %v5617
      %5636 = vst [vmem:[%s5620 + $0x78] sm:$0xff] %v5618
      %5637 = vmatprep.subr.mxu0 %v984
      %5638 = vmatpush1.msra.mxu0 %v982
      %5639 = vmatprep.subr.mxu0 %v980
      %5640 = vmatpush1.msra.mxu0 %v978
      %5641 = vmatprep.subr.mxu0 %v974
      %5642 = vmatpush1.msra.mxu0 %v972
      %5643 = vmatprep.subr.mxu0 %v970
      %5644 = vmatpush1.msra.mxu0 %v968
      %5645 = vmatprep.subr.mxu0 %v964
      %5646 = vmatpush1.msra.mxu0 %v962
      %5647 = vmatprep.subr.mxu0 %v960
      %5648 = vmatpush1.msra.mxu0 %v958
      %5649 = vmatprep.subr.mxu0 %v954
      %5650 = vmatpush1.msra.mxu0 %v952
      %5651 = vmatprep.subr.mxu0 %v950
      %5652 = vmatpush1.msra.mxu0 %v948
      %5653 = vmatprep.subr.mxu0 %v944
      %5654 = vmatpush1.msra.mxu0 %v942
      %5655 = vmatprep.subr.mxu0 %v940
      %5656 = vmatpush1.msra.mxu0 %v938
      %5657 = vmatprep.subr.mxu0 %v934
      %5658 = vmatpush1.msra.mxu0 %v932
      %5659 = vmatprep.subr.mxu0 %v930
      %5660 = vmatpush1.msra.mxu0 %v928
      %5661 = vmatprep.subr.mxu0 %v924
      %5662 = vmatpush1.msra.mxu0 %v922
      %5663 = vmatprep.subr.mxu0 %v920
      %5664 = vmatpush1.msra.mxu0 %v918
      %5665 = vmatprep.subr.mxu0 %v914
      %5666 = vmatpush1.msra.mxu0 %v912
      %5667 = vmatprep.subr.mxu0 %v910
      %5668 = vmatpush1.msra.mxu0 %v908
      %5669 = vmatprep.subr.mxu0 0.0
      %5670 = vmatpush2.msra.mxu0 0.0
      %5671 = vmatprep.subr.mxu0 0.0
      %5672 = vmatpush2.msra.mxu0 0.0
      %5673 = vmatprep.subr.mxu0 0.0
      %5674 = vmatpush2.msra.mxu0 0.0
      %5675 = vmatprep.subr.mxu0 0.0
      %5676 = vmatpush2.msra.mxu0 0.0
      %5677 = vmatprep.subr.mxu0 0.0
      %5678 = vmatpush2.msra.mxu0 0.0
      %5679 = vmatprep.subr.mxu0 0.0
      %5680 = vmatpush2.msra.mxu0 0.0
      %5681 = vmatprep.subr.mxu0 0.0
      %5682 = vmatpush2.msra.mxu0 0.0
      %5683 = vmatprep.subr.mxu0 0.0
      %5684 = vmatpush2.msra.mxu0 0.0
      %5685 = vmatprep.subr.mxu0 0.0
      %5686 = vmatpush2.msra.mxu0 0.0
      %5687 = vmatprep.subr.mxu0 0.0
      %5688 = vmatpush2.msra.mxu0 0.0
      %5689 = vmatprep.subr.mxu0 0.0
      %5690 = vmatpush2.msra.mxu0 0.0
      %5691 = vmatprep.subr.mxu0 0.0
      %5692 = vmatpush2.msra.mxu0 0.0
      %5693 = vmatprep.subr.mxu0 0.0
      %5694 = vmatpush2.msra.mxu0 0.0
      %5695 = vmatprep.subr.mxu0 0.0
      %5696 = vmatpush2.msra.mxu0 0.0
      %5697 = vmatprep.subr.mxu0 0.0
      %5698 = vmatpush2.msra.mxu0 0.0
      %5699 = vmatprep.subr.mxu0 0.0
      %5700 = vmatpush2.msra.mxu0 0.0
      %5701 = vmatprep.mubr.f32.mxu0 0.0
      %5702 = vmatmul.mubr.f32.gmra.mxu0 %v5603
      %v5703 = vpop.f32.mrf.mxu0
      %v5704 = vadd.f32 0.0, %v5703
      %v5705 = vpop.f32.mrf.mxu0
      %v5706 = vadd.f32 0.0, %v5705
      %5707 = vmatprep.mubr.f32.mxu0 0.0
      %5708 = vmatmul.mubr.f32.gmra.mxu0 %v5604
      %v5709 = vpop.f32.mrf.mxu0
      %v5710 = vadd.f32 0.0, %v5709
      %v5711 = vpop.f32.mrf.mxu0
      %v5712 = vadd.f32 0.0, %v5711
      %5713 = vmatprep.mubr.f32.mxu0 0.0
      %5714 = vmatmul.mubr.f32.gmra.mxu0 %v5605
      %v5715 = vpop.f32.mrf.mxu0
      %v5716 = vadd.f32 0.0, %v5715
      %v5717 = vpop.f32.mrf.mxu0
      %v5718 = vadd.f32 0.0, %v5717
      %5719 = vmatprep.mubr.f32.mxu0 0.0
      %5720 = vmatmul.mubr.f32.gmra.mxu0 %v5606
      %v5721 = vpop.f32.mrf.mxu0
      %v5722 = vadd.f32 0.0, %v5721
      %v5723 = vpop.f32.mrf.mxu0
      %v5724 = vadd.f32 0.0, %v5723
      %5725 = vmatprep.mubr.f32.mxu0 0.0
      %5726 = vmatmul.mubr.f32.gmra.mxu0 %v5607
      %v5727 = vpop.f32.mrf.mxu0
      %v5728 = vadd.f32 0.0, %v5727
      %v5729 = vpop.f32.mrf.mxu0
      %v5730 = vadd.f32 0.0, %v5729
      %5731 = vmatprep.mubr.f32.mxu0 0.0
      %5732 = vmatmul.mubr.f32.gmra.mxu0 %v5608
      %v5733 = vpop.f32.mrf.mxu0
      %v5734 = vadd.f32 0.0, %v5733
      %v5735 = vpop.f32.mrf.mxu0
      %v5736 = vadd.f32 0.0, %v5735
      %5737 = vmatprep.mubr.f32.mxu0 0.0
      %5738 = vmatmul.mubr.f32.gmra.mxu0 %v5609
      %v5739 = vpop.f32.mrf.mxu0
      %v5740 = vadd.f32 0.0, %v5739
      %v5741 = vpop.f32.mrf.mxu0
      %v5742 = vadd.f32 0.0, %v5741
      %5743 = vmatprep.mubr.f32.mxu0 0.0
      %5744 = vmatmul.mubr.f32.gmra.mxu0 %v5610
      %v5745 = vpop.f32.mrf.mxu0
      %v5746 = vadd.f32 0.0, %v5745
      %v5747 = vpop.f32.mrf.mxu0
      %v5748 = vadd.f32 0.0, %v5747
      %5749 = vmatprep.mubr.f32.mxu0 0.0
      %5750 = vmatmul.mubr.f32.gmra.mxu0 %v5611
      %v5751 = vpop.f32.mrf.mxu0
      %v5752 = vadd.f32 0.0, %v5751
      %v5753 = vpop.f32.mrf.mxu0
      %v5754 = vadd.f32 0.0, %v5753
      %5755 = vmatprep.mubr.f32.mxu0 0.0
      %5756 = vmatmul.mubr.f32.gmra.mxu0 %v5612
      %v5757 = vpop.f32.mrf.mxu0
      %v5758 = vadd.f32 0.0, %v5757
      %v5759 = vpop.f32.mrf.mxu0
      %v5760 = vadd.f32 0.0, %v5759
      %5761 = vmatprep.mubr.f32.mxu0 0.0
      %5762 = vmatmul.mubr.f32.gmra.mxu0 %v5613
      %v5763 = vpop.f32.mrf.mxu0
      %v5764 = vadd.f32 0.0, %v5763
      %v5765 = vpop.f32.mrf.mxu0
      %v5766 = vadd.f32 0.0, %v5765
      %5767 = vmatprep.mubr.f32.mxu0 0.0
      %5768 = vmatmul.mubr.f32.gmra.mxu0 %v5614
      %v5769 = vpop.f32.mrf.mxu0
      %v5770 = vadd.f32 0.0, %v5769
      %v5771 = vpop.f32.mrf.mxu0
      %v5772 = vadd.f32 0.0, %v5771
      %5773 = vmatprep.mubr.f32.mxu0 0.0
      %5774 = vmatmul.mubr.f32.gmra.mxu0 %v5615
      %v5775 = vpop.f32.mrf.mxu0
      %v5776 = vadd.f32 0.0, %v5775
      %v5777 = vpop.f32.mrf.mxu0
      %v5778 = vadd.f32 0.0, %v5777
      %5779 = vmatprep.mubr.f32.mxu0 0.0
      %5780 = vmatmul.mubr.f32.gmra.mxu0 %v5616
      %v5781 = vpop.f32.mrf.mxu0
      %v5782 = vadd.f32 0.0, %v5781
      %v5783 = vpop.f32.mrf.mxu0
      %v5784 = vadd.f32 0.0, %v5783
      %5785 = vmatprep.mubr.f32.mxu0 0.0
      %5786 = vmatmul.mubr.f32.gmra.mxu0 %v5617
      %v5787 = vpop.f32.mrf.mxu0
      %v5788 = vadd.f32 0.0, %v5787
      %v5789 = vpop.f32.mrf.mxu0
      %v5790 = vadd.f32 0.0, %v5789
      %5791 = vmatprep.mubr.f32.mxu0 0.0
      %5792 = vmatmul.mubr.f32.gmra.mxu0 %v5618
      %v5793 = vpop.f32.mrf.mxu0
      %v5794 = vadd.f32 0.0, %v5793
      %v5795 = vpop.f32.mrf.mxu0
      %v5796 = vadd.f32 0.0, %v5795
      %5797 = vdwg.mxu0
      %v5798 = vsel %vm5280, %v5704, %v5244
      %v5799 = vsel %vm5281, %v5706, %v5245
      %v5800 = vsel %vm5280, %v5710, %v5246
      %v5801 = vsel %vm5281, %v5712, %v5247
      %v5802 = vsel %vm5280, %v5716, %v5248
      %v5803 = vsel %vm5281, %v5718, %v5249
      %v5804 = vsel %vm5280, %v5722, %v5250
      %v5805 = vsel %vm5281, %v5724, %v5251
      %v5806 = vsel %vm5280, %v5728, %v5252
      %v5807 = vsel %vm5281, %v5730, %v5253
      %v5808 = vsel %vm5280, %v5734, %v5254
      %v5809 = vsel %vm5281, %v5736, %v5255
      %v5810 = vsel %vm5280, %v5740, %v5256
      %v5811 = vsel %vm5281, %v5742, %v5257
      %v5812 = vsel %vm5280, %v5746, %v5258
      %v5813 = vsel %vm5281, %v5748, %v5259
      %v5814 = vsel %vm5280, %v5752, %v5260
      %v5815 = vsel %vm5281, %v5754, %v5261
      %v5816 = vsel %vm5280, %v5758, %v5262
      %v5817 = vsel %vm5281, %v5760, %v5263
      %v5818 = vsel %vm5280, %v5764, %v5264
      %v5819 = vsel %vm5281, %v5766, %v5265
      %v5820 = vsel %vm5280, %v5770, %v5266
      %v5821 = vsel %vm5281, %v5772, %v5267
      %v5822 = vsel %vm5280, %v5776, %v5268
      %v5823 = vsel %vm5281, %v5778, %v5269
      %v5824 = vsel %vm5280, %v5782, %v5270
      %v5825 = vsel %vm5281, %v5784, %v5271
      %v5826 = vsel %vm5280, %v5788, %v5272
      %v5827 = vsel %vm5281, %v5790, %v5273
      %v5828 = vsel %vm5280, %v5794, %v5274
      %v5829 = vsel %vm5281, %v5796, %v5275
      %v5830 = vmul.f32 %v1366, %v5798
      %v5831 = vmul.f32 %v1367, %v5799
      %v5832 = vmul.f32 %v1368, %v5800
      %v5833 = vmul.f32 %v1369, %v5801
      %v5834 = vmul.f32 %v1370, %v5802
      %v5835 = vmul.f32 %v1371, %v5803
      %v5836 = vmul.f32 %v1372, %v5804
      %v5837 = vmul.f32 %v1373, %v5805
      %v5838 = vmul.f32 %v1374, %v5806
      %v5839 = vmul.f32 %v1375, %v5807
      %v5840 = vmul.f32 %v1376, %v5808
      %v5841 = vmul.f32 %v1377, %v5809
      %v5842 = vmul.f32 %v1378, %v5810
      %v5843 = vmul.f32 %v1379, %v5811
      %v5844 = vmul.f32 %v1380, %v5812
      %v5845 = vmul.f32 %v1381, %v5813
      %v5846 = vmul.f32 %v1382, %v5814
      %v5847 = vmul.f32 %v1383, %v5815
      %v5848 = vmul.f32 %v1384, %v5816
      %v5849 = vmul.f32 %v1385, %v5817
      %v5850 = vmul.f32 %v1386, %v5818
      %v5851 = vmul.f32 %v1387, %v5819
      %v5852 = vmul.f32 %v1388, %v5820
      %v5853 = vmul.f32 %v1389, %v5821
      %v5854 = vmul.f32 %v1390, %v5822
      %v5855 = vmul.f32 %v1391, %v5823
      %v5856 = vmul.f32 %v1392, %v5824
      %v5857 = vmul.f32 %v1393, %v5825
      %v5858 = vmul.f32 %v1394, %v5826
      %v5859 = vmul.f32 %v1395, %v5827
      %v5860 = vmul.f32 %v1396, %v5828
      %v5861 = vmul.f32 %v1397, %v5829
      %v5862 = vadd.f32 %v5830, %v5832
      %v5863 = vadd.f32 %v5862, %v5834
      %v5864 = vadd.f32 %v5863, %v5836
      %v5865 = vadd.f32 %v5864, %v5838
      %v5866 = vadd.f32 %v5865, %v5840
      %v5867 = vadd.f32 %v5866, %v5842
      %v5868 = vadd.f32 %v5867, %v5844
      %v5869 = vadd.f32 %v5868, %v5846
      %v5870 = vadd.f32 %v5869, %v5848
      %v5871 = vadd.f32 %v5870, %v5850
      %v5872 = vadd.f32 %v5871, %v5852
      %v5873 = vadd.f32 %v5872, %v5854
      %v5874 = vadd.f32 %v5873, %v5856
      %v5875 = vadd.f32 %v5874, %v5858
      %v5876 = vadd.f32 %v5875, %v5860
      %v5877 = vrot.slane %v5876, 4
      %v5878 = vadd.f32 %v5876, %v5877
      %v5879 = vrot.slane %v5878, 2
      %v5880 = vadd.f32 %v5878, %v5879
      %v5881 = vrot.slane %v5880, 1
      %v5882 = vadd.f32 %v5880, %v5881
      %v5883 = vadd.f32 %v5831, %v5833
      %v5884 = vadd.f32 %v5883, %v5835
      %v5885 = vadd.f32 %v5884, %v5837
      %v5886 = vadd.f32 %v5885, %v5839
      %v5887 = vadd.f32 %v5886, %v5841
      %v5888 = vadd.f32 %v5887, %v5843
      %v5889 = vadd.f32 %v5888, %v5845
      %v5890 = vadd.f32 %v5889, %v5847
      %v5891 = vadd.f32 %v5890, %v5849
      %v5892 = vadd.f32 %v5891, %v5851
      %v5893 = vadd.f32 %v5892, %v5853
      %v5894 = vadd.f32 %v5893, %v5855
      %v5895 = vadd.f32 %v5894, %v5857
      %v5896 = vadd.f32 %v5895, %v5859
      %v5897 = vadd.f32 %v5896, %v5861
      %v5898 = vrot.slane %v5897, 4
      %v5899 = vadd.f32 %v5897, %v5898
      %v5900 = vrot.slane %v5899, 2
      %v5901 = vadd.f32 %v5899, %v5900
      %v5902 = vrot.slane %v5901, 1
      %v5903 = vadd.f32 %v5901, %v5902
      %v5906 = vcombine.low %v5882, %v5903
      %v5908 = vunpack.c.l.s4 1966171168
      %v5909 = vunpack.c.0.s8 %v5908
      %v5910 = vlaneseq
      %v5911 = vshrl.u32 %v5910, 7
      %v5912 = vsub.s32 %v5909, %v5911
      %v5913 = vrot.slane %v5906, %v5912
      %v5915 = vunpack.c.l.s4 1966171168
      %v5916 = vunpack.c.0.s8 %v5915
      %v5917 = vlaneseq
      %v5918 = vshrl.u32 %v5917, 7
      %v5919 = vsub.s32 %v5916, %v5918
      %v5920 = vrot.slane %v5913, %v5919
      %s5922 = smul.u32 %s224, 2
      %s5923 = scalar_lea.vmem [#allocation8], %s5922
      %v5924 = vlaneseq
      %vm5925 = vcmp.ge.s32.totalorder %v5924, 0
      %vm5926 = vcmp.lt.s32.totalorder %v5924, 256
      %vm5927 = vmand %vm5925, %vm5926
      %5928 = vst.msk [vmem:[%s5923] sm:$0x3] %vm5927, %v5920
    $region30: #{tpu_custom_call.1} parent=1 // loop_footer
      %s228 = sadd.s32 1, %s224
    $region31: #{tpu_custom_call.1} parent=1 // loop_footer_branch
      %223 = sbr.rel target = $region27
    $region32: #{tpu_custom_call.1} parent=1 // loop_exit
      _
    // Predicated region
    $region33: #{tpu_custom_call.1} parent=1 // pred_check
      _
    $region34: #{tpu_custom_call.1} parent=1 // pred_check_branch
      %5930 = sbr.rel (0) target = $region36
    $region35: #{tpu_custom_call.1} parent=1 // pred_region
      %s5932 = ssub.s32 128, 128
      %5933 = vsyncadd [#allocation4], %s5932
      %s5934 = sshll.u32 [#allocation8], 4
      %s5935 = int_to_ptr.vmem [resolvable:$true] %s5934
      %5940 = dma.vmem_to_hbm [thread:$0]  %s5935, 128, %s3, [#allocation4], 32, 32, 2
    $region36: #{tpu_custom_call.1} parent=1 // pred_fallthru
      _
    // Predicated region
    $region37: #{tpu_custom_call.1} parent=1 // pred_check
      _
    $region38: #{tpu_custom_call.1} parent=1 // pred_check_branch
      %5942 = sbr.rel (0) target = $region40
    $region39: #{tpu_custom_call.1} parent=1 // pred_region
      %s5944 = ssub.s32 65536, 65536
      %5945 = vsyncadd [#allocation10], %s5944
      %s5946 = sshll.u32 [#allocation9], 4
      %s5947 = int_to_ptr.vmem [resolvable:$true] %s5946
      %5952 = dma.vmem_to_hbm [thread:$0]  %s5947, 65536, %s4, [#allocation10], 128, 128, 8
    $region40: #{tpu_custom_call.1} parent=1 // pred_fallthru
      _
    // Predicated region
    $region41: #{tpu_custom_call.1} parent=1 // pred_check
      _
    $region42: #{tpu_custom_call.1} parent=1 // pred_check_branch
      %5954 = sbr.rel (0) target = $region44
    $region43: #{tpu_custom_call.1} parent=1 // pred_region
      %5955 = dma.done [#allocation4], 128
    $region44: #{tpu_custom_call.1} parent=1 // pred_fallthru
      _
    // Predicated region
    $region45: #{tpu_custom_call.1} parent=1 // pred_check
      _
    $region46: #{tpu_custom_call.1} parent=1 // pred_check_branch
      %5957 = sbr.rel (0) target = $region48
    $region47: #{tpu_custom_call.1} parent=1 // pred_region
      %5958 = dma.done [#allocation10], 65536
    $region48: #{tpu_custom_call.1} parent=1 // pred_fallthru
      _
    %5959 = vsyncpa [#allocation3], 1
    %5960 = vsyncpa [#allocation6], 1
    %5961 = vsyncpa [#allocation4], 1
    %5962 = vsyncpa [#allocation10], 1

</llo_original>
